<compile_context>
chip_gen: v7x
topology: tpu7x:2x2x1
jax: 0.10.0
libtpu: 0.0.40
codegen_flags: <defaults>
</compile_context>

<pallas_src>
import functools

import jax
import jax.numpy as jnp
from jax import lax
from jax.experimental import pallas as pl
from jax.experimental.pallas import tpu as pltpu

# ---------------- small synthetic LlamaConfig ----------------
VOCAB = 256          # config.vocab_size
DIM = 256            # config.embedding_dim
N_LAYERS = 2         # config.num_layers
N_HEADS = 2
N_KV_HEADS = 1       # GQA
HEAD_DIM = DIM // N_HEADS          # 128 -> lane-dense attention tiles
GROUP = N_HEADS // N_KV_HEADS
FFN_DIM = 512
RMS_EPS = 1e-5
ROPE_THETA = 10000.0
ACT_DTYPE = jnp.bfloat16   # HBM-resident activations (halves activation HBM traffic)
W_DTYPE = jnp.bfloat16     # weight storage & MXU operand dtype


def _device_kind():
    try:
        return jax.devices()[0].device_kind.lower()
    except Exception:
        return ""


_KIND = _device_kind()
_IS_V7 = "v7" in _KIND

# v7x has 64 MiB VMEM per TensorCore (and 2 TCs); v5e/v6e have 128 MiB -> raise the
# scoped limit above the 16/32 MiB default, with generation-specific headroom.
_VMEM_LIMIT = (48 if _IS_V7 else 96) * 1024 * 1024

# Generation-aware tile preferences: v7x -> smaller reduction/FFN tiles (64 MiB VMEM),
# v5e/v6e -> larger output tiles (128 MiB VMEM, closer to the HBM roofline).
_MM_TM = 256 if _IS_V7 else 512
_MM_TN = 256 if _IS_V7 else 512
_MM_TK = 256 if _IS_V7 else 512
_FFN_TF = 256 if _IS_V7 else 512


def _pick_tile(dim, pref, unit):
    """Largest tile <= pref that divides `dim` and is a multiple of `unit`
    (lane=128 / sublane=8 friendly).  Falls back to the full dim (exempt from the
    (8,128) BlockSpec rule) if no aligned divisor exists."""
    if dim <= pref:
        return dim
    t = (pref // unit) * unit
    while t >= unit:
        if dim % t == 0:
            return t
        t -= unit
    return dim


def _split_parallel(dim, t):
    """On v7x, halve a 'parallel'-axis tile so a single-tile axis does not idle one
    of the two TensorCores; no-op on single-TC v5e/v6e."""
    if not _IS_V7 or dim // t >= 2:
        return t
    h = t // 2
    if h >= 8 and h % 8 == 0 and dim % h == 0:
        return h
    return t


# ---------------- tiled matmul (+ fused residual epilogue) ----------------
def _matmul_res_kernel(x_ref, w_ref, r_ref, o_ref, acc_ref):
    k = pl.program_id(2)

    @pl.when(k == 0)
    def _():
        acc_ref[...] = jnp.zeros_like(acc_ref)

    acc_ref[...] += jnp.dot(x_ref[...].astype(W_DTYPE), w_ref[...].astype(W_DTYPE),
                            preferred_element_type=jnp.float32)

    @pl.when(k == pl.num_programs(2) - 1)
    def _():
        o_ref[...] = (acc_ref[...] + r_ref[...].astype(jnp.float32)).astype(o_ref.dtype)


def pallas_matmul_residual(x, w, res, *, tm_pref=None, tn_pref=None, tk_pref=None):
    """x: (M, K) @ w: (K, N) + res: (M, N) with M/N/K tiling and a f32 VMEM accumulator."""
    M, K = x.shape
    N = w.shape[1]
    tm = _split_parallel(M, _pick_tile(M, tm_pref or _MM_TM, 8))
    tn = _pick_tile(N, tn_pref or _MM_TN, 128)
    tk = _pick_tile(K, tk_pref or _MM_TK, 128)
    # TODO(synk): on v5e, deepen weight-stream buffering (pipeline_mode=pl.Buffered(3))
    # if DMA is exposed on the (tk, tn) weight tiles.
    return pl.pallas_call(
        _matmul_res_kernel,
        out_shape=jax.ShapeDtypeStruct((M, N), ACT_DTYPE),
        grid=(M // tm, N // tn, K // tk),
        in_specs=[
            pl.BlockSpec((tm, tk), lambda i, j, k: (i, k)),
            pl.BlockSpec((tk, tn), lambda i, j, k: (k, j)),
            pl.BlockSpec((tm, tn), lambda i, j, k: (i, j)),
        ],
        out_specs=pl.BlockSpec((tm, tn), lambda i, j, k: (i, j)),
        scratch_shapes=[pltpu.VMEM((tm, tn), jnp.float32)],
        compiler_params=pltpu.CompilerParams(
            dimension_semantics=("parallel", "parallel", "arbitrary"),
            vmem_limit_bytes=_VMEM_LIMIT),
    )(x, w, res)


# ---------------- fused RMSNorm + matmul (QKV projection, LM head) ----------------
def _norm_matmul_kernel(x_ref, g_ref, w_ref, o_ref, xn_ref):
    # RMSNorm is computed ONCE per row-block (j == 0) into a bf16 VMEM scratch and
    # reused for every output tile j (no per-tile mean/rsqrt/scale/cast recompute).
    @pl.when(pl.program_id(1) == 0)
    def _():
        x = x_ref[...].astype(jnp.float32)
        var = jnp.mean(x * x, axis=-1, keepdims=True)
        xn_ref[...] = (x * lax.rsqrt(var + RMS_EPS)
                       * g_ref[...].astype(jnp.float32)).astype(W_DTYPE)

    o_ref[...] = jnp.dot(xn_ref[...], w_ref[...].astype(W_DTYPE),
                         preferred_element_type=jnp.float32).astype(o_ref.dtype)


def pallas_norm_matmul(x, gamma, w, *, tm_pref=None, tn_pref=None):
    """RMSNorm(x) @ w in one kernel; x is read once, norm math stays f32.
    TODO(synk): also tile K (with a separate rstd pass) for very large D."""
    M, D = x.shape
    N = w.shape[1]
    tm = _split_parallel(M, _pick_tile(M, tm_pref or _MM_TM, 8))
    tn = _pick_tile(N, tn_pref or _MM_TN, 128)
    return pl.pallas_call(
        _norm_matmul_kernel,
        out_shape=jax.ShapeDtypeStruct((M, N), ACT_DTYPE),
        grid=(M // tm, N // tn),
        in_specs=[
            pl.BlockSpec((tm, D), lambda i, j: (i, 0)),
            pl.BlockSpec((1, D), lambda i, j: (0, 0)),
            pl.BlockSpec((D, tn), lambda i, j: (0, j)),
        ],
        out_specs=pl.BlockSpec((tm, tn), lambda i, j: (i, j)),
        scratch_shapes=[pltpu.VMEM((tm, D), W_DTYPE)],
        compiler_params=pltpu.CompilerParams(
            dimension_semantics=("parallel", "arbitrary"),
            vmem_limit_bytes=_VMEM_LIMIT),
    )(x, gamma.reshape(1, -1), w)


# ---------------- fused RMSNorm + SwiGLU FFN + down-proj + residual ----------------
def _ffn_kernel(x_ref, g_ref, wg_ref, wu_ref, wd_ref, o_ref, acc_ref, xn_ref):
    f = pl.program_id(1)

    @pl.when(f == 0)
    def _():
        acc_ref[...] = jnp.zeros_like(acc_ref)
        x = x_ref[...].astype(jnp.float32)
        var = jnp.mean(x * x, axis=-1, keepdims=True)
        xn_ref[...] = (x * lax.rsqrt(var + RMS_EPS)
                       * g_ref[...].astype(jnp.float32)).astype(W_DTYPE)

    xn = xn_ref[...]                                       # bf16, reused across f tiles
    g = jnp.dot(xn, wg_ref[...].astype(W_DTYPE), preferred_element_type=jnp.float32)
    u = jnp.dot(xn, wu_ref[...].astype(W_DTYPE), preferred_element_type=jnp.float32)
    h = (g * jax.nn.sigmoid(g)) * u                        # SiLU(gate) * up, f32
    acc_ref[...] += jnp.dot(h.astype(W_DTYPE), wd_ref[...].astype(W_DTYPE),
                            preferred_element_type=jnp.float32)

    @pl.when(f == pl.num_programs(1) - 1)
    def _():
        o_ref[...] = (x_ref[...].astype(jnp.float32) + acc_ref[...]).astype(o_ref.dtype)


def pallas_ffn(x, gamma, wg, wu, wd, *, tm_pref=None, tf_pref=None):
    """out = x + SwiGLU(RMSNorm(x)) @ wd, tiled over M and the FFN hidden dim (reduction)."""
    M, D = x.shape
    F = wg.shape[1]
    tm = _split_parallel(M, _pick_tile(M, tm_pref or _MM_TM, 8))
    tf = _pick_tile(F, tf_pref or _FFN_TF, 128)
    return pl.pallas_call(
        _ffn_kernel,
        out_shape=jax.ShapeDtypeStruct((M, D), ACT_DTYPE),
        grid=(M // tm, F // tf),
        in_specs=[
            pl.BlockSpec((tm, D), lambda i, f: (i, 0)),
            pl.BlockSpec((1, D), lambda i, f: (0, 0)),
            pl.BlockSpec((D, tf), lambda i, f: (0, f)),
            pl.BlockSpec((D, tf), lambda i, f: (0, f)),
            pl.BlockSpec((tf, D), lambda i, f: (f, 0)),
        ],
        out_specs=pl.BlockSpec((tm, D), lambda i, f: (i, 0)),
        scratch_shapes=[pltpu.VMEM((tm, D), jnp.float32),   # down-proj accumulator
                        pltpu.VMEM((tm, D), W_DTYPE)],      # cached RMSNorm(x)
        compiler_params=pltpu.CompilerParams(
            dimension_semantics=("parallel", "arbitrary"),
            vmem_limit_bytes=_VMEM_LIMIT),
    )(x, gamma.reshape(1, -1), wg, wu, wd)


# ---------------- flash-style GQA attention (batched group, fused RoPE, causal skip) ----------------
def _flash_attn_kernel(q_ref, k_ref, v_ref, cq_ref, sq_ref, ck_ref, sk_ref,
                       o_ref, q_sc, m_sc, l_sc, acc_sc, *, scale):
    qi = pl.program_id(2)
    ki = pl.program_id(3)
    group, tq, dh = q_ref.shape[1], q_ref.shape[2], q_ref.shape[3]
    tkv = k_ref.shape[2]
    half = dh // 2
    q0 = qi * tq
    k0 = ki * tkv

    # rotate-half sign vector: [-1]*half ++ [+1]*half along lanes (roll gives [x2, x1]).
    sign = jnp.where(lax.broadcasted_iota(jnp.int32, (1, dh), 1) < half, -1.0, 1.0)

    @pl.when(ki == 0)
    def _():
        m_sc[...] = jnp.full_like(m_sc, -jnp.inf)
        l_sc[...] = jnp.zeros_like(l_sc)
        acc_sc[...] = jnp.zeros_like(acc_sc)
        cos_q = cq_ref[...]
        sin_q = sq_ref[...]
        # RoPE + softmax scale folded into the cached q operand, once per q tile;
        # the whole GQA group is stacked into one (group*tq, Dh) bf16 MXU operand.
        for g in range(group):                               # static, tiny
            qh = q_ref[0, g].astype(jnp.float32)             # (tq, Dh)
            qh = qh * cos_q + pltpu.roll(qh, half, 1) * sign * sin_q
            q_sc[pl.ds(g * tq, tq), :] = (qh * scale).astype(W_DTYPE)

    # Skip kv tiles that lie entirely above the causal diagonal (~halves MXU/EUP work).
    @pl.when(k0 <= q0 + tq - 1)
    def _():
        k = k_ref[0, 0].astype(jnp.float32)                  # (tkv, Dh)
        k = (k * ck_ref[...] + pltpu.roll(k, half, 1) * sign * sk_ref[...]).astype(W_DTYPE)
        v = v_ref[0, 0].astype(W_DTYPE)                      # (tkv, Dh)

        # one batched MXU push for the whole GQA group: (group*tq, Dh) @ (Dh, tkv)
        s = lax.dot_general(q_sc[...], k, (((1,), (1,)), ((), ())),
                            preferred_element_type=jnp.float32)
        row = q0 + (lax.broadcasted_iota(jnp.int32, (group * tq, tkv), 0) % tq)
        col = k0 + lax.broadcasted_iota(jnp.int32, (group * tq, tkv), 1)
        s = jnp.where(col <= row, s, -1e30)                  # finite mask keeps exp defined

        m_prev = m_sc[...]                                   # (group*tq, 1)
        m_new = jnp.maximum(m_prev, jnp.max(s, axis=-1, keepdims=True))
        alpha = jnp.exp(m_prev - m_new)
        p = jnp.exp(s - m_new)
        l_sc[...] = alpha * l_sc[...] + jnp.sum(p, axis=-1, keepdims=True)
        acc_sc[...] = alpha * acc_sc[...] + jnp.dot(p.astype(W_DTYPE), v,
                                                    preferred_element_type=jnp.float32)
        m_sc[...] = m_new

    @pl.when(ki == pl.num_programs(3) - 1)
    def _():
        out = acc_sc[...] * pl.reciprocal(l_sc[...], approx=True)
        o_ref[0] = out.reshape(group, tq, dh).astype(o_ref.dtype)


def pallas_flash_attention(q, k, v, cos, sin, *, tq_pref=256, tkv_pref=256):
    # q: (B, H, S, Dh); k, v: (B, Hkv, S, Dh); cos/sin: (S, Dh) f32 -> (B, H, S, Dh)
    B, H, S, Dh = q.shape
    Hkv = k.shape[1]
    group = H // Hkv
    tq = _pick_tile(S, tq_pref, 8)
    tkv = _pick_tile(S, tkv_pref, 128)
    kernel = functools.partial(_flash_attn_kernel, scale=1.0 / (Dh ** 0.5))
    return pl.pallas_call(
        kernel,
        out_shape=jax.ShapeDtypeStruct((B, H, S, Dh), ACT_DTYPE),
        grid=(B, Hkv, S // tq, S // tkv),
        in_specs=[
            # the whole GQA group of q-heads per kv head (K/V DMA'd once per group)
            pl.BlockSpec((1, group, tq, Dh), lambda b, h, qi, ki: (b, h, qi, 0)),
            pl.BlockSpec((1, 1, tkv, Dh), lambda b, h, qi, ki: (b, h, ki, 0)),
            pl.BlockSpec((1, 1, tkv, Dh), lambda b, h, qi, ki: (b, h, ki, 0)),
            pl.BlockSpec((tq, Dh), lambda b, h, qi, ki: (qi, 0)),    # cos for q rows
            pl.BlockSpec((tq, Dh), lambda b, h, qi, ki: (qi, 0)),    # sin for q rows
            pl.BlockSpec((tkv, Dh), lambda b, h, qi, ki: (ki, 0)),   # cos for k rows
            pl.BlockSpec((tkv, Dh), lambda b, h, qi, ki: (ki, 0)),   # sin for k rows
        ],
        out_specs=pl.BlockSpec((1, group, tq, Dh), lambda b, h, qi, ki: (b, h, qi, 0)),
        scratch_shapes=[
            pltpu.VMEM((group * tq, Dh), W_DTYPE),     # cached scaled/RoPE'd q
            pltpu.VMEM((group * tq, 1), jnp.float32),  # running max m
            pltpu.VMEM((group * tq, 1), jnp.float32),  # running denom l
            pltpu.VMEM((group * tq, Dh), jnp.float32), # output accumulator
        ],
        compiler_params=pltpu.CompilerParams(
            dimension_semantics=("parallel", "parallel", "parallel", "arbitrary"),
            vmem_limit_bytes=_VMEM_LIMIT),
    )(q, k, v, cos, sin, cos, sin)


# ---------------- JAX glue (embedding gather, RoPE tables, layout plumbing) ----------------
def rope_tables(seq_len, head_dim, theta=ROPE_THETA):
    inv_freq = 1.0 / (theta ** (jnp.arange(0, head_dim, 2, dtype=jnp.float32) / head_dim))
    t = jnp.arange(seq_len, dtype=jnp.float32)
    freqs = jnp.outer(t, inv_freq)                       # (S, Dh/2)
    emb = jnp.concatenate([freqs, freqs], axis=-1)       # (S, Dh)
    return jnp.cos(emb), jnp.sin(emb)


def transformer_block(p, x, cos, sin):
    B, S, D = x.shape
    M = B * S
    x2d = x.reshape(M, D)

    # Fused RMSNorm + packed QKV projection: x read once, one lane-dense output slab.
    qkv = pallas_norm_matmul(x2d, p["attn_norm"], p["wqkv"])
    nq = N_HEADS * HEAD_DIM
    nkv = N_KV_HEADS * HEAD_DIM
    # TODO(synk): keep the (B, S, H, Dh) layout and express per-head views through the
    # attention BlockSpec index maps to remove these head transposes entirely.
    q = qkv[:, :nq].reshape(B, S, N_HEADS, HEAD_DIM).transpose(0, 2, 1, 3)
    k = qkv[:, nq:nq + nkv].reshape(B, S, N_KV_HEADS, HEAD_DIM).transpose(0, 2, 1, 3)
    v = qkv[:, nq + nkv:].reshape(B, S, N_KV_HEADS, HEAD_DIM).transpose(0, 2, 1, 3)

    o = pallas_flash_attention(q, k, v, cos, sin)                 # RoPE fused in-kernel
    o2d = o.transpose(0, 2, 1, 3).reshape(M, D)
    x2d = pallas_matmul_residual(o2d, p["wo"], x2d)               # wo proj + fused residual

    x2d = pallas_ffn(x2d, p["ffn_norm"], p["wg"], p["wu"], p["wd"])  # norm+SwiGLU+down+residual
    return x2d.reshape(B, S, D)


@jax.jit
def llama3_forward(params, token_ids):
    B, S = token_ids.shape
    # TODO(synk): embedding gather stays as a JAX jnp.take (tiny table, no tiled-DMA gather needed)
    x = jnp.take(params["embed"], token_ids, axis=0).astype(ACT_DTYPE)   # (B, S, D)
    cos, sin = rope_tables(S, HEAD_DIM)
    for p in params["layers"]:
        x = transformer_block(p, x, cos, sin)
    # Fused final RMSNorm + LM head (lane-dense vocab tiles).
    logits = pallas_norm_matmul(x.reshape(B * S, DIM), params["final_norm"],
                                params["out_proj"])
    return logits.reshape(B, S, VOCAB)


def init_params(key):
    ks = jax.random.split(key, 2 + N_LAYERS)

    def dense(k, shape):
        return (0.02 * jax.random.normal(k, shape, dtype=jnp.float32)).astype(W_DTYPE)

    params = {
        "embed": dense(ks[0], (VOCAB, DIM)),
        "final_norm": jnp.ones((DIM,), jnp.float32),
        "out_proj": dense(ks[1], (DIM, VOCAB)),
        "layers": [],
    }
    for i in range(N_LAYERS):
        lk = jax.random.split(ks[2 + i], 7)
        wq = dense(lk[0], (DIM, N_HEADS * HEAD_DIM))
        wk = dense(lk[1], (DIM, N_KV_HEADS * HEAD_DIM))
        wv = dense(lk[2], (DIM, N_KV_HEADS * HEAD_DIM))
        params["layers"].append({
            "attn_norm": jnp.ones((DIM,), jnp.float32),
            "ffn_norm": jnp.ones((DIM,), jnp.float32),
            "wqkv": jnp.concatenate([wq, wk, wv], axis=1),   # packed (D, Hq*Dh + 2*Hkv*Dh)
            "wo": dense(lk[3], (N_HEADS * HEAD_DIM, DIM)),
            "wg": dense(lk[4], (DIM, FFN_DIM)),
            "wu": dense(lk[5], (DIM, FFN_DIM)),
            "wd": dense(lk[6], (FFN_DIM, DIM)),
        })
    return params


if __name__ == "__main__":
    key = jax.random.PRNGKey(0)
    pkey, dkey = jax.random.split(key)
    params = init_params(pkey)

    B, S = 2, 16
    token_ids = jax.random.randint(dkey, (B, S), 0, VOCAB, dtype=jnp.int32)

    logits = llama3_forward(params, token_ids)
    jax.block_until_ready(logits)

    assert logits.shape == (B, S, VOCAB)
    assert bool(jnp.all(jnp.isfinite(logits.astype(jnp.float32))))
    print("KERNEL_OK")
</pallas_src>

<mosaic_0001>
module attributes {stable_mosaic.version = 11 : i64} {
  func.func @_norm_matmul_kernel(%arg0: i32, %arg1: i32, %arg2: memref<32x256xbf16, #tpu.memory_space<vmem>>, %arg3: memref<1x256xf32, #tpu.memory_space<vmem>>, %arg4: memref<256x512xbf16, #tpu.memory_space<vmem>>, %arg5: memref<32x512xbf16, #tpu.memory_space<vmem>>, %arg6: memref<32x256xbf16, #tpu.memory_space<vmem>>) attributes {dimension_semantics = [#tpu.dimension_semantics<parallel>, #tpu.dimension_semantics<arbitrary>], iteration_bounds = array<i64: 1, 1>, scalar_prefetch = 0 : i64, scratch_operands = 1 : i64, tpu.core_type = #tpu.core_type<tc>, window_params = [{transform_indices = @transform_0, window_bounds = array<i64: 32, 256>}, {pipeline_mode = #tpu.pipeline_mode<synchronous>, transform_indices = @transform_1, window_bounds = array<i64: 1, 256>}, {transform_indices = @transform_2, window_bounds = array<i64: 256, 512>}, {transform_indices = @transform_3, window_bounds = array<i64: 32, 512>}]} {
    %c0_i32 = arith.constant 0 : i32
    %0 = arith.cmpi eq, %arg1, %c0_i32 : i32
    %1 = arith.extui %0 : i1 to i32
    %c0_i32_0 = arith.constant 0 : i32
    %2 = arith.cmpi ne, %1, %c0_i32_0 : i32
    scf.if %2 {
      %c0_6 = arith.constant 0 : index
      %c0_7 = arith.constant 0 : index
      %8 = vector.load %arg2[%c0_6, %c0_7] : memref<32x256xbf16, #tpu.memory_space<vmem>>, vector<32x256xbf16>
      %9 = arith.extf %8 : vector<32x256xbf16> to vector<32x256xf32>
      %10 = arith.mulf %9, %9 : vector<32x256xf32>
      %cst_8 = arith.constant dense<0.000000e+00> : vector<32xf32>
      %11 = vector.multi_reduction <add>, %10, %cst_8 [1] : vector<32x256xf32> to vector<32xf32>
      %12 = vector.shape_cast %11 : vector<32xf32> to vector<32x1xf32>
      %cst_9 = arith.constant 2.560000e+02 : f32
      %13 = vector.broadcast %cst_9 : f32 to vector<32x1xf32>
      %14 = arith.divf %12, %13 : vector<32x1xf32>
      %cst_10 = arith.constant 9.99999974E-6 : f32
      %15 = vector.broadcast %cst_10 : f32 to vector<32x1xf32>
      %16 = arith.addf %14, %15 : vector<32x1xf32>
      %17 = math.rsqrt %16 : vector<32x1xf32>
      %18 = vector.broadcast %17 : vector<32x1xf32> to vector<32x256xf32>
      %19 = arith.mulf %9, %18 : vector<32x256xf32>
      %c0_11 = arith.constant 0 : index
      %c0_12 = arith.constant 0 : index
      %20 = vector.load %arg3[%c0_11, %c0_12] : memref<1x256xf32, #tpu.memory_space<vmem>>, vector<1x256xf32>
      %21 = vector.broadcast %20 : vector<1x256xf32> to vector<32x256xf32>
      %22 = arith.mulf %19, %21 : vector<32x256xf32>
      %23 = arith.truncf %22 : vector<32x256xf32> to vector<32x256xbf16>
      %c0_13 = arith.constant 0 : index
      %c0_14 = arith.constant 0 : index
      %24 = vector.load %arg6[%c0_13, %c0_14] : memref<32x256xbf16, #tpu.memory_space<vmem>>, vector<32x256xbf16>
      tpu.vector_store %arg6[%c0_13, %c0_14], %23 {strides = array<i32>} : memref<32x256xbf16, #tpu.memory_space<vmem>>, vector<32x256xbf16>,
    } else {
    }
    %c0 = arith.constant 0 : index
    %c0_1 = arith.constant 0 : index
    %3 = vector.load %arg6[%c0, %c0_1] : memref<32x256xbf16, #tpu.memory_space<vmem>>, vector<32x256xbf16>
    %c0_2 = arith.constant 0 : index
    %c0_3 = arith.constant 0 : index
    %4 = vector.load %arg4[%c0_2, %c0_3] : memref<256x512xbf16, #tpu.memory_space<vmem>>, vector<256x512xbf16>
    %cst = arith.constant dense<0.000000e+00> : vector<32x512xf32>
    %5 = tpu.matmul %3, %4, %cst {dimension_numbers = #tpu.dot_dimension_numbers<[1], [0], [0], [1], [0, 0, 1, 1], [], []>} : vector<32x256xbf16>, vector<256x512xbf16>, vector<32x512xf32> -> vector<32x512xf32>
    %6 = arith.truncf %5 : vector<32x512xf32> to vector<32x512xbf16>
    %c0_4 = arith.constant 0 : index
    %c0_5 = arith.constant 0 : index
    %7 = vector.load %arg5[%c0_4, %c0_5] : memref<32x512xbf16, #tpu.memory_space<vmem>>, vector<32x512xbf16>
    tpu.vector_store %arg5[%c0_4, %c0_5], %6 {strides = array<i32>} : memref<32x512xbf16, #tpu.memory_space<vmem>>, vector<32x512xbf16>,
    return
  }
  func.func @transform_0(%arg0: i32, %arg1: i32) -> (i32, i32) {
    %c0_i32 = arith.constant 0 : i32
    %c0_i32_0 = arith.constant 0 : i32
    return %arg0, %c0_i32 : i32, i32
  }
  func.func @transform_1(%arg0: i32, %arg1: i32) -> (i32, i32) {
    %c0_i32 = arith.constant 0 : i32
    %c0_i32_0 = arith.constant 0 : i32
    %c0_i32_1 = arith.constant 0 : i32
    return %c0_i32, %c0_i32_0 : i32, i32
  }
  func.func @transform_2(%arg0: i32, %arg1: i32) -> (i32, i32) {
    %c0_i32 = arith.constant 0 : i32
    %c0_i32_0 = arith.constant 0 : i32
    return %c0_i32, %arg1 : i32, i32
  }
  func.func @transform_3(%arg0: i32, %arg1: i32) -> (i32, i32) {
    %c0_i32 = arith.constant 0 : i32
    return %arg0, %arg1 : i32, i32
  }
}

module attributes {stable_mosaic.version = 11 : i64} {
  func.func @_flash_attn_kernel(%arg0: i32, %arg1: i32, %arg2: i32, %arg3: i32, %arg4: memref<1x2x16x128xbf16, #tpu.memory_space<vmem>>, %arg5: memref<1x1x16x128xbf16, #tpu.memory_space<vmem>>, %arg6: memref<1x1x16x128xbf16, #tpu.memory_space<vmem>>, %arg7: memref<16x128xf32, #tpu.memory_space<vmem>>, %arg8: memref<16x128xf32, #tpu.memory_space<vmem>>, %arg9: memref<16x128xf32, #tpu.memory_space<vmem>>, %arg10: memref<16x128xf32, #tpu.memory_space<vmem>>, %arg11: memref<1x2x16x128xbf16, #tpu.memory_space<vmem>>, %arg12: memref<32x128xbf16, #tpu.memory_space<vmem>>, %arg13: memref<32x1xf32, #tpu.memory_space<vmem>>, %arg14: memref<32x1xf32, #tpu.memory_space<vmem>>, %arg15: memref<32x128xf32, #tpu.memory_space<vmem>>) attributes {dimension_semantics = [#tpu.dimension_semantics<parallel>, #tpu.dimension_semantics<parallel>, #tpu.dimension_semantics<parallel>, #tpu.dimension_semantics<arbitrary>], iteration_bounds = array<i64: 2, 1, 1, 1>, scalar_prefetch = 0 : i64, scratch_operands = 4 : i64, tpu.core_type = #tpu.core_type<tc>, window_params = [{transform_indices = @transform_0, window_bounds = array<i64: 1, 2, 16, 128>}, {transform_indices = @transform_1, window_bounds = array<i64: 1, 1, 16, 128>}, {transform_indices = @transform_2, window_bounds = array<i64: 1, 1, 16, 128>}, {transform_indices = @transform_3, window_bounds = array<i64: 16, 128>}, {transform_indices = @transform_4, window_bounds = array<i64: 16, 128>}, {transform_indices = @transform_5, window_bounds = array<i64: 16, 128>}, {transform_indices = @transform_6, window_bounds = array<i64: 16, 128>}, {transform_indices = @transform_7, window_bounds = array<i64: 1, 2, 16, 128>}]} {
    %c16_i32 = arith.constant 16 : i32
    %0 = arith.muli %arg2, %c16_i32 : i32
    %c16_i32_0 = arith.constant 16 : i32
    %1 = arith.muli %arg3, %c16_i32_0 : i32
    %2 = tpu.iota {dimensions = array<i32: 1>} : vector<1x128xi32>
    %c64_i32 = arith.constant 64 : i32
    %3 = vector.broadcast %c64_i32 : i32 to vector<1x128xi32>
    %4 = arith.cmpi slt, %2, %3 : vector<1x128xi32>
    %cst = arith.constant -1.000000e+00 : f32
    %cst_1 = arith.constant 1.000000e+00 : f32
    %5 = vector.broadcast %cst : f32 to vector<1x128xf32>
    %6 = vector.broadcast %cst_1 : f32 to vector<1x128xf32>
    %7 = arith.select %4, %5, %6 : vector<1x128xi1>, vector<1x128xf32>
    %c0_i32 = arith.constant 0 : i32
    %8 = arith.cmpi eq, %arg3, %c0_i32 : i32
    %9 = arith.extui %8 : i1 to i32
    %c0_i32_2 = arith.constant 0 : i32
    %10 = arith.cmpi ne, %9, %c0_i32_2 : i32
    scf.if %10 {
      %cst_7 = arith.constant 0xFF800000 : f32
      %19 = vector.broadcast %cst_7 : f32 to vector<32x1xf32>
      %c0 = arith.constant 0 : index
      %c0_8 = arith.constant 0 : index
      %20 = vector.load %arg13[%c0, %c0_8] : memref<32x1xf32, #tpu.memory_space<vmem>>, vector<32x1xf32>
      tpu.vector_store %arg13[%c0, %c0_8], %19 {strides = array<i32>} : memref<32x1xf32, #tpu.memory_space<vmem>>, vector<32x1xf32>,
      %cst_9 = arith.constant 0.000000e+00 : f32
      %21 = vector.broadcast %cst_9 : f32 to vector<32x1xf32>
      %c0_10 = arith.constant 0 : index
      %c0_11 = arith.constant 0 : index
      %22 = vector.load %arg14[%c0_10, %c0_11] : memref<32x1xf32, #tpu.memory_space<vmem>>, vector<32x1xf32>
      tpu.vector_store %arg14[%c0_10, %c0_11], %21 {strides = array<i32>} : memref<32x1xf32, #tpu.memory_space<vmem>>, vector<32x1xf32>,
      %cst_12 = arith.constant 0.000000e+00 : f32
      %23 = vector.broadcast %cst_12 : f32 to vector<32x128xf32>
      %c0_13 = arith.constant 0 : index
      %c0_14 = arith.constant 0 : index
      %24 = vector.load %arg15[%c0_13, %c0_14] : memref<32x128xf32, #tpu.memory_space<vmem>>, vector<32x128xf32>
      tpu.vector_store %arg15[%c0_13, %c0_14], %23 {strides = array<i32>} : memref<32x128xf32, #tpu.memory_space<vmem>>, vector<32x128xf32>,
      %c0_15 = arith.constant 0 : index
      %c0_16 = arith.constant 0 : index
      %25 = vector.load %arg7[%c0_15, %c0_16] : memref<16x128xf32, #tpu.memory_space<vmem>>, vector<16x128xf32>
      %c0_17 = arith.constant 0 : index
      %c0_18 = arith.constant 0 : index
      %26 = vector.load %arg8[%c0_17, %c0_18] : memref<16x128xf32, #tpu.memory_space<vmem>>, vector<16x128xf32>
      %c0_19 = arith.constant 0 : index
      %c0_20 = arith.constant 0 : index
      %c0_21 = arith.constant 0 : index
      %c0_22 = arith.constant 0 : index
      %27 = vector.load %arg4[%c0_19, %c0_20, %c0_21, %c0_22] : memref<1x2x16x128xbf16, #tpu.memory_space<vmem>>, vector<1x1x16x128xbf16>
      %28 = vector.shape_cast %27 : vector<1x1x16x128xbf16> to vector<16x128xbf16>
      %29 = arith.extf %28 : vector<16x128xbf16> to vector<16x128xf32>
      %30 = arith.mulf %29, %25 : vector<16x128xf32>
      %c64_i32_23 = arith.constant 64 : i32
      %31 = tpu.dynamic_rotate %29 by %c64_i32_23 dim 1 : vector<16x128xf32>, i32 -> vector<16x128xf32>
      %32 = vector.broadcast %7 : vector<1x128xf32> to vector<16x128xf32>
      %33 = arith.mulf %31, %32 : vector<16x128xf32>
      %34 = arith.mulf %33, %26 : vector<16x128xf32>
      %35 = arith.addf %30, %34 : vector<16x128xf32>
      %cst_24 = arith.constant 0.0883883461 : f32
      %36 = vector.broadcast %cst_24 : f32 to vector<16x128xf32>
      %37 = arith.mulf %35, %36 : vector<16x128xf32>
      %38 = arith.truncf %37 : vector<16x128xf32> to vector<16x128xbf16>
      %c0_25 = arith.constant 0 : index
      %c0_26 = arith.constant 0 : index
      %39 = vector.load %arg12[%c0_25, %c0_26] : memref<32x128xbf16, #tpu.memory_space<vmem>>, vector<16x128xbf16>
      tpu.vector_store %arg12[%c0_25, %c0_26], %38 {strides = array<i32>} : memref<32x128xbf16, #tpu.memory_space<vmem>>, vector<16x128xbf16>,
      %c0_27 = arith.constant 0 : index
      %c1 = arith.constant 1 : index
      %c0_28 = arith.constant 0 : index
      %c0_29 = arith.constant 0 : index
      %40 = vector.load %arg4[%c0_27, %c1, %c0_28, %c0_29] : memref<1x2x16x128xbf16, #tpu.memory_space<vmem>>, vector<1x1x16x128xbf16>
      %41 = vector.shape_cast %40 : vector<1x1x16x128xbf16> to vector<16x128xbf16>
      %42 = arith.extf %41 : vector<16x128xbf16> to vector<16x128xf32>
      %43 = arith.mulf %42, %25 : vector<16x128xf32>
      %c64_i32_30 = arith.constant 64 : i32
      %44 = tpu.dynamic_rotate %42 by %c64_i32_30 dim 1 : vector<16x128xf32>, i32 -> vector<16x128xf32>
      %45 = vector.broadcast %7 : vector<1x128xf32> to vector<16x128xf32>
      %46 = arith.mulf %44, %45 : vector<16x128xf32>
      %47 = arith.mulf %46, %26 : vector<16x128xf32>
      %48 = arith.addf %43, %47 : vector<16x128xf32>
      %cst_31 = arith.constant 0.0883883461 : f32
      %49 = vector.broadcast %cst_31 : f32 to vector<16x128xf32>
      %50 = arith.mulf %48, %49 : vector<16x128xf32>
      %51 = arith.truncf %50 : vector<16x128xf32> to vector<16x128xbf16>
      %c16 = arith.constant 16 : index
      %c0_32 = arith.constant 0 : index
      %52 = vector.load %arg12[%c16, %c0_32] : memref<32x128xbf16, #tpu.memory_space<vmem>>, vector<16x128xbf16>
      tpu.vector_store %arg12[%c16, %c0_32], %51 {strides = array<i32>} : memref<32x128xbf16, #tpu.memory_space<vmem>>, vector<16x128xbf16>,
    } else {
    }
    %c16_i32_3 = arith.constant 16 : i32
    %11 = arith.addi %0, %c16_i32_3 : i32
    %c1_i32 = arith.constant 1 : i32
    %12 = arith.subi %11, %c1_i32 : i32
    %13 = arith.cmpi sle, %1, %12 : i32
    %14 = arith.extui %13 : i1 to i32
    %c0_i32_4 = arith.constant 0 : i32
    %15 = arith.cmpi ne, %14, %c0_i32_4 : i32
    scf.if %15 {
      %c0 = arith.constant 0 : index
      %c0_7 = arith.constant 0 : index
      %c0_8 = arith.constant 0 : index
      %c0_9 = arith.constant 0 : index
      %19 = vector.load %arg5[%c0, %c0_7, %c0_8, %c0_9] : memref<1x1x16x128xbf16, #tpu.memory_space<vmem>>, vector<1x1x16x128xbf16>
      %20 = vector.shape_cast %19 : vector<1x1x16x128xbf16> to vector<16x128xbf16>
      %21 = arith.extf %20 : vector<16x128xbf16> to vector<16x128xf32>
      %c0_10 = arith.constant 0 : index
      %c0_11 = arith.constant 0 : index
      %22 = vector.load %arg9[%c0_10, %c0_11] : memref<16x128xf32, #tpu.memory_space<vmem>>, vector<16x128xf32>
      %23 = arith.mulf %21, %22 : vector<16x128xf32>
      %c64_i32_12 = arith.constant 64 : i32
      %24 = tpu.dynamic_rotate %21 by %c64_i32_12 dim 1 : vector<16x128xf32>, i32 -> vector<16x128xf32>
      %25 = vector.broadcast %7 : vector<1x128xf32> to vector<16x128xf32>
      %26 = arith.mulf %24, %25 : vector<16x128xf32>
      %c0_13 = arith.constant 0 : index
      %c0_14 = arith.constant 0 : index
      %27 = vector.load %arg10[%c0_13, %c0_14] : memref<16x128xf32, #tpu.memory_space<vmem>>, vector<16x128xf32>
      %28 = arith.mulf %26, %27 : vector<16x128xf32>
      %29 = arith.addf %23, %28 : vector<16x128xf32>
      %30 = arith.truncf %29 : vector<16x128xf32> to vector<16x128xbf16>
      %c0_15 = arith.constant 0 : index
      %c0_16 = arith.constant 0 : index
      %c0_17 = arith.constant 0 : index
      %c0_18 = arith.constant 0 : index
      %31 = vector.load %arg6[%c0_15, %c0_16, %c0_17, %c0_18] : memref<1x1x16x128xbf16, #tpu.memory_space<vmem>>, vector<1x1x16x128xbf16>
      %32 = vector.shape_cast %31 : vector<1x1x16x128xbf16> to vector<16x128xbf16>
      %c0_19 = arith.constant 0 : index
      %c0_20 = arith.constant 0 : index
      %33 = vector.load %arg12[%c0_19, %c0_20] : memref<32x128xbf16, #tpu.memory_space<vmem>>, vector<32x128xbf16>
      %cst_21 = arith.constant dense<0.000000e+00> : vector<32x16xf32>
      %34 = tpu.matmul %33, %30, %cst_21 {dimension_numbers = #tpu.dot_dimension_numbers<[1], [1], [0], [0], [0, 0, 1, 0], [], []>} : vector<32x128xbf16>, vector<16x128xbf16>, vector<32x16xf32> -> vector<32x16xf32>
      %35 = tpu.iota {dimensions = array<i32: 0>} : vector<32x16xi32>
      %c16_i32_22 = arith.constant 16 : i32
      %c0_i32_23 = arith.constant 0 : i32
      %36 = arith.cmpi eq, %c16_i32_22, %c0_i32_23 : i32
      %c1_i32_24 = arith.constant 1 : i32
      %37 = arith.select %36, %c1_i32_24, %c16_i32_22 : i32
      %38 = vector.broadcast %37 : i32 to vector<32x16xi32>
      %39 = arith.remsi %35, %38 : vector<32x16xi32>
      %c0_i32_25 = arith.constant 0 : i32
      %40 = vector.broadcast %c0_i32_25 : i32 to vector<32x16xi32>
      %41 = arith.cmpi ne, %39, %40 : vector<32x16xi32>
      %c0_i32_26 = arith.constant 0 : i32
      %42 = vector.broadcast %c0_i32_26 : i32 to vector<32x16xi32>
      %43 = arith.cmpi slt, %39, %42 : vector<32x16xi32>
      %c0_i32_27 = arith.constant 0 : i32
      %44 = arith.cmpi slt, %37, %c0_i32_27 : i32
      %45 = vector.broadcast %44 : i1 to vector<32x16xi1>
      %46 = vector.broadcast %45 : vector<32x16xi1> to vector<32x16xi1>
      %47 = arith.xori %43, %46 : vector<32x16xi1>
      %48 = arith.andi %47, %41 : vector<32x16xi1>
      %49 = vector.broadcast %37 : i32 to vector<32x16xi32>
      %50 = arith.addi %39, %49 : vector<32x16xi32>
      %51 = arith.select %48, %50, %39 : vector<32x16xi1>, vector<32x16xi32>
      %52 = vector.broadcast %0 : i32 to vector<32x16xi32>
      %53 = arith.addi %52, %51 : vector<32x16xi32>
      %54 = tpu.iota {dimensions = array<i32: 1>} : vector<32x16xi32>
      %55 = vector.broadcast %1 : i32 to vector<32x16xi32>
      %56 = arith.addi %55, %54 : vector<32x16xi32>
      %57 = arith.cmpi sle, %56, %53 : vector<32x16xi32>
      %cst_28 = arith.constant -1.000000e+30 : f32
      %58 = vector.broadcast %cst_28 : f32 to vector<32x16xf32>
      %59 = arith.select %57, %34, %58 : vector<32x16xi1>, vector<32x16xf32>
      %c0_29 = arith.constant 0 : index
      %c0_30 = arith.constant 0 : index
      %60 = vector.load %arg13[%c0_29, %c0_30] : memref<32x1xf32, #tpu.memory_space<vmem>>, vector<32x1xf32>
      %cst_31 = arith.constant dense<0xFF800000> : vector<32xf32>
      %61 = vector.multi_reduction <maximumf>, %59, %cst_31 [1] : vector<32x16xf32> to vector<32xf32>
      %62 = vector.shape_cast %61 : vector<32xf32> to vector<32x1xf32>
      %63 = arith.maximumf %60, %62 : vector<32x1xf32>
      %64 = arith.subf %60, %63 : vector<32x1xf32>
      %65 = math.exp %64 : vector<32x1xf32>
      %66 = vector.broadcast %63 : vector<32x1xf32> to vector<32x16xf32>
      %67 = arith.subf %59, %66 : vector<32x16xf32>
      %68 = math.exp %67 : vector<32x16xf32>
      %c0_32 = arith.constant 0 : index
      %c0_33 = arith.constant 0 : index
      %69 = vector.load %arg14[%c0_32, %c0_33] : memref<32x1xf32, #tpu.memory_space<vmem>>, vector<32x1xf32>
      %70 = arith.mulf %65, %69 : vector<32x1xf32>
      %cst_34 = arith.constant dense<0.000000e+00> : vector<32xf32>
      %71 = vector.multi_reduction <add>, %68, %cst_34 [1] : vector<32x16xf32> to vector<32xf32>
      %72 = vector.shape_cast %71 : vector<32xf32> to vector<32x1xf32>
      %73 = arith.addf %70, %72 : vector<32x1xf32>
      %c0_35 = arith.constant 0 : index
      %c0_36 = arith.constant 0 : index
      %74 = vector.load %arg14[%c0_35, %c0_36] : memref<32x1xf32, #tpu.memory_space<vmem>>, vector<32x1xf32>
      tpu.vector_store %arg14[%c0_35, %c0_36], %73 {strides = array<i32>} : memref<32x1xf32, #tpu.memory_space<vmem>>, vector<32x1xf32>,
      %c0_37 = arith.constant 0 : index
      %c0_38 = arith.constant 0 : index
      %75 = vector.load %arg15[%c0_37, %c0_38] : memref<32x128xf32, #tpu.memory_space<vmem>>, vector<32x128xf32>
      %76 = vector.broadcast %65 : vector<32x1xf32> to vector<32x128xf32>
      %77 = arith.mulf %76, %75 : vector<32x128xf32>
      %78 = arith.truncf %68 : vector<32x16xf32> to vector<32x16xbf16>
      %cst_39 = arith.constant dense<0.000000e+00> : vector<32x128xf32>
      %79 = tpu.matmul %78, %32, %cst_39 {dimension_numbers = #tpu.dot_dimension_numbers<[1], [0], [0], [1], [0, 0, 1, 1], [], []>} : vector<32x16xbf16>, vector<16x128xbf16>, vector<32x128xf32> -> vector<32x128xf32>
      %80 = arith.addf %77, %79 : vector<32x128xf32>
      %c0_40 = arith.constant 0 : index
      %c0_41 = arith.constant 0 : index
      %81 = vector.load %arg15[%c0_40, %c0_41] : memref<32x128xf32, #tpu.memory_space<vmem>>, vector<32x128xf32>
      tpu.vector_store %arg15[%c0_40, %c0_41], %80 {strides = array<i32>} : memref<32x128xf32, #tpu.memory_space<vmem>>, vector<32x128xf32>,
      %c0_42 = arith.constant 0 : index
      %c0_43 = arith.constant 0 : index
      %82 = vector.load %arg13[%c0_42, %c0_43] : memref<32x1xf32, #tpu.memory_space<vmem>>, vector<32x1xf32>
      tpu.vector_store %arg13[%c0_42, %c0_43], %63 {strides = array<i32>} : memref<32x1xf32, #tpu.memory_space<vmem>>, vector<32x1xf32>,
    } else {
    }
    %c0_i32_5 = arith.constant 0 : i32
    %16 = arith.cmpi eq, %arg3, %c0_i32_5 : i32
    %17 = arith.extui %16 : i1 to i32
    %c0_i32_6 = arith.constant 0 : i32
    %18 = arith.cmpi ne, %17, %c0_i32_6 : i32
    scf.if %18 {
      %c0 = arith.constant 0 : index
      %c0_7 = arith.constant 0 : index
      %19 = vector.load %arg15[%c0, %c0_7] : memref<32x128xf32, #tpu.memory_space<vmem>>, vector<32x128xf32>
      %c0_8 = arith.constant 0 : index
      %c0_9 = arith.constant 0 : index
      %20 = vector.load %arg14[%c0_8, %c0_9] : memref<32x1xf32, #tpu.memory_space<vmem>>, vector<32x1xf32>
      %21 = tpu.reciprocal %20 {approx = true} : vector<32x1xf32> -> vector<32x1xf32>
      %22 = vector.broadcast %21 : vector<32x1xf32> to vector<32x128xf32>
      %23 = arith.mulf %19, %22 : vector<32x128xf32>
      %24 = vector.shape_cast %23 : vector<32x128xf32> to vector<2x16x128xf32>
      %25 = arith.truncf %24 : vector<2x16x128xf32> to vector<2x16x128xbf16>
      %c0_10 = arith.constant 0 : index
      %c0_11 = arith.constant 0 : index
      %c0_12 = arith.constant 0 : index
      %c0_13 = arith.constant 0 : index
      %26 = vector.load %arg11[%c0_10, %c0_11, %c0_12, %c0_13] : memref<1x2x16x128xbf16, #tpu.memory_space<vmem>>, vector<1x2x16x128xbf16>
      %27 = vector.shape_cast %26 : vector<1x2x16x128xbf16> to vector<2x16x128xbf16>
      %28 = vector.shape_cast %25 : vector<2x16x128xbf16> to vector<1x2x16x128xbf16>
      tpu.vector_store %arg11[%c0_10, %c0_11, %c0_12, %c0_13], %28 {strides = array<i32>} : memref<1x2x16x128xbf16, #tpu.memory_space<vmem>>, vector<1x2x16x128xbf16>,
    } else {
    }
    return
  }
  func.func @transform_0(%arg0: i32, %arg1: i32, %arg2: i32, %arg3: i32) -> (i32, i32, i32, i32) {
    %c0_i32 = arith.constant 0 : i32
    %c0_i32_0 = arith.constant 0 : i32
    return %arg0, %arg1, %arg2, %c0_i32 : i32, i32, i32, i32
  }
  func.func @transform_1(%arg0: i32, %arg1: i32, %arg2: i32, %arg3: i32) -> (i32, i32, i32, i32) {
    %c0_i32 = arith.constant 0 : i32
    %c0_i32_0 = arith.constant 0 : i32
    return %arg0, %arg1, %arg3, %c0_i32 : i32, i32, i32, i32
  }
  func.func @transform_2(%arg0: i32, %arg1: i32, %arg2: i32, %arg3: i32) -> (i32, i32, i32, i32) {
    %c0_i32 = arith.constant 0 : i32
    %c0_i32_0 = arith.constant 0 : i32
    return %arg0, %arg1, %arg3, %c0_i32 : i32, i32, i32, i32
  }
  func.func @transform_3(%arg0: i32, %arg1: i32, %arg2: i32, %arg3: i32) -> (i32, i32) {
    %c0_i32 = arith.constant 0 : i32
    %c0_i32_0 = arith.constant 0 : i32
    return %arg2, %c0_i32 : i32, i32
  }
  func.func @transform_4(%arg0: i32, %arg1: i32, %arg2: i32, %arg3: i32) -> (i32, i32) {
    %c0_i32 = arith.constant 0 : i32
    %c0_i32_0 = arith.constant 0 : i32
    return %arg2, %c0_i32 : i32, i32
  }
  func.func @transform_5(%arg0: i32, %arg1: i32, %arg2: i32, %arg3: i32) -> (i32, i32) {
    %c0_i32 = arith.constant 0 : i32
    %c0_i32_0 = arith.constant 0 : i32
    return %arg3, %c0_i32 : i32, i32
  }
  func.func @transform_6(%arg0: i32, %arg1: i32, %arg2: i32, %arg3: i32) -> (i32, i32) {
    %c0_i32 = arith.constant 0 : i32
    %c0_i32_0 = arith.constant 0 : i32
    return %arg3, %c0_i32 : i32, i32
  }
  func.func @transform_7(%arg0: i32, %arg1: i32, %arg2: i32, %arg3: i32) -> (i32, i32, i32, i32) {
    %c0_i32 = arith.constant 0 : i32
    %c0_i32_0 = arith.constant 0 : i32
    return %arg0, %arg1, %arg2, %c0_i32 : i32, i32, i32, i32
  }
}

module attributes {stable_mosaic.version = 11 : i64} {
  func.func @_matmul_res_kernel(%arg0: i32, %arg1: i32, %arg2: i32, %arg3: memref<32x256xbf16, #tpu.memory_space<vmem>>, %arg4: memref<256x256xbf16, #tpu.memory_space<vmem>>, %arg5: memref<32x256xbf16, #tpu.memory_space<vmem>>, %arg6: memref<32x256xbf16, #tpu.memory_space<vmem>>, %arg7: memref<32x256xf32, #tpu.memory_space<vmem>>) attributes {dimension_semantics = [#tpu.dimension_semantics<parallel>, #tpu.dimension_semantics<parallel>, #tpu.dimension_semantics<arbitrary>], iteration_bounds = array<i64: 1, 1, 1>, scalar_prefetch = 0 : i64, scratch_operands = 1 : i64, tpu.core_type = #tpu.core_type<tc>, window_params = [{transform_indices = @transform_0, window_bounds = array<i64: 32, 256>}, {transform_indices = @transform_1, window_bounds = array<i64: 256, 256>}, {transform_indices = @transform_2, window_bounds = array<i64: 32, 256>}, {transform_indices = @transform_3, window_bounds = array<i64: 32, 256>}]} {
    %c0_i32 = arith.constant 0 : i32
    %0 = arith.cmpi eq, %arg2, %c0_i32 : i32
    %1 = arith.extui %0 : i1 to i32
    %c0_i32_0 = arith.constant 0 : i32
    %2 = arith.cmpi ne, %1, %c0_i32_0 : i32
    scf.if %2 {
      %cst_10 = arith.constant 0.000000e+00 : f32
      %12 = vector.broadcast %cst_10 : f32 to vector<32x256xf32>
      %c0_11 = arith.constant 0 : index
      %c0_12 = arith.constant 0 : index
      %13 = vector.load %arg7[%c0_11, %c0_12] : memref<32x256xf32, #tpu.memory_space<vmem>>, vector<32x256xf32>
      tpu.vector_store %arg7[%c0_11, %c0_12], %12 {strides = array<i32>} : memref<32x256xf32, #tpu.memory_space<vmem>>, vector<32x256xf32>,
    } else {
    }
    %c0 = arith.constant 0 : index
    %c0_1 = arith.constant 0 : index
    %3 = vector.load %arg7[%c0, %c0_1] : memref<32x256xf32, #tpu.memory_space<vmem>>, vector<32x256xf32>
    %c0_2 = arith.constant 0 : index
    %c0_3 = arith.constant 0 : index
    %4 = vector.load %arg3[%c0_2, %c0_3] : memref<32x256xbf16, #tpu.memory_space<vmem>>, vector<32x256xbf16>
    %c0_4 = arith.constant 0 : index
    %c0_5 = arith.constant 0 : index
    %5 = vector.load %arg4[%c0_4, %c0_5] : memref<256x256xbf16, #tpu.memory_space<vmem>>, vector<256x256xbf16>
    %cst = arith.constant dense<0.000000e+00> : vector<32x256xf32>
    %6 = tpu.matmul %4, %5, %cst {dimension_numbers = #tpu.dot_dimension_numbers<[1], [0], [0], [1], [0, 0, 1, 1], [], []>} : vector<32x256xbf16>, vector<256x256xbf16>, vector<32x256xf32> -> vector<32x256xf32>
    %7 = arith.addf %3, %6 : vector<32x256xf32>
    %c0_6 = arith.constant 0 : index
    %c0_7 = arith.constant 0 : index
    %8 = vector.load %arg7[%c0_6, %c0_7] : memref<32x256xf32, #tpu.memory_space<vmem>>, vector<32x256xf32>
    tpu.vector_store %arg7[%c0_6, %c0_7], %7 {strides = array<i32>} : memref<32x256xf32, #tpu.memory_space<vmem>>, vector<32x256xf32>,
    %c0_i32_8 = arith.constant 0 : i32
    %9 = arith.cmpi eq, %arg2, %c0_i32_8 : i32
    %10 = arith.extui %9 : i1 to i32
    %c0_i32_9 = arith.constant 0 : i32
    %11 = arith.cmpi ne, %10, %c0_i32_9 : i32
    scf.if %11 {
      %c0_10 = arith.constant 0 : index
      %c0_11 = arith.constant 0 : index
      %12 = vector.load %arg7[%c0_10, %c0_11] : memref<32x256xf32, #tpu.memory_space<vmem>>, vector<32x256xf32>
      %c0_12 = arith.constant 0 : index
      %c0_13 = arith.constant 0 : index
      %13 = vector.load %arg5[%c0_12, %c0_13] : memref<32x256xbf16, #tpu.memory_space<vmem>>, vector<32x256xbf16>
      %14 = arith.extf %13 : vector<32x256xbf16> to vector<32x256xf32>
      %15 = arith.addf %12, %14 : vector<32x256xf32>
      %16 = arith.truncf %15 : vector<32x256xf32> to vector<32x256xbf16>
      %c0_14 = arith.constant 0 : index
      %c0_15 = arith.constant 0 : index
      %17 = vector.load %arg6[%c0_14, %c0_15] : memref<32x256xbf16, #tpu.memory_space<vmem>>, vector<32x256xbf16>
      tpu.vector_store %arg6[%c0_14, %c0_15], %16 {strides = array<i32>} : memref<32x256xbf16, #tpu.memory_space<vmem>>, vector<32x256xbf16>,
    } else {
    }
    return
  }
  func.func @transform_0(%arg0: i32, %arg1: i32, %arg2: i32) -> (i32, i32) {
    %c0_i32 = arith.constant 0 : i32
    return %arg0, %arg2 : i32, i32
  }
  func.func @transform_1(%arg0: i32, %arg1: i32, %arg2: i32) -> (i32, i32) {
    %c0_i32 = arith.constant 0 : i32
    return %arg2, %arg1 : i32, i32
  }
  func.func @transform_2(%arg0: i32, %arg1: i32, %arg2: i32) -> (i32, i32) {
    %c0_i32 = arith.constant 0 : i32
    return %arg0, %arg1 : i32, i32
  }
  func.func @transform_3(%arg0: i32, %arg1: i32, %arg2: i32) -> (i32, i32) {
    %c0_i32 = arith.constant 0 : i32
    return %arg0, %arg1 : i32, i32
  }
}

module attributes {stable_mosaic.version = 11 : i64} {
  func.func @_ffn_kernel(%arg0: i32, %arg1: i32, %arg2: memref<32x256xbf16, #tpu.memory_space<vmem>>, %arg3: memref<1x256xf32, #tpu.memory_space<vmem>>, %arg4: memref<256x512xbf16, #tpu.memory_space<vmem>>, %arg5: memref<256x512xbf16, #tpu.memory_space<vmem>>, %arg6: memref<512x256xbf16, #tpu.memory_space<vmem>>, %arg7: memref<32x256xbf16, #tpu.memory_space<vmem>>, %arg8: memref<32x256xf32, #tpu.memory_space<vmem>>, %arg9: memref<32x256xbf16, #tpu.memory_space<vmem>>) attributes {dimension_semantics = [#tpu.dimension_semantics<parallel>, #tpu.dimension_semantics<arbitrary>], iteration_bounds = array<i64: 1, 1>, scalar_prefetch = 0 : i64, scratch_operands = 2 : i64, tpu.core_type = #tpu.core_type<tc>, window_params = [{transform_indices = @transform_0, window_bounds = array<i64: 32, 256>}, {pipeline_mode = #tpu.pipeline_mode<synchronous>, transform_indices = @transform_1, window_bounds = array<i64: 1, 256>}, {transform_indices = @transform_2, window_bounds = array<i64: 256, 512>}, {transform_indices = @transform_3, window_bounds = array<i64: 256, 512>}, {transform_indices = @transform_4, window_bounds = array<i64: 512, 256>}, {transform_indices = @transform_5, window_bounds = array<i64: 32, 256>}]} {
    %c0_i32 = arith.constant 0 : i32
    %0 = arith.cmpi eq, %arg1, %c0_i32 : i32
    %1 = arith.extui %0 : i1 to i32
    %c0_i32_0 = arith.constant 0 : i32
    %2 = arith.cmpi ne, %1, %c0_i32_0 : i32
    scf.if %2 {
      %cst_17 = arith.constant 0.000000e+00 : f32
      %24 = vector.broadcast %cst_17 : f32 to vector<32x256xf32>
      %c0_18 = arith.constant 0 : index
      %c0_19 = arith.constant 0 : index
      %25 = vector.load %arg8[%c0_18, %c0_19] : memref<32x256xf32, #tpu.memory_space<vmem>>, vector<32x256xf32>
      tpu.vector_store %arg8[%c0_18, %c0_19], %24 {strides = array<i32>} : memref<32x256xf32, #tpu.memory_space<vmem>>, vector<32x256xf32>,
      %c0_20 = arith.constant 0 : index
      %c0_21 = arith.constant 0 : index
      %26 = vector.load %arg2[%c0_20, %c0_21] : memref<32x256xbf16, #tpu.memory_space<vmem>>, vector<32x256xbf16>
      %27 = arith.extf %26 : vector<32x256xbf16> to vector<32x256xf32>
      %28 = arith.mulf %27, %27 : vector<32x256xf32>
      %cst_22 = arith.constant dense<0.000000e+00> : vector<32xf32>
      %29 = vector.multi_reduction <add>, %28, %cst_22 [1] : vector<32x256xf32> to vector<32xf32>
      %30 = vector.shape_cast %29 : vector<32xf32> to vector<32x1xf32>
      %cst_23 = arith.constant 2.560000e+02 : f32
      %31 = vector.broadcast %cst_23 : f32 to vector<32x1xf32>
      %32 = arith.divf %30, %31 : vector<32x1xf32>
      %cst_24 = arith.constant 9.99999974E-6 : f32
      %33 = vector.broadcast %cst_24 : f32 to vector<32x1xf32>
      %34 = arith.addf %32, %33 : vector<32x1xf32>
      %35 = math.rsqrt %34 : vector<32x1xf32>
      %36 = vector.broadcast %35 : vector<32x1xf32> to vector<32x256xf32>
      %37 = arith.mulf %27, %36 : vector<32x256xf32>
      %c0_25 = arith.constant 0 : index
      %c0_26 = arith.constant 0 : index
      %38 = vector.load %arg3[%c0_25, %c0_26] : memref<1x256xf32, #tpu.memory_space<vmem>>, vector<1x256xf32>
      %39 = vector.broadcast %38 : vector<1x256xf32> to vector<32x256xf32>
      %40 = arith.mulf %37, %39 : vector<32x256xf32>
      %41 = arith.truncf %40 : vector<32x256xf32> to vector<32x256xbf16>
      %c0_27 = arith.constant 0 : index
      %c0_28 = arith.constant 0 : index
      %42 = vector.load %arg9[%c0_27, %c0_28] : memref<32x256xbf16, #tpu.memory_space<vmem>>, vector<32x256xbf16>
      tpu.vector_store %arg9[%c0_27, %c0_28], %41 {strides = array<i32>} : memref<32x256xbf16, #tpu.memory_space<vmem>>, vector<32x256xbf16>,
    } else {
    }
    %c0 = arith.constant 0 : index
    %c0_1 = arith.constant 0 : index
    %3 = vector.load %arg9[%c0, %c0_1] : memref<32x256xbf16, #tpu.memory_space<vmem>>, vector<32x256xbf16>
    %c0_2 = arith.constant 0 : index
    %c0_3 = arith.constant 0 : index
    %4 = vector.load %arg4[%c0_2, %c0_3] : memref<256x512xbf16, #tpu.memory_space<vmem>>, vector<256x512xbf16>
    %cst = arith.constant dense<0.000000e+00> : vector<32x512xf32>
    %5 = tpu.matmul %3, %4, %cst {dimension_numbers = #tpu.dot_dimension_numbers<[1], [0], [0], [1], [0, 0, 1, 1], [], []>} : vector<32x256xbf16>, vector<256x512xbf16>, vector<32x512xf32> -> vector<32x512xf32>
    %c0_4 = arith.constant 0 : index
    %c0_5 = arith.constant 0 : index
    %6 = vector.load %arg5[%c0_4, %c0_5] : memref<256x512xbf16, #tpu.memory_space<vmem>>, vector<256x512xbf16>
    %cst_6 = arith.constant dense<0.000000e+00> : vector<32x512xf32>
    %7 = tpu.matmul %3, %6, %cst_6 {dimension_numbers = #tpu.dot_dimension_numbers<[1], [0], [0], [1], [0, 0, 1, 1], [], []>} : vector<32x256xbf16>, vector<256x512xbf16>, vector<32x512xf32> -> vector<32x512xf32>
    %8 = arith.negf %5 : vector<32x512xf32>
    %9 = math.exp %8 : vector<32x512xf32>
    %cst_7 = arith.constant 1.000000e+00 : f32
    %10 = vector.broadcast %cst_7 : f32 to vector<32x512xf32>
    %11 = arith.addf %10, %9 : vector<32x512xf32>
    %12 = arith.divf %10, %11 : vector<32x512xf32>
    %13 = arith.mulf %5, %12 : vector<32x512xf32>
    %14 = arith.mulf %13, %7 : vector<32x512xf32>
    %c0_8 = arith.constant 0 : index
    %c0_9 = arith.constant 0 : index
    %15 = vector.load %arg8[%c0_8, %c0_9] : memref<32x256xf32, #tpu.memory_space<vmem>>, vector<32x256xf32>
    %16 = arith.truncf %14 : vector<32x512xf32> to vector<32x512xbf16>
    %c0_10 = arith.constant 0 : index
    %c0_11 = arith.constant 0 : index
    %17 = vector.load %arg6[%c0_10, %c0_11] : memref<512x256xbf16, #tpu.memory_space<vmem>>, vector<512x256xbf16>
    %cst_12 = arith.constant dense<0.000000e+00> : vector<32x256xf32>
    %18 = tpu.matmul %16, %17, %cst_12 {dimension_numbers = #tpu.dot_dimension_numbers<[1], [0], [0], [1], [0, 0, 1, 1], [], []>} : vector<32x512xbf16>, vector<512x256xbf16>, vector<32x256xf32> -> vector<32x256xf32>
    %19 = arith.addf %15, %18 : vector<32x256xf32>
    %c0_13 = arith.constant 0 : index
    %c0_14 = arith.constant 0 : index
    %20 = vector.load %arg8[%c0_13, %c0_14] : memref<32x256xf32, #tpu.memory_space<vmem>>, vector<32x256xf32>
    tpu.vector_store %arg8[%c0_13, %c0_14], %19 {strides = array<i32>} : memref<32x256xf32, #tpu.memory_space<vmem>>, vector<32x256xf32>,
    %c0_i32_15 = arith.constant 0 : i32
    %21 = arith.cmpi eq, %arg1, %c0_i32_15 : i32
    %22 = arith.extui %21 : i1 to i32
    %c0_i32_16 = arith.constant 0 : i32
    %23 = arith.cmpi ne, %22, %c0_i32_16 : i32
    scf.if %23 {
      %c0_17 = arith.constant 0 : index
      %c0_18 = arith.constant 0 : index
      %24 = vector.load %arg2[%c0_17, %c0_18] : memref<32x256xbf16, #tpu.memory_space<vmem>>, vector<32x256xbf16>
      %25 = arith.extf %24 : vector<32x256xbf16> to vector<32x256xf32>
      %c0_19 = arith.constant 0 : index
      %c0_20 = arith.constant 0 : index
      %26 = vector.load %arg8[%c0_19, %c0_20] : memref<32x256xf32, #tpu.memory_space<vmem>>, vector<32x256xf32>
      %27 = arith.addf %25, %26 : vector<32x256xf32>
      %28 = arith.truncf %27 : vector<32x256xf32> to vector<32x256xbf16>
      %c0_21 = arith.constant 0 : index
      %c0_22 = arith.constant 0 : index
      %29 = vector.load %arg7[%c0_21, %c0_22] : memref<32x256xbf16, #tpu.memory_space<vmem>>, vector<32x256xbf16>
      tpu.vector_store %arg7[%c0_21, %c0_22], %28 {strides = array<i32>} : memref<32x256xbf16, #tpu.memory_space<vmem>>, vector<32x256xbf16>,
    } else {
    }
    return
  }
  func.func @transform_0(%arg0: i32, %arg1: i32) -> (i32, i32) {
    %c0_i32 = arith.constant 0 : i32
    %c0_i32_0 = arith.constant 0 : i32
    return %arg0, %c0_i32 : i32, i32
  }
  func.func @transform_1(%arg0: i32, %arg1: i32) -> (i32, i32) {
    %c0_i32 = arith.constant 0 : i32
    %c0_i32_0 = arith.constant 0 : i32
    %c0_i32_1 = arith.constant 0 : i32
    return %c0_i32, %c0_i32_0 : i32, i32
  }
  func.func @transform_2(%arg0: i32, %arg1: i32) -> (i32, i32) {
    %c0_i32 = arith.constant 0 : i32
    %c0_i32_0 = arith.constant 0 : i32
    return %c0_i32, %arg1 : i32, i32
  }
  func.func @transform_3(%arg0: i32, %arg1: i32) -> (i32, i32) {
    %c0_i32 = arith.constant 0 : i32
    %c0_i32_0 = arith.constant 0 : i32
    return %c0_i32, %arg1 : i32, i32
  }
  func.func @transform_4(%arg0: i32, %arg1: i32) -> (i32, i32) {
    %c0_i32 = arith.constant 0 : i32
    %c0_i32_0 = arith.constant 0 : i32
    return %arg1, %c0_i32 : i32, i32
  }
  func.func @transform_5(%arg0: i32, %arg1: i32) -> (i32, i32) {
    %c0_i32 = arith.constant 0 : i32
    %c0_i32_0 = arith.constant 0 : i32
    return %arg0, %c0_i32 : i32, i32
  }
}

module attributes {stable_mosaic.version = 11 : i64} {
  func.func @_norm_matmul_kernel(%arg0: i32, %arg1: i32, %arg2: memref<32x256xbf16, #tpu.memory_space<vmem>>, %arg3: memref<1x256xf32, #tpu.memory_space<vmem>>, %arg4: memref<256x256xbf16, #tpu.memory_space<vmem>>, %arg5: memref<32x256xbf16, #tpu.memory_space<vmem>>, %arg6: memref<32x256xbf16, #tpu.memory_space<vmem>>) attributes {dimension_semantics = [#tpu.dimension_semantics<parallel>, #tpu.dimension_semantics<arbitrary>], iteration_bounds = array<i64: 1, 1>, scalar_prefetch = 0 : i64, scratch_operands = 1 : i64, tpu.core_type = #tpu.core_type<tc>, window_params = [{transform_indices = @transform_0, window_bounds = array<i64: 32, 256>}, {pipeline_mode = #tpu.pipeline_mode<synchronous>, transform_indices = @transform_1, window_bounds = array<i64: 1, 256>}, {transform_indices = @transform_2, window_bounds = array<i64: 256, 256>}, {transform_indices = @transform_3, window_bounds = array<i64: 32, 256>}]} {
    %c0_i32 = arith.constant 0 : i32
    %0 = arith.cmpi eq, %arg1, %c0_i32 : i32
    %1 = arith.extui %0 : i1 to i32
    %c0_i32_0 = arith.constant 0 : i32
    %2 = arith.cmpi ne, %1, %c0_i32_0 : i32
    scf.if %2 {
      %c0_6 = arith.constant 0 : index
      %c0_7 = arith.constant 0 : index
      %8 = vector.load %arg2[%c0_6, %c0_7] : memref<32x256xbf16, #tpu.memory_space<vmem>>, vector<32x256xbf16>
      %9 = arith.extf %8 : vector<32x256xbf16> to vector<32x256xf32>
      %10 = arith.mulf %9, %9 : vector<32x256xf32>
      %cst_8 = arith.constant dense<0.000000e+00> : vector<32xf32>
      %11 = vector.multi_reduction <add>, %10, %cst_8 [1] : vector<32x256xf32> to vector<32xf32>
      %12 = vector.shape_cast %11 : vector<32xf32> to vector<32x1xf32>
      %cst_9 = arith.constant 2.560000e+02 : f32
      %13 = vector.broadcast %cst_9 : f32 to vector<32x1xf32>
      %14 = arith.divf %12, %13 : vector<32x1xf32>
      %cst_10 = arith.constant 9.99999974E-6 : f32
      %15 = vector.broadcast %cst_10 : f32 to vector<32x1xf32>
      %16 = arith.addf %14, %15 : vector<32x1xf32>
      %17 = math.rsqrt %16 : vector<32x1xf32>
      %18 = vector.broadcast %17 : vector<32x1xf32> to vector<32x256xf32>
      %19 = arith.mulf %9, %18 : vector<32x256xf32>
      %c0_11 = arith.constant 0 : index
      %c0_12 = arith.constant 0 : index
      %20 = vector.load %arg3[%c0_11, %c0_12] : memref<1x256xf32, #tpu.memory_space<vmem>>, vector<1x256xf32>
      %21 = vector.broadcast %20 : vector<1x256xf32> to vector<32x256xf32>
      %22 = arith.mulf %19, %21 : vector<32x256xf32>
      %23 = arith.truncf %22 : vector<32x256xf32> to vector<32x256xbf16>
      %c0_13 = arith.constant 0 : index
      %c0_14 = arith.constant 0 : index
      %24 = vector.load %arg6[%c0_13, %c0_14] : memref<32x256xbf16, #tpu.memory_space<vmem>>, vector<32x256xbf16>
      tpu.vector_store %arg6[%c0_13, %c0_14], %23 {strides = array<i32>} : memref<32x256xbf16, #tpu.memory_space<vmem>>, vector<32x256xbf16>,
    } else {
    }
    %c0 = arith.constant 0 : index
    %c0_1 = arith.constant 0 : index
    %3 = vector.load %arg6[%c0, %c0_1] : memref<32x256xbf16, #tpu.memory_space<vmem>>, vector<32x256xbf16>
    %c0_2 = arith.constant 0 : index
    %c0_3 = arith.constant 0 : index
    %4 = vector.load %arg4[%c0_2, %c0_3] : memref<256x256xbf16, #tpu.memory_space<vmem>>, vector<256x256xbf16>
    %cst = arith.constant dense<0.000000e+00> : vector<32x256xf32>
    %5 = tpu.matmul %3, %4, %cst {dimension_numbers = #tpu.dot_dimension_numbers<[1], [0], [0], [1], [0, 0, 1, 1], [], []>} : vector<32x256xbf16>, vector<256x256xbf16>, vector<32x256xf32> -> vector<32x256xf32>
    %6 = arith.truncf %5 : vector<32x256xf32> to vector<32x256xbf16>
    %c0_4 = arith.constant 0 : index
    %c0_5 = arith.constant 0 : index
    %7 = vector.load %arg5[%c0_4, %c0_5] : memref<32x256xbf16, #tpu.memory_space<vmem>>, vector<32x256xbf16>
    tpu.vector_store %arg5[%c0_4, %c0_5], %6 {strides = array<i32>} : memref<32x256xbf16, #tpu.memory_space<vmem>>, vector<32x256xbf16>,
    return
  }
  func.func @transform_0(%arg0: i32, %arg1: i32) -> (i32, i32) {
    %c0_i32 = arith.constant 0 : i32
    %c0_i32_0 = arith.constant 0 : i32
    return %arg0, %c0_i32 : i32, i32
  }
  func.func @transform_1(%arg0: i32, %arg1: i32) -> (i32, i32) {
    %c0_i32 = arith.constant 0 : i32
    %c0_i32_0 = arith.constant 0 : i32
    %c0_i32_1 = arith.constant 0 : i32
    return %c0_i32, %c0_i32_0 : i32, i32
  }
  func.func @transform_2(%arg0: i32, %arg1: i32) -> (i32, i32) {
    %c0_i32 = arith.constant 0 : i32
    %c0_i32_0 = arith.constant 0 : i32
    return %c0_i32, %arg1 : i32, i32
  }
  func.func @transform_3(%arg0: i32, %arg1: i32) -> (i32, i32) {
    %c0_i32 = arith.constant 0 : i32
    return %arg0, %arg1 : i32, i32
  }
}

</mosaic_0001>

<llo_original>
// kernel: llama3_forward.9
$region0: #{llama3_forward.9}
  #allocation0 [shape = 'u32[]', space=smem, size = 0x4, offset = 0x4, fixed_abs, tag = 'smem constant byte address 0x4 - core index']
  #allocation1 [shape = 'u32[144,128]{1,0:T(1,128)}', space=vmem, size = 0x12000, scoped, tag = 'internal scratch']
  #allocation2 [shape = 'bf16[32,256]{1,0:T(16,128)(2,1)}', space=vmem, size = 0x4000, scoped, tag = 'scratch operand']
  %s0 = inlined_call_operand.hbm [shape: bf16[32,256], index: 0, kind: input, shape index: {}]
  %s1 = inlined_call_operand.hbm [shape: f32[1,256], index: 1, kind: input, shape index: {}]
  %s2 = inlined_call_operand.hbm [shape: bf16[256,512], index: 2, kind: input, shape index: {}]
  %s3 = inlined_call_operand.hbm [shape: bf16[32,512], index: 3, kind: output, shape index: {}]
  %s4 = sld [smem:[#allocation0]]
  $region38: #{llama3_forward.9} parent=0
    _
  %s6 = ssub.s32 1, %s4
  %s7 = scalar_select 0, %s6, %s4
  $region1: #{llama3_forward.9} parent=0
    #allocation3 [shape = 'u8[16384]{0}', space=vmem, size = 0x4000, scoped, tag = 'input window, operand 0, single buffered']
    #allocation4 [shape = 's32[1]{0}', space=sflag, size = 0x4, scoped, tag = 'scoped memory for llama3_forward.9']
    #allocation5 [shape = 's32[1]{0}', space=sflag, size = 0x4, scoped, tag = 'scoped memory for llama3_forward.9']
    #allocation6 [shape = 'u8[1024]{0}', space=vmem, size = 0x400, scoped, tag = 'input window, operand 1, single buffered']
    #allocation7 [shape = 's32[1]{0}', space=sflag, size = 0x4, scoped, tag = 'scoped memory for llama3_forward.9']
    #allocation8 [shape = 'u8[262144]{0}', space=vmem, size = 0x40000, scoped, tag = 'input window, operand 2, single buffered']
    #allocation9 [shape = 'u8[32768]{0}', space=vmem, size = 0x8000, scoped, tag = 'output window, operand 0, single buffered']
    %8 = vsyncpa [#allocation4], 0
    %9 = vsyncpa [#allocation7], 0
    %10 = vsyncpa [#allocation5], 0
    // Predicated region
    $region2: #{llama3_forward.9} parent=1 // pred_check
      _
    $region3: #{llama3_forward.9} parent=1 // pred_check_branch
      %12 = sbr.rel (0) target = $region5
    $region4: #{llama3_forward.9} parent=1 // pred_region
      %s14 = ssub.s32 512, 512
      %15 = vsyncadd [#allocation4], %s14
      %s16 = sshll.u32 [#allocation3], 4
      %s17 = int_to_ptr.vmem [resolvable:$true] %s16
      %22 = dma.hbm_to_vmem [thread:$0]  %s0, 512, %s17, [#allocation4], 128, 128, 8
    $region5: #{llama3_forward.9} parent=1 // pred_fallthru
      _
    // Predicated region
    $region6: #{llama3_forward.9} parent=1 // pred_check
      _
    $region7: #{llama3_forward.9} parent=1 // pred_check_branch
      %24 = sbr.rel (0) target = $region9
    $region8: #{llama3_forward.9} parent=1 // pred_region
      %s26 = ssub.s32 32, 32
      %27 = vsyncadd [#allocation7], %s26
      %s29 = sshll.u32 [#allocation6], 4
      %s30 = int_to_ptr.vmem [resolvable:$true] %s29
      %32 = dma.hbm_to_vmem [thread:$0]  %s1, 32, %s30, [#allocation7]
    $region9: #{llama3_forward.9} parent=1 // pred_fallthru
      _
    // Predicated region
    $region10: #{llama3_forward.9} parent=1 // pred_check
      _
    $region11: #{llama3_forward.9} parent=1 // pred_check_branch
      %34 = sbr.rel (0) target = $region13
    $region12: #{llama3_forward.9} parent=1 // pred_region
      %s36 = ssub.s32 8192, 8192
      %37 = vsyncadd [#allocation7], %s36
      %s38 = sshll.u32 [#allocation8], 4
      %s39 = int_to_ptr.vmem [resolvable:$true] %s38
      %44 = dma.hbm_to_vmem [thread:$0]  %s2, 8192, %s39, [#allocation7], 256, 256, 16
    $region13: #{llama3_forward.9} parent=1 // pred_fallthru
      _
    // Predicated region
    $region14: #{llama3_forward.9} parent=1 // pred_check
      _
    $region15: #{llama3_forward.9} parent=1 // pred_check_branch
      %46 = sbr.rel (0) target = $region17
    $region16: #{llama3_forward.9} parent=1 // pred_region
      %47 = dma.done [#allocation4], 512
    $region17: #{llama3_forward.9} parent=1 // pred_fallthru
      _
    // Predicated region
    $region18: #{llama3_forward.9} parent=1 // pred_check
      _
    $region19: #{llama3_forward.9} parent=1 // pred_check_branch
      %49 = sbr.rel (0) target = $region21
    $region20: #{llama3_forward.9} parent=1 // pred_region
      %50 = dma.done [#allocation7], 32
    $region21: #{llama3_forward.9} parent=1 // pred_fallthru
      _
    // Predicated region
    $region22: #{llama3_forward.9} parent=1 // pred_check
      _
    $region23: #{llama3_forward.9} parent=1 // pred_check_branch
      %52 = sbr.rel (0) target = $region25
    $region24: #{llama3_forward.9} parent=1 // pred_region
      %53 = dma.done [#allocation7], 8192
    $region25: #{llama3_forward.9} parent=1 // pred_fallthru
      _
    %p54 = scmp.eq.s32.totalorder 0, 0
    // Predicated region
    $region26: #{llama3_forward.9} parent=1 // pred_check
      %p55 = pneg %p54
    $region27: #{llama3_forward.9} parent=1 // pred_check_branch
      %57 = sbr.rel (%p55) target = $region29
    $region28: #{llama3_forward.9} parent=1 // pred_region
      %v58 = vld [vmem:[#allocation3] sm:$0xff]
      %v59 = vld [vmem:[#allocation3 + $0x8] sm:$0xff]
      %v60 = vld [vmem:[#allocation3 + $0x10] sm:$0xff]
      %v61 = vld [vmem:[#allocation3 + $0x18] sm:$0xff]
      %v62 = vunpack.c.l.bf16 %v58
      %v63 = vunpack.c.h.bf16 %v58
      %v64 = vunpack.c.l.bf16 %v59
      %v65 = vunpack.c.h.bf16 %v59
      %v66 = vunpack.c.l.bf16 %v60
      %v67 = vunpack.c.h.bf16 %v60
      %v68 = vunpack.c.l.bf16 %v61
      %v69 = vunpack.c.h.bf16 %v61
      %v70 = vmul.f32 %v62, %v62
      %v71 = vmul.f32 %v63, %v63
      %v72 = vmul.f32 %v64, %v64
      %v73 = vmul.f32 %v65, %v65
      %v74 = vmul.f32 %v66, %v66
      %v75 = vmul.f32 %v67, %v67
      %v76 = vmul.f32 %v68, %v68
      %v77 = vmul.f32 %v69, %v69
      %v78 = vadd.f32 %v70, %v71
      %79 = vadd.xlane.f32.xlu0 %v78
      %v80 = vpop.xlane.xlu0 %79
      %v81 = vadd.f32 %v72, %v73
      %82 = vadd.xlane.f32.xlu0 %v81
      %v83 = vpop.xlane.xlu0 %82
      %v84 = vadd.f32 %v74, %v75
      %85 = vadd.xlane.f32.xlu0 %v84
      %v86 = vpop.xlane.xlu0 %85
      %v87 = vadd.f32 %v76, %v77
      %88 = vadd.xlane.f32.xlu0 %v87
      %v89 = vpop.xlane.xlu0 %88
      %v90 = vrcp.pop 256.0
      %v91 = vmul.f32 %v80, %v90
      %v92 = vmul.f32 %v83, %v90
      %v93 = vmul.f32 %v86, %v90
      %v94 = vmul.f32 %v89, %v90
      %v95 = vadd.f32 %v91, 1e-05
      %v96 = vadd.f32 %v92, 1e-05
      %v97 = vadd.f32 %v93, 1e-05
      %v98 = vadd.f32 %v94, 1e-05
      %v99 = vrsqrt.pop %v95
      %v100 = vrsqrt.pop %v96
      %v101 = vrsqrt.pop %v97
      %v102 = vrsqrt.pop %v98
      %v103 = vmul.f32 %v62, %v99
      %v104 = vmul.f32 %v63, %v99
      %v105 = vmul.f32 %v64, %v100
      %v106 = vmul.f32 %v65, %v100
      %v107 = vmul.f32 %v66, %v101
      %v108 = vmul.f32 %v67, %v101
      %v109 = vmul.f32 %v68, %v102
      %v110 = vmul.f32 %v69, %v102
      %v111 = vld [vmem:[#allocation6] sm:$0x3]
      %v113 = vlaneseq
      %v114 = vshrl.u32 %v113, 7
      %v115 = vsub.s32 0, %v114
      %v116 = vrot.slane %v111, %v115
      %v117 = vlaneseq
      %v118 = vshrl.u32 %v117, 7
      %v119 = vsub.s32 1, %v118
      %v120 = vrot.slane %v111, %v119
      %v123 = vmul.f32 %v103, %v116
      %v124 = vmul.f32 %v104, %v120
      %v125 = vmul.f32 %v105, %v116
      %v126 = vmul.f32 %v106, %v120
      %v127 = vmul.f32 %v107, %v116
      %v128 = vmul.f32 %v108, %v120
      %v129 = vmul.f32 %v109, %v116
      %v130 = vmul.f32 %v110, %v120
      %v131 = vpack.c.bf16 %v125, %v123
      %v132 = vpack.c.bf16 %v126, %v124
      %v133 = vpack.c.bf16 %v129, %v127
      %v134 = vpack.c.bf16 %v130, %v128
      %135 = vst [vmem:[#allocation2] sm:$0xff] %v131
      %136 = vst [vmem:[#allocation2 + $0x8] sm:$0xff] %v132
      %137 = vst [vmem:[#allocation2 + $0x10] sm:$0xff] %v133
      %138 = vst [vmem:[#allocation2 + $0x18] sm:$0xff] %v134
    $region29: #{llama3_forward.9} parent=1 // pred_fallthru
      _
    %v139 = vld [vmem:[#allocation2] sm:$0xff]
    %v140 = vld [vmem:[#allocation2 + $0x8] sm:$0xff]
    %v141 = vld [vmem:[#allocation2 + $0x10] sm:$0xff]
    %v142 = vld [vmem:[#allocation2 + $0x18] sm:$0xff]
    %v143 = vld [vmem:[#allocation8] sm:$0xff]
    %v144 = vld [vmem:[#allocation8 + $0x8] sm:$0xff]
    %v145 = vld [vmem:[#allocation8 + $0x10] sm:$0xff]
    %v146 = vld [vmem:[#allocation8 + $0x18] sm:$0xff]
    %v147 = vld [vmem:[#allocation8 + $0x20] sm:$0xff]
    %v148 = vld [vmem:[#allocation8 + $0x28] sm:$0xff]
    %v149 = vld [vmem:[#allocation8 + $0x30] sm:$0xff]
    %v150 = vld [vmem:[#allocation8 + $0x38] sm:$0xff]
    %v151 = vld [vmem:[#allocation8 + $0x40] sm:$0xff]
    %v152 = vld [vmem:[#allocation8 + $0x48] sm:$0xff]
    %v153 = vld [vmem:[#allocation8 + $0x50] sm:$0xff]
    %v154 = vld [vmem:[#allocation8 + $0x58] sm:$0xff]
    %v155 = vld [vmem:[#allocation8 + $0x60] sm:$0xff]
    %v156 = vld [vmem:[#allocation8 + $0x68] sm:$0xff]
    %v157 = vld [vmem:[#allocation8 + $0x70] sm:$0xff]
    %v158 = vld [vmem:[#allocation8 + $0x78] sm:$0xff]
    %v159 = vld [vmem:[#allocation8 + $0x80] sm:$0xff]
    %v160 = vld [vmem:[#allocation8 + $0x88] sm:$0xff]
    %v161 = vld [vmem:[#allocation8 + $0x90] sm:$0xff]
    %v162 = vld [vmem:[#allocation8 + $0x98] sm:$0xff]
    %v163 = vld [vmem:[#allocation8 + $0xa0] sm:$0xff]
    %v164 = vld [vmem:[#allocation8 + $0xa8] sm:$0xff]
    %v165 = vld [vmem:[#allocation8 + $0xb0] sm:$0xff]
    %v166 = vld [vmem:[#allocation8 + $0xb8] sm:$0xff]
    %v167 = vld [vmem:[#allocation8 + $0xc0] sm:$0xff]
    %v168 = vld [vmem:[#allocation8 + $0xc8] sm:$0xff]
    %v169 = vld [vmem:[#allocation8 + $0xd0] sm:$0xff]
    %v170 = vld [vmem:[#allocation8 + $0xd8] sm:$0xff]
    %v171 = vld [vmem:[#allocation8 + $0xe0] sm:$0xff]
    %v172 = vld [vmem:[#allocation8 + $0xe8] sm:$0xff]
    %v173 = vld [vmem:[#allocation8 + $0xf0] sm:$0xff]
    %v174 = vld [vmem:[#allocation8 + $0xf8] sm:$0xff]
    %v175 = vld [vmem:[#allocation8 + $0x100] sm:$0xff]
    %v176 = vld [vmem:[#allocation8 + $0x108] sm:$0xff]
    %v177 = vld [vmem:[#allocation8 + $0x110] sm:$0xff]
    %v178 = vld [vmem:[#allocation8 + $0x118] sm:$0xff]
    %v179 = vld [vmem:[#allocation8 + $0x120] sm:$0xff]
    %v180 = vld [vmem:[#allocation8 + $0x128] sm:$0xff]
    %v181 = vld [vmem:[#allocation8 + $0x130] sm:$0xff]
    %v182 = vld [vmem:[#allocation8 + $0x138] sm:$0xff]
    %v183 = vld [vmem:[#allocation8 + $0x140] sm:$0xff]
    %v184 = vld [vmem:[#allocation8 + $0x148] sm:$0xff]
    %v185 = vld [vmem:[#allocation8 + $0x150] sm:$0xff]
    %v186 = vld [vmem:[#allocation8 + $0x158] sm:$0xff]
    %v187 = vld [vmem:[#allocation8 + $0x160] sm:$0xff]
    %v188 = vld [vmem:[#allocation8 + $0x168] sm:$0xff]
    %v189 = vld [vmem:[#allocation8 + $0x170] sm:$0xff]
    %v190 = vld [vmem:[#allocation8 + $0x178] sm:$0xff]
    %v191 = vld [vmem:[#allocation8 + $0x180] sm:$0xff]
    %v192 = vld [vmem:[#allocation8 + $0x188] sm:$0xff]
    %v193 = vld [vmem:[#allocation8 + $0x190] sm:$0xff]
    %v194 = vld [vmem:[#allocation8 + $0x198] sm:$0xff]
    %v195 = vld [vmem:[#allocation8 + $0x1a0] sm:$0xff]
    %v196 = vld [vmem:[#allocation8 + $0x1a8] sm:$0xff]
    %v197 = vld [vmem:[#allocation8 + $0x1b0] sm:$0xff]
    %v198 = vld [vmem:[#allocation8 + $0x1b8] sm:$0xff]
    %v199 = vld [vmem:[#allocation8 + $0x1c0] sm:$0xff]
    %v200 = vld [vmem:[#allocation8 + $0x1c8] sm:$0xff]
    %v201 = vld [vmem:[#allocation8 + $0x1d0] sm:$0xff]
    %v202 = vld [vmem:[#allocation8 + $0x1d8] sm:$0xff]
    %v203 = vld [vmem:[#allocation8 + $0x1e0] sm:$0xff]
    %v204 = vld [vmem:[#allocation8 + $0x1e8] sm:$0xff]
    %v205 = vld [vmem:[#allocation8 + $0x1f0] sm:$0xff]
    %v206 = vld [vmem:[#allocation8 + $0x1f8] sm:$0xff]
    %v271 = vunpack.c.l.b16 %v143
    %v272 = vunpack.c.h.b16 %v143
    %v273 = vunpack.c.l.b16 %v144
    %v274 = vunpack.c.h.b16 %v144
    %v275 = vunpack.c.l.b16 %v145
    %v276 = vunpack.c.h.b16 %v145
    %v277 = vunpack.c.l.b16 %v146
    %v278 = vunpack.c.h.b16 %v146
    %v279 = vunpack.c.l.b16 %v147
    %v280 = vunpack.c.h.b16 %v147
    %v281 = vunpack.c.l.b16 %v148
    %v282 = vunpack.c.h.b16 %v148
    %v283 = vunpack.c.l.b16 %v149
    %v284 = vunpack.c.h.b16 %v149
    %v285 = vunpack.c.l.b16 %v150
    %v286 = vunpack.c.h.b16 %v150
    %v287 = vunpack.c.l.b16 %v151
    %v288 = vunpack.c.h.b16 %v151
    %v289 = vunpack.c.l.b16 %v152
    %v290 = vunpack.c.h.b16 %v152
    %v291 = vunpack.c.l.b16 %v153
    %v292 = vunpack.c.h.b16 %v153
    %v293 = vunpack.c.l.b16 %v154
    %v294 = vunpack.c.h.b16 %v154
    %v295 = vunpack.c.l.b16 %v155
    %v296 = vunpack.c.h.b16 %v155
    %v297 = vunpack.c.l.b16 %v156
    %v298 = vunpack.c.h.b16 %v156
    %v299 = vunpack.c.l.b16 %v157
    %v300 = vunpack.c.h.b16 %v157
    %v301 = vunpack.c.l.b16 %v158
    %v302 = vunpack.c.h.b16 %v158
    %v303 = vunpack.c.l.b16 %v159
    %v304 = vunpack.c.h.b16 %v159
    %v305 = vunpack.c.l.b16 %v160
    %v306 = vunpack.c.h.b16 %v160
    %v307 = vunpack.c.l.b16 %v161
    %v308 = vunpack.c.h.b16 %v161
    %v309 = vunpack.c.l.b16 %v162
    %v310 = vunpack.c.h.b16 %v162
    %v311 = vunpack.c.l.b16 %v163
    %v312 = vunpack.c.h.b16 %v163
    %v313 = vunpack.c.l.b16 %v164
    %v314 = vunpack.c.h.b16 %v164
    %v315 = vunpack.c.l.b16 %v165
    %v316 = vunpack.c.h.b16 %v165
    %v317 = vunpack.c.l.b16 %v166
    %v318 = vunpack.c.h.b16 %v166
    %v319 = vunpack.c.l.b16 %v167
    %v320 = vunpack.c.h.b16 %v167
    %v321 = vunpack.c.l.b16 %v168
    %v322 = vunpack.c.h.b16 %v168
    %v323 = vunpack.c.l.b16 %v169
    %v324 = vunpack.c.h.b16 %v169
    %v325 = vunpack.c.l.b16 %v170
    %v326 = vunpack.c.h.b16 %v170
    %v327 = vunpack.c.l.b16 %v171
    %v328 = vunpack.c.h.b16 %v171
    %v329 = vunpack.c.l.b16 %v172
    %v330 = vunpack.c.h.b16 %v172
    %v331 = vunpack.c.l.b16 %v173
    %v332 = vunpack.c.h.b16 %v173
    %v333 = vunpack.c.l.b16 %v174
    %v334 = vunpack.c.h.b16 %v174
    %v335 = vunpack.c.l.b16 %v175
    %v336 = vunpack.c.h.b16 %v175
    %v337 = vunpack.c.l.b16 %v176
    %v338 = vunpack.c.h.b16 %v176
    %v339 = vunpack.c.l.b16 %v177
    %v340 = vunpack.c.h.b16 %v177
    %v341 = vunpack.c.l.b16 %v178
    %v342 = vunpack.c.h.b16 %v178
    %v343 = vunpack.c.l.b16 %v179
    %v344 = vunpack.c.h.b16 %v179
    %v345 = vunpack.c.l.b16 %v180
    %v346 = vunpack.c.h.b16 %v180
    %v347 = vunpack.c.l.b16 %v181
    %v348 = vunpack.c.h.b16 %v181
    %v349 = vunpack.c.l.b16 %v182
    %v350 = vunpack.c.h.b16 %v182
    %v351 = vunpack.c.l.b16 %v183
    %v352 = vunpack.c.h.b16 %v183
    %v353 = vunpack.c.l.b16 %v184
    %v354 = vunpack.c.h.b16 %v184
    %v355 = vunpack.c.l.b16 %v185
    %v356 = vunpack.c.h.b16 %v185
    %v357 = vunpack.c.l.b16 %v186
    %v358 = vunpack.c.h.b16 %v186
    %v359 = vunpack.c.l.b16 %v187
    %v360 = vunpack.c.h.b16 %v187
    %v361 = vunpack.c.l.b16 %v188
    %v362 = vunpack.c.h.b16 %v188
    %v363 = vunpack.c.l.b16 %v189
    %v364 = vunpack.c.h.b16 %v189
    %v365 = vunpack.c.l.b16 %v190
    %v366 = vunpack.c.h.b16 %v190
    %v367 = vunpack.c.l.b16 %v191
    %v368 = vunpack.c.h.b16 %v191
    %v369 = vunpack.c.l.b16 %v192
    %v370 = vunpack.c.h.b16 %v192
    %v371 = vunpack.c.l.b16 %v193
    %v372 = vunpack.c.h.b16 %v193
    %v373 = vunpack.c.l.b16 %v194
    %v374 = vunpack.c.h.b16 %v194
    %v375 = vunpack.c.l.b16 %v195
    %v376 = vunpack.c.h.b16 %v195
    %v377 = vunpack.c.l.b16 %v196
    %v378 = vunpack.c.h.b16 %v196
    %v379 = vunpack.c.l.b16 %v197
    %v380 = vunpack.c.h.b16 %v197
    %v381 = vunpack.c.l.b16 %v198
    %v382 = vunpack.c.h.b16 %v198
    %v383 = vunpack.c.l.b16 %v199
    %v384 = vunpack.c.h.b16 %v199
    %v385 = vunpack.c.l.b16 %v200
    %v386 = vunpack.c.h.b16 %v200
    %v387 = vunpack.c.l.b16 %v201
    %v388 = vunpack.c.h.b16 %v201
    %v389 = vunpack.c.l.b16 %v202
    %v390 = vunpack.c.h.b16 %v202
    %v391 = vunpack.c.l.b16 %v203
    %v392 = vunpack.c.h.b16 %v203
    %v393 = vunpack.c.l.b16 %v204
    %v394 = vunpack.c.h.b16 %v204
    %v395 = vunpack.c.l.b16 %v205
    %v396 = vunpack.c.h.b16 %v205
    %v397 = vunpack.c.l.b16 %v206
    %v398 = vunpack.c.h.b16 %v206
    %v399 = vpack.c.b16 %v275, %v271
    %v400 = vpack.c.b16 %v276, %v272
    %v401 = vpack.c.b16 %v277, %v273
    %v402 = vpack.c.b16 %v278, %v274
    %v403 = vpack.c.b16 %v283, %v279
    %v404 = vpack.c.b16 %v284, %v280
    %v405 = vpack.c.b16 %v285, %v281
    %v406 = vpack.c.b16 %v286, %v282
    %v407 = vpack.c.b16 %v291, %v287
    %v408 = vpack.c.b16 %v292, %v288
    %v409 = vpack.c.b16 %v293, %v289
    %v410 = vpack.c.b16 %v294, %v290
    %v411 = vpack.c.b16 %v299, %v295
    %v412 = vpack.c.b16 %v300, %v296
    %v413 = vpack.c.b16 %v301, %v297
    %v414 = vpack.c.b16 %v302, %v298
    %v415 = vpack.c.b16 %v307, %v303
    %v416 = vpack.c.b16 %v308, %v304
    %v417 = vpack.c.b16 %v309, %v305
    %v418 = vpack.c.b16 %v310, %v306
    %v419 = vpack.c.b16 %v315, %v311
    %v420 = vpack.c.b16 %v316, %v312
    %v421 = vpack.c.b16 %v317, %v313
    %v422 = vpack.c.b16 %v318, %v314
    %v423 = vpack.c.b16 %v323, %v319
    %v424 = vpack.c.b16 %v324, %v320
    %v425 = vpack.c.b16 %v325, %v321
    %v426 = vpack.c.b16 %v326, %v322
    %v427 = vpack.c.b16 %v331, %v327
    %v428 = vpack.c.b16 %v332, %v328
    %v429 = vpack.c.b16 %v333, %v329
    %v430 = vpack.c.b16 %v334, %v330
    %v431 = vpack.c.b16 %v339, %v335
    %v432 = vpack.c.b16 %v340, %v336
    %v433 = vpack.c.b16 %v341, %v337
    %v434 = vpack.c.b16 %v342, %v338
    %v435 = vpack.c.b16 %v347, %v343
    %v436 = vpack.c.b16 %v348, %v344
    %v437 = vpack.c.b16 %v349, %v345
    %v438 = vpack.c.b16 %v350, %v346
    %v439 = vpack.c.b16 %v355, %v351
    %v440 = vpack.c.b16 %v356, %v352
    %v441 = vpack.c.b16 %v357, %v353
    %v442 = vpack.c.b16 %v358, %v354
    %v443 = vpack.c.b16 %v363, %v359
    %v444 = vpack.c.b16 %v364, %v360
    %v445 = vpack.c.b16 %v365, %v361
    %v446 = vpack.c.b16 %v366, %v362
    %v447 = vpack.c.b16 %v371, %v367
    %v448 = vpack.c.b16 %v372, %v368
    %v449 = vpack.c.b16 %v373, %v369
    %v450 = vpack.c.b16 %v374, %v370
    %v451 = vpack.c.b16 %v379, %v375
    %v452 = vpack.c.b16 %v380, %v376
    %v453 = vpack.c.b16 %v381, %v377
    %v454 = vpack.c.b16 %v382, %v378
    %v455 = vpack.c.b16 %v387, %v383
    %v456 = vpack.c.b16 %v388, %v384
    %v457 = vpack.c.b16 %v389, %v385
    %v458 = vpack.c.b16 %v390, %v386
    %v459 = vpack.c.b16 %v395, %v391
    %v460 = vpack.c.b16 %v396, %v392
    %v461 = vpack.c.b16 %v397, %v393
    %v462 = vpack.c.b16 %v398, %v394
    %527 = vmatprep.subr.bf16.mxu0 %v400
    %528 = vmatpush1.bf16.msra.mxu0 %v399
    %529 = vmatprep.subr.bf16.mxu0 %v404
    %530 = vmatpush1.bf16.msra.mxu0 %v403
    %531 = vmatprep.subr.bf16.mxu0 %v408
    %532 = vmatpush1.bf16.msra.mxu0 %v407
    %533 = vmatprep.subr.bf16.mxu0 %v412
    %534 = vmatpush1.bf16.msra.mxu0 %v411
    %535 = vmatprep.subr.bf16.mxu0 %v416
    %536 = vmatpush1.bf16.msra.mxu0 %v415
    %537 = vmatprep.subr.bf16.mxu0 %v420
    %538 = vmatpush1.bf16.msra.mxu0 %v419
    %539 = vmatprep.subr.bf16.mxu0 %v424
    %540 = vmatpush1.bf16.msra.mxu0 %v423
    %541 = vmatprep.subr.bf16.mxu0 %v428
    %542 = vmatpush1.bf16.msra.mxu0 %v427
    %543 = vmatprep.subr.bf16.mxu0 %v432
    %544 = vmatpush1.bf16.msra.mxu0 %v431
    %545 = vmatprep.subr.bf16.mxu0 %v436
    %546 = vmatpush1.bf16.msra.mxu0 %v435
    %547 = vmatprep.subr.bf16.mxu0 %v440
    %548 = vmatpush1.bf16.msra.mxu0 %v439
    %549 = vmatprep.subr.bf16.mxu0 %v444
    %550 = vmatpush1.bf16.msra.mxu0 %v443
    %551 = vmatprep.subr.bf16.mxu0 %v448
    %552 = vmatpush1.bf16.msra.mxu0 %v447
    %553 = vmatprep.subr.bf16.mxu0 %v452
    %554 = vmatpush1.bf16.msra.mxu0 %v451
    %555 = vmatprep.subr.bf16.mxu0 %v456
    %556 = vmatpush1.bf16.msra.mxu0 %v455
    %557 = vmatprep.subr.bf16.mxu0 %v460
    %558 = vmatpush1.bf16.msra.mxu0 %v459
    %559 = vmatprep.mubr.bf16.mxu0 %v140
    %560 = vmatmul.mubr.bf16.gmra.mrb[0].mxu0 %v139
    %v561 = vpop.f32.mrb[0].mxu0
    %v562 = vadd.f32 0.0, %v561
    %v563 = vpop.f32.mrb[0].mxu0
    %v564 = vadd.f32 0.0, %v563
    %v565 = vpop.f32.mrb[0].mxu0
    %v566 = vadd.f32 0.0, %v565
    %v567 = vpop.f32.mrb[0].mxu0
    %v568 = vadd.f32 0.0, %v567
    %569 = vmatprep.mubr.bf16.mxu0 %v142
    %570 = vmatmul.mubr.bf16.gmra.mrb[0].mxu0 %v141
    %v571 = vpop.f32.mrb[0].mxu0
    %v572 = vadd.f32 0.0, %v571
    %v573 = vpop.f32.mrb[0].mxu0
    %v574 = vadd.f32 0.0, %v573
    %v575 = vpop.f32.mrb[0].mxu0
    %v576 = vadd.f32 0.0, %v575
    %v577 = vpop.f32.mrb[0].mxu0
    %v578 = vadd.f32 0.0, %v577
    %579 = vdwg.mxu0
    %580 = vmatprep.subr.bf16.mxu0 %v402
    %581 = vmatpush1.bf16.msra.mxu0 %v401
    %582 = vmatprep.subr.bf16.mxu0 %v406
    %583 = vmatpush1.bf16.msra.mxu0 %v405
    %584 = vmatprep.subr.bf16.mxu0 %v410
    %585 = vmatpush1.bf16.msra.mxu0 %v409
    %586 = vmatprep.subr.bf16.mxu0 %v414
    %587 = vmatpush1.bf16.msra.mxu0 %v413
    %588 = vmatprep.subr.bf16.mxu0 %v418
    %589 = vmatpush1.bf16.msra.mxu0 %v417
    %590 = vmatprep.subr.bf16.mxu0 %v422
    %591 = vmatpush1.bf16.msra.mxu0 %v421
    %592 = vmatprep.subr.bf16.mxu0 %v426
    %593 = vmatpush1.bf16.msra.mxu0 %v425
    %594 = vmatprep.subr.bf16.mxu0 %v430
    %595 = vmatpush1.bf16.msra.mxu0 %v429
    %596 = vmatprep.subr.bf16.mxu0 %v434
    %597 = vmatpush1.bf16.msra.mxu0 %v433
    %598 = vmatprep.subr.bf16.mxu0 %v438
    %599 = vmatpush1.bf16.msra.mxu0 %v437
    %600 = vmatprep.subr.bf16.mxu0 %v442
    %601 = vmatpush1.bf16.msra.mxu0 %v441
    %602 = vmatprep.subr.bf16.mxu0 %v446
    %603 = vmatpush1.bf16.msra.mxu0 %v445
    %604 = vmatprep.subr.bf16.mxu0 %v450
    %605 = vmatpush1.bf16.msra.mxu0 %v449
    %606 = vmatprep.subr.bf16.mxu0 %v454
    %607 = vmatpush1.bf16.msra.mxu0 %v453
    %608 = vmatprep.subr.bf16.mxu0 %v458
    %609 = vmatpush1.bf16.msra.mxu0 %v457
    %610 = vmatprep.subr.bf16.mxu0 %v462
    %611 = vmatpush1.bf16.msra.mxu0 %v461
    %612 = vmatprep.mubr.bf16.mxu0 %v140
    %613 = vmatmul.mubr.bf16.gmra.mrb[0].mxu0 %v139
    %v614 = vpop.f32.mrb[0].mxu0
    %v615 = vadd.f32 0.0, %v614
    %v616 = vpop.f32.mrb[0].mxu0
    %v617 = vadd.f32 0.0, %v616
    %v618 = vpop.f32.mrb[0].mxu0
    %v619 = vadd.f32 0.0, %v618
    %v620 = vpop.f32.mrb[0].mxu0
    %v621 = vadd.f32 0.0, %v620
    %622 = vmatprep.mubr.bf16.mxu0 %v142
    %623 = vmatmul.mubr.bf16.gmra.mrb[0].mxu0 %v141
    %v624 = vpop.f32.mrb[0].mxu0
    %v625 = vadd.f32 0.0, %v624
    %v626 = vpop.f32.mrb[0].mxu0
    %v627 = vadd.f32 0.0, %v626
    %v628 = vpop.f32.mrb[0].mxu0
    %v629 = vadd.f32 0.0, %v628
    %v630 = vpop.f32.mrb[0].mxu0
    %v631 = vadd.f32 0.0, %v630
    %632 = vdwg.mxu0
    %v633 = vpack.c.bf16 %v566, %v562
    %v634 = vpack.c.bf16 %v568, %v564
    %v635 = vpack.c.bf16 %v619, %v615
    %v636 = vpack.c.bf16 %v621, %v617
    %v637 = vpack.c.bf16 %v576, %v572
    %v638 = vpack.c.bf16 %v578, %v574
    %v639 = vpack.c.bf16 %v629, %v625
    %v640 = vpack.c.bf16 %v631, %v627
    %v649 = vunpack.c.l.b16 %v633
    %v650 = vunpack.c.l.b16 %v634
    %v651 = vunpack.c.l.b16 %v635
    %v652 = vunpack.c.l.b16 %v636
    %v653 = vunpack.c.h.b16 %v633
    %v654 = vunpack.c.h.b16 %v634
    %v655 = vunpack.c.h.b16 %v635
    %v656 = vunpack.c.h.b16 %v636
    %v657 = vunpack.c.l.b16 %v637
    %v658 = vunpack.c.l.b16 %v638
    %v659 = vunpack.c.l.b16 %v639
    %v660 = vunpack.c.l.b16 %v640
    %v661 = vunpack.c.h.b16 %v637
    %v662 = vunpack.c.h.b16 %v638
    %v663 = vunpack.c.h.b16 %v639
    %v664 = vunpack.c.h.b16 %v640
    %v665 = vpack.c.b16 %v650, %v649
    %v666 = vpack.c.b16 %v652, %v651
    %v667 = vpack.c.b16 %v654, %v653
    %v668 = vpack.c.b16 %v656, %v655
    %v669 = vpack.c.b16 %v658, %v657
    %v670 = vpack.c.b16 %v660, %v659
    %v671 = vpack.c.b16 %v662, %v661
    %v672 = vpack.c.b16 %v664, %v663
    %681 = vst [vmem:[#allocation9] sm:$0xff] %v665
    %682 = vst [vmem:[#allocation9 + $0x8] sm:$0xff] %v666
    %683 = vst [vmem:[#allocation9 + $0x10] sm:$0xff] %v667
    %684 = vst [vmem:[#allocation9 + $0x18] sm:$0xff] %v668
    %685 = vst [vmem:[#allocation9 + $0x20] sm:$0xff] %v669
    %686 = vst [vmem:[#allocation9 + $0x28] sm:$0xff] %v670
    %687 = vst [vmem:[#allocation9 + $0x30] sm:$0xff] %v671
    %688 = vst [vmem:[#allocation9 + $0x38] sm:$0xff] %v672
    // Predicated region
    $region30: #{llama3_forward.9} parent=1 // pred_check
      _
    $region31: #{llama3_forward.9} parent=1 // pred_check_branch
      %690 = sbr.rel (0) target = $region33
    $region32: #{llama3_forward.9} parent=1 // pred_region
      %s692 = ssub.s32 1024, 1024
      %693 = vsyncadd [#allocation5], %s692
      %s694 = sshll.u32 [#allocation9], 4
      %s695 = int_to_ptr.vmem [resolvable:$true] %s694
      %700 = dma.vmem_to_hbm [thread:$0]  %s695, 1024, %s3, [#allocation5], 256, 256, 16
    $region33: #{llama3_forward.9} parent=1 // pred_fallthru
      _
    // Predicated region
    $region34: #{llama3_forward.9} parent=1 // pred_check
      _
    $region35: #{llama3_forward.9} parent=1 // pred_check_branch
      %702 = sbr.rel (0) target = $region37
    $region36: #{llama3_forward.9} parent=1 // pred_region
      %703 = dma.done [#allocation5], 1024
    $region37: #{llama3_forward.9} parent=1 // pred_fallthru
      _
    %704 = vsyncpa [#allocation4], 1
    %705 = vsyncpa [#allocation7], 1
    %706 = vsyncpa [#allocation5], 1

// kernel: llama3_forward.11
$region0: #{llama3_forward.11}
  #allocation0 [shape = 'u32[]', space=smem, size = 0x4, offset = 0x4, fixed_abs, tag = 'smem constant byte address 0x4 - core index']
  #allocation1 [shape = 'u32[144,128]{1,0:T(1,128)}', space=vmem, size = 0x12000, scoped, tag = 'internal scratch']
  #allocation2 [shape = 'f32[32,256]{1,0:T(8,128)}', space=vmem, size = 0x8000, scoped, tag = 'scratch operand']
  %s0 = inlined_call_operand.hbm [shape: bf16[32,256], index: 0, kind: input, shape index: {}]
  %s1 = inlined_call_operand.hbm [shape: bf16[256,256], index: 1, kind: input, shape index: {}]
  %s2 = inlined_call_operand.hbm [shape: bf16[32,256], index: 2, kind: input, shape index: {}]
  %s3 = inlined_call_operand.hbm [shape: bf16[32,256], index: 3, kind: output, shape index: {}]
  %s4 = sld [smem:[#allocation0]]
  $region42: #{llama3_forward.11} parent=0
    _
  %s6 = ssub.s32 1, %s4
  %s7 = scalar_select 0, %s6, %s4
  $region1: #{llama3_forward.11} parent=0
    #allocation3 [shape = 'u8[16384]{0}', space=vmem, size = 0x4000, scoped, tag = 'input window, operand 0, single buffered']
    #allocation4 [shape = 's32[1]{0}', space=sflag, size = 0x4, scoped, tag = 'scoped memory for llama3_forward.11']
    #allocation5 [shape = 's32[1]{0}', space=sflag, size = 0x4, scoped, tag = 'scoped memory for llama3_forward.11']
    #allocation6 [shape = 'u8[131072]{0}', space=vmem, size = 0x20000, scoped, tag = 'input window, operand 1, single buffered']
    #allocation7 [shape = 's32[1]{0}', space=sflag, size = 0x4, scoped, tag = 'scoped memory for llama3_forward.11']
    #allocation8 [shape = 'u8[16384]{0}', space=vmem, size = 0x4000, scoped, tag = 'input window, operand 2, single buffered']
    #allocation9 [shape = 'u8[16384]{0}', space=vmem, size = 0x4000, scoped, tag = 'output window, operand 0, single buffered']
    %8 = vsyncpa [#allocation4], 0
    %9 = vsyncpa [#allocation7], 0
    %10 = vsyncpa [#allocation5], 0
    // Predicated region
    $region2: #{llama3_forward.11} parent=1 // pred_check
      _
    $region3: #{llama3_forward.11} parent=1 // pred_check_branch
      %12 = sbr.rel (0) target = $region5
    $region4: #{llama3_forward.11} parent=1 // pred_region
      %s14 = ssub.s32 512, 512
      %15 = vsyncadd [#allocation4], %s14
      %s16 = sshll.u32 [#allocation3], 4
      %s17 = int_to_ptr.vmem [resolvable:$true] %s16
      %22 = dma.hbm_to_vmem [thread:$0]  %s0, 512, %s17, [#allocation4], 128, 128, 8
    $region5: #{llama3_forward.11} parent=1 // pred_fallthru
      _
    // Predicated region
    $region6: #{llama3_forward.11} parent=1 // pred_check
      _
    $region7: #{llama3_forward.11} parent=1 // pred_check_branch
      %24 = sbr.rel (0) target = $region9
    $region8: #{llama3_forward.11} parent=1 // pred_region
      %s26 = ssub.s32 4096, 4096
      %27 = vsyncadd [#allocation7], %s26
      %s28 = sshll.u32 [#allocation6], 4
      %s29 = int_to_ptr.vmem [resolvable:$true] %s28
      %34 = dma.hbm_to_vmem [thread:$0]  %s1, 4096, %s29, [#allocation7], 128, 128, 8
    $region9: #{llama3_forward.11} parent=1 // pred_fallthru
      _
    // Predicated region
    $region10: #{llama3_forward.11} parent=1 // pred_check
      _
    $region11: #{llama3_forward.11} parent=1 // pred_check_branch
      %36 = sbr.rel (0) target = $region13
    $region12: #{llama3_forward.11} parent=1 // pred_region
      %s38 = ssub.s32 512, 512
      %39 = vsyncadd [#allocation7], %s38
      %s40 = sshll.u32 [#allocation8], 4
      %s41 = int_to_ptr.vmem [resolvable:$true] %s40
      %46 = dma.hbm_to_vmem [thread:$0]  %s2, 512, %s41, [#allocation7], 128, 128, 8
    $region13: #{llama3_forward.11} parent=1 // pred_fallthru
      _
    // Predicated region
    $region14: #{llama3_forward.11} parent=1 // pred_check
      _
    $region15: #{llama3_forward.11} parent=1 // pred_check_branch
      %48 = sbr.rel (0) target = $region17
    $region16: #{llama3_forward.11} parent=1 // pred_region
      %49 = dma.done [#allocation4], 512
    $region17: #{llama3_forward.11} parent=1 // pred_fallthru
      _
    // Predicated region
    $region18: #{llama3_forward.11} parent=1 // pred_check
      _
    $region19: #{llama3_forward.11} parent=1 // pred_check_branch
      %51 = sbr.rel (0) target = $region21
    $region20: #{llama3_forward.11} parent=1 // pred_region
      %52 = dma.done [#allocation7], 4096
    $region21: #{llama3_forward.11} parent=1 // pred_fallthru
      _
    // Predicated region
    $region22: #{llama3_forward.11} parent=1 // pred_check
      _
    $region23: #{llama3_forward.11} parent=1 // pred_check_branch
      %54 = sbr.rel (0) target = $region25
    $region24: #{llama3_forward.11} parent=1 // pred_region
      %55 = dma.done [#allocation7], 512
    $region25: #{llama3_forward.11} parent=1 // pred_fallthru
      _
    %p56 = scmp.eq.s32.totalorder 0, 0
    // Predicated region
    $region26: #{llama3_forward.11} parent=1 // pred_check
      %p57 = pneg %p56
    $region27: #{llama3_forward.11} parent=1 // pred_check_branch
      %59 = sbr.rel (%p57) target = $region29
    $region28: #{llama3_forward.11} parent=1 // pred_region
      %60 = vst [vmem:[#allocation2] sm:$0xff] 0.0
      %61 = vst [vmem:[#allocation2 + $0x8] sm:$0xff] 0.0
      %62 = vst [vmem:[#allocation2 + $0x10] sm:$0xff] 0.0
      %63 = vst [vmem:[#allocation2 + $0x18] sm:$0xff] 0.0
      %64 = vst [vmem:[#allocation2 + $0x20] sm:$0xff] 0.0
      %65 = vst [vmem:[#allocation2 + $0x28] sm:$0xff] 0.0
      %66 = vst [vmem:[#allocation2 + $0x30] sm:$0xff] 0.0
      %67 = vst [vmem:[#allocation2 + $0x38] sm:$0xff] 0.0
    $region29: #{llama3_forward.11} parent=1 // pred_fallthru
      _
    %v68 = vld [vmem:[#allocation2] sm:$0xff]
    %v69 = vld [vmem:[#allocation2 + $0x8] sm:$0xff]
    %v70 = vld [vmem:[#allocation2 + $0x10] sm:$0xff]
    %v71 = vld [vmem:[#allocation2 + $0x18] sm:$0xff]
    %v72 = vld [vmem:[#allocation2 + $0x20] sm:$0xff]
    %v73 = vld [vmem:[#allocation2 + $0x28] sm:$0xff]
    %v74 = vld [vmem:[#allocation2 + $0x30] sm:$0xff]
    %v75 = vld [vmem:[#allocation2 + $0x38] sm:$0xff]
    %v76 = vld [vmem:[#allocation3] sm:$0xff]
    %v77 = vld [vmem:[#allocation3 + $0x8] sm:$0xff]
    %v78 = vld [vmem:[#allocation3 + $0x10] sm:$0xff]
    %v79 = vld [vmem:[#allocation3 + $0x18] sm:$0xff]
    %v80 = vld [vmem:[#allocation6] sm:$0xff]
    %v81 = vld [vmem:[#allocation6 + $0x8] sm:$0xff]
    %v82 = vld [vmem:[#allocation6 + $0x10] sm:$0xff]
    %v83 = vld [vmem:[#allocation6 + $0x18] sm:$0xff]
    %v84 = vld [vmem:[#allocation6 + $0x20] sm:$0xff]
    %v85 = vld [vmem:[#allocation6 + $0x28] sm:$0xff]
    %v86 = vld [vmem:[#allocation6 + $0x30] sm:$0xff]
    %v87 = vld [vmem:[#allocation6 + $0x38] sm:$0xff]
    %v88 = vld [vmem:[#allocation6 + $0x40] sm:$0xff]
    %v89 = vld [vmem:[#allocation6 + $0x48] sm:$0xff]
    %v90 = vld [vmem:[#allocation6 + $0x50] sm:$0xff]
    %v91 = vld [vmem:[#allocation6 + $0x58] sm:$0xff]
    %v92 = vld [vmem:[#allocation6 + $0x60] sm:$0xff]
    %v93 = vld [vmem:[#allocation6 + $0x68] sm:$0xff]
    %v94 = vld [vmem:[#allocation6 + $0x70] sm:$0xff]
    %v95 = vld [vmem:[#allocation6 + $0x78] sm:$0xff]
    %v96 = vld [vmem:[#allocation6 + $0x80] sm:$0xff]
    %v97 = vld [vmem:[#allocation6 + $0x88] sm:$0xff]
    %v98 = vld [vmem:[#allocation6 + $0x90] sm:$0xff]
    %v99 = vld [vmem:[#allocation6 + $0x98] sm:$0xff]
    %v100 = vld [vmem:[#allocation6 + $0xa0] sm:$0xff]
    %v101 = vld [vmem:[#allocation6 + $0xa8] sm:$0xff]
    %v102 = vld [vmem:[#allocation6 + $0xb0] sm:$0xff]
    %v103 = vld [vmem:[#allocation6 + $0xb8] sm:$0xff]
    %v104 = vld [vmem:[#allocation6 + $0xc0] sm:$0xff]
    %v105 = vld [vmem:[#allocation6 + $0xc8] sm:$0xff]
    %v106 = vld [vmem:[#allocation6 + $0xd0] sm:$0xff]
    %v107 = vld [vmem:[#allocation6 + $0xd8] sm:$0xff]
    %v108 = vld [vmem:[#allocation6 + $0xe0] sm:$0xff]
    %v109 = vld [vmem:[#allocation6 + $0xe8] sm:$0xff]
    %v110 = vld [vmem:[#allocation6 + $0xf0] sm:$0xff]
    %v111 = vld [vmem:[#allocation6 + $0xf8] sm:$0xff]
    %v116 = vunpack.c.l.b16 %v76
    %v117 = vunpack.c.h.b16 %v76
    %v118 = vunpack.c.l.b16 %v77
    %v119 = vunpack.c.h.b16 %v77
    %v120 = vunpack.c.l.b16 %v78
    %v121 = vunpack.c.h.b16 %v78
    %v122 = vunpack.c.l.b16 %v79
    %v123 = vunpack.c.h.b16 %v79
    %v124 = vpack.c.b16 %v118, %v116
    %v125 = vpack.c.b16 %v119, %v117
    %v126 = vpack.c.b16 %v122, %v120
    %v127 = vpack.c.b16 %v123, %v121
    %v164 = vunpack.c.l.b16 %v80
    %v165 = vunpack.c.h.b16 %v80
    %v166 = vunpack.c.l.b16 %v81
    %v167 = vunpack.c.h.b16 %v81
    %v168 = vunpack.c.l.b16 %v82
    %v169 = vunpack.c.h.b16 %v82
    %v170 = vunpack.c.l.b16 %v83
    %v171 = vunpack.c.h.b16 %v83
    %v172 = vunpack.c.l.b16 %v84
    %v173 = vunpack.c.h.b16 %v84
    %v174 = vunpack.c.l.b16 %v85
    %v175 = vunpack.c.h.b16 %v85
    %v176 = vunpack.c.l.b16 %v86
    %v177 = vunpack.c.h.b16 %v86
    %v178 = vunpack.c.l.b16 %v87
    %v179 = vunpack.c.h.b16 %v87
    %v180 = vunpack.c.l.b16 %v88
    %v181 = vunpack.c.h.b16 %v88
    %v182 = vunpack.c.l.b16 %v89
    %v183 = vunpack.c.h.b16 %v89
    %v184 = vunpack.c.l.b16 %v90
    %v185 = vunpack.c.h.b16 %v90
    %v186 = vunpack.c.l.b16 %v91
    %v187 = vunpack.c.h.b16 %v91
    %v188 = vunpack.c.l.b16 %v92
    %v189 = vunpack.c.h.b16 %v92
    %v190 = vunpack.c.l.b16 %v93
    %v191 = vunpack.c.h.b16 %v93
    %v192 = vunpack.c.l.b16 %v94
    %v193 = vunpack.c.h.b16 %v94
    %v194 = vunpack.c.l.b16 %v95
    %v195 = vunpack.c.h.b16 %v95
    %v196 = vunpack.c.l.b16 %v96
    %v197 = vunpack.c.h.b16 %v96
    %v198 = vunpack.c.l.b16 %v97
    %v199 = vunpack.c.h.b16 %v97
    %v200 = vunpack.c.l.b16 %v98
    %v201 = vunpack.c.h.b16 %v98
    %v202 = vunpack.c.l.b16 %v99
    %v203 = vunpack.c.h.b16 %v99
    %v204 = vunpack.c.l.b16 %v100
    %v205 = vunpack.c.h.b16 %v100
    %v206 = vunpack.c.l.b16 %v101
    %v207 = vunpack.c.h.b16 %v101
    %v208 = vunpack.c.l.b16 %v102
    %v209 = vunpack.c.h.b16 %v102
    %v210 = vunpack.c.l.b16 %v103
    %v211 = vunpack.c.h.b16 %v103
    %v212 = vunpack.c.l.b16 %v104
    %v213 = vunpack.c.h.b16 %v104
    %v214 = vunpack.c.l.b16 %v105
    %v215 = vunpack.c.h.b16 %v105
    %v216 = vunpack.c.l.b16 %v106
    %v217 = vunpack.c.h.b16 %v106
    %v218 = vunpack.c.l.b16 %v107
    %v219 = vunpack.c.h.b16 %v107
    %v220 = vunpack.c.l.b16 %v108
    %v221 = vunpack.c.h.b16 %v108
    %v222 = vunpack.c.l.b16 %v109
    %v223 = vunpack.c.h.b16 %v109
    %v224 = vunpack.c.l.b16 %v110
    %v225 = vunpack.c.h.b16 %v110
    %v226 = vunpack.c.l.b16 %v111
    %v227 = vunpack.c.h.b16 %v111
    %v228 = vpack.c.b16 %v166, %v164
    %v229 = vpack.c.b16 %v167, %v165
    %v230 = vpack.c.b16 %v170, %v168
    %v231 = vpack.c.b16 %v171, %v169
    %v232 = vpack.c.b16 %v174, %v172
    %v233 = vpack.c.b16 %v175, %v173
    %v234 = vpack.c.b16 %v178, %v176
    %v235 = vpack.c.b16 %v179, %v177
    %v236 = vpack.c.b16 %v182, %v180
    %v237 = vpack.c.b16 %v183, %v181
    %v238 = vpack.c.b16 %v186, %v184
    %v239 = vpack.c.b16 %v187, %v185
    %v240 = vpack.c.b16 %v190, %v188
    %v241 = vpack.c.b16 %v191, %v189
    %v242 = vpack.c.b16 %v194, %v192
    %v243 = vpack.c.b16 %v195, %v193
    %v244 = vpack.c.b16 %v198, %v196
    %v245 = vpack.c.b16 %v199, %v197
    %v246 = vpack.c.b16 %v202, %v200
    %v247 = vpack.c.b16 %v203, %v201
    %v248 = vpack.c.b16 %v206, %v204
    %v249 = vpack.c.b16 %v207, %v205
    %v250 = vpack.c.b16 %v210, %v208
    %v251 = vpack.c.b16 %v211, %v209
    %v252 = vpack.c.b16 %v214, %v212
    %v253 = vpack.c.b16 %v215, %v213
    %v254 = vpack.c.b16 %v218, %v216
    %v255 = vpack.c.b16 %v219, %v217
    %v256 = vpack.c.b16 %v222, %v220
    %v257 = vpack.c.b16 %v223, %v221
    %v258 = vpack.c.b16 %v226, %v224
    %v259 = vpack.c.b16 %v227, %v225
    %292 = vmatprep.subr.bf16.mxu0 %v229
    %293 = vmatpush1.bf16.msra.mxu0 %v228
    %294 = vmatprep.subr.bf16.mxu0 %v231
    %295 = vmatpush1.bf16.msra.mxu0 %v230
    %296 = vmatprep.subr.bf16.mxu0 %v233
    %297 = vmatpush1.bf16.msra.mxu0 %v232
    %298 = vmatprep.subr.bf16.mxu0 %v235
    %299 = vmatpush1.bf16.msra.mxu0 %v234
    %300 = vmatprep.subr.bf16.mxu0 %v237
    %301 = vmatpush1.bf16.msra.mxu0 %v236
    %302 = vmatprep.subr.bf16.mxu0 %v239
    %303 = vmatpush1.bf16.msra.mxu0 %v238
    %304 = vmatprep.subr.bf16.mxu0 %v241
    %305 = vmatpush1.bf16.msra.mxu0 %v240
    %306 = vmatprep.subr.bf16.mxu0 %v243
    %307 = vmatpush1.bf16.msra.mxu0 %v242
    %308 = vmatprep.subr.bf16.mxu0 %v245
    %309 = vmatpush1.bf16.msra.mxu0 %v244
    %310 = vmatprep.subr.bf16.mxu0 %v247
    %311 = vmatpush1.bf16.msra.mxu0 %v246
    %312 = vmatprep.subr.bf16.mxu0 %v249
    %313 = vmatpush1.bf16.msra.mxu0 %v248
    %314 = vmatprep.subr.bf16.mxu0 %v251
    %315 = vmatpush1.bf16.msra.mxu0 %v250
    %316 = vmatprep.subr.bf16.mxu0 %v253
    %317 = vmatpush1.bf16.msra.mxu0 %v252
    %318 = vmatprep.subr.bf16.mxu0 %v255
    %319 = vmatpush1.bf16.msra.mxu0 %v254
    %320 = vmatprep.subr.bf16.mxu0 %v257
    %321 = vmatpush1.bf16.msra.mxu0 %v256
    %322 = vmatprep.subr.bf16.mxu0 %v259
    %323 = vmatpush1.bf16.msra.mxu0 %v258
    %324 = vmatprep.mubr.bf16.mxu0 %v125
    %325 = vmatmul.mubr.bf16.gmra.mrb[0].mxu0 %v124
    %v326 = vpop.f32.mrb[0].mxu0
    %v327 = vadd.f32 0.0, %v326
    %v328 = vpop.f32.mrb[0].mxu0
    %v329 = vadd.f32 0.0, %v328
    %v330 = vpop.f32.mrb[0].mxu0
    %v331 = vadd.f32 0.0, %v330
    %v332 = vpop.f32.mrb[0].mxu0
    %v333 = vadd.f32 0.0, %v332
    %334 = vmatprep.mubr.bf16.mxu0 %v127
    %335 = vmatmul.mubr.bf16.gmra.mrb[0].mxu0 %v126
    %v336 = vpop.f32.mrb[0].mxu0
    %v337 = vadd.f32 0.0, %v336
    %v338 = vpop.f32.mrb[0].mxu0
    %v339 = vadd.f32 0.0, %v338
    %v340 = vpop.f32.mrb[0].mxu0
    %v341 = vadd.f32 0.0, %v340
    %v342 = vpop.f32.mrb[0].mxu0
    %v343 = vadd.f32 0.0, %v342
    %344 = vdwg.mxu0
    %v345 = vadd.f32 %v68, %v327
    %v346 = vadd.f32 %v69, %v329
    %v347 = vadd.f32 %v70, %v331
    %v348 = vadd.f32 %v71, %v333
    %v349 = vadd.f32 %v72, %v337
    %v350 = vadd.f32 %v73, %v339
    %v351 = vadd.f32 %v74, %v341
    %v352 = vadd.f32 %v75, %v343
    %353 = vst [vmem:[#allocation2] sm:$0xff] %v345
    %354 = vst [vmem:[#allocation2 + $0x8] sm:$0xff] %v346
    %355 = vst [vmem:[#allocation2 + $0x10] sm:$0xff] %v347
    %356 = vst [vmem:[#allocation2 + $0x18] sm:$0xff] %v348
    %357 = vst [vmem:[#allocation2 + $0x20] sm:$0xff] %v349
    %358 = vst [vmem:[#allocation2 + $0x28] sm:$0xff] %v350
    %359 = vst [vmem:[#allocation2 + $0x30] sm:$0xff] %v351
    %360 = vst [vmem:[#allocation2 + $0x38] sm:$0xff] %v352
    // Predicated region
    $region30: #{llama3_forward.11} parent=1 // pred_check
      %p361 = pneg %p56
    $region31: #{llama3_forward.11} parent=1 // pred_check_branch
      %363 = sbr.rel (%p361) target = $region33
    $region32: #{llama3_forward.11} parent=1 // pred_region
      %v364 = vld [vmem:[#allocation2] sm:$0xff]
      %v365 = vld [vmem:[#allocation2 + $0x8] sm:$0xff]
      %v366 = vld [vmem:[#allocation2 + $0x10] sm:$0xff]
      %v367 = vld [vmem:[#allocation2 + $0x18] sm:$0xff]
      %v368 = vld [vmem:[#allocation2 + $0x20] sm:$0xff]
      %v369 = vld [vmem:[#allocation2 + $0x28] sm:$0xff]
      %v370 = vld [vmem:[#allocation2 + $0x30] sm:$0xff]
      %v371 = vld [vmem:[#allocation2 + $0x38] sm:$0xff]
      %v372 = vld [vmem:[#allocation8] sm:$0xff]
      %v373 = vld [vmem:[#allocation8 + $0x8] sm:$0xff]
      %v374 = vld [vmem:[#allocation8 + $0x10] sm:$0xff]
      %v375 = vld [vmem:[#allocation8 + $0x18] sm:$0xff]
      %v376 = vunpack.c.l.bf16 %v372
      %v377 = vunpack.c.h.bf16 %v372
      %v378 = vunpack.c.l.bf16 %v373
      %v379 = vunpack.c.h.bf16 %v373
      %v380 = vunpack.c.l.bf16 %v374
      %v381 = vunpack.c.h.bf16 %v374
      %v382 = vunpack.c.l.bf16 %v375
      %v383 = vunpack.c.h.bf16 %v375
      %v384 = vadd.f32 %v364, %v376
      %v385 = vadd.f32 %v365, %v377
      %v386 = vadd.f32 %v366, %v378
      %v387 = vadd.f32 %v367, %v379
      %v388 = vadd.f32 %v368, %v380
      %v389 = vadd.f32 %v369, %v381
      %v390 = vadd.f32 %v370, %v382
      %v391 = vadd.f32 %v371, %v383
      %v392 = vpack.c.bf16 %v386, %v384
      %v393 = vpack.c.bf16 %v387, %v385
      %v394 = vpack.c.bf16 %v390, %v388
      %v395 = vpack.c.bf16 %v391, %v389
      %v400 = vunpack.c.l.b16 %v392
      %v401 = vunpack.c.l.b16 %v393
      %v402 = vunpack.c.h.b16 %v392
      %v403 = vunpack.c.h.b16 %v393
      %v404 = vunpack.c.l.b16 %v394
      %v405 = vunpack.c.l.b16 %v395
      %v406 = vunpack.c.h.b16 %v394
      %v407 = vunpack.c.h.b16 %v395
      %v408 = vpack.c.b16 %v401, %v400
      %v409 = vpack.c.b16 %v403, %v402
      %v410 = vpack.c.b16 %v405, %v404
      %v411 = vpack.c.b16 %v407, %v406
      %416 = vst [vmem:[#allocation9] sm:$0xff] %v408
      %417 = vst [vmem:[#allocation9 + $0x8] sm:$0xff] %v409
      %418 = vst [vmem:[#allocation9 + $0x10] sm:$0xff] %v410
      %419 = vst [vmem:[#allocation9 + $0x18] sm:$0xff] %v411
    $region33: #{llama3_forward.11} parent=1 // pred_fallthru
      _
    // Predicated region
    $region34: #{llama3_forward.11} parent=1 // pred_check
      _
    $region35: #{llama3_forward.11} parent=1 // pred_check_branch
      %421 = sbr.rel (0) target = $region37
    $region36: #{llama3_forward.11} parent=1 // pred_region
      %s423 = ssub.s32 512, 512
      %424 = vsyncadd [#allocation5], %s423
      %s425 = sshll.u32 [#allocation9], 4
      %s426 = int_to_ptr.vmem [resolvable:$true] %s425
      %431 = dma.vmem_to_hbm [thread:$0]  %s426, 512, %s3, [#allocation5], 128, 128, 8
    $region37: #{llama3_forward.11} parent=1 // pred_fallthru
      _
    // Predicated region
    $region38: #{llama3_forward.11} parent=1 // pred_check
      _
    $region39: #{llama3_forward.11} parent=1 // pred_check_branch
      %433 = sbr.rel (0) target = $region41
    $region40: #{llama3_forward.11} parent=1 // pred_region
      %434 = dma.done [#allocation5], 512
    $region41: #{llama3_forward.11} parent=1 // pred_fallthru
      _
    %435 = vsyncpa [#allocation4], 1
    %436 = vsyncpa [#allocation7], 1
    %437 = vsyncpa [#allocation5], 1

// kernel: llama3_forward.10
$region0: #{llama3_forward.10}
  #allocation0 [shape = 'u32[]', space=smem, size = 0x4, offset = 0x4, fixed_abs, tag = 'smem constant byte address 0x4 - core index']
  #allocation1 [shape = 'u32[144,128]{1,0:T(1,128)}', space=vmem, size = 0x12000, scoped, tag = 'internal scratch']
  #allocation2 [shape = 'bf16[32,128]{1,0:T(16,128)(2,1)}', space=vmem, size = 0x2000, scoped, tag = 'scratch operand']
  #allocation3 [shape = 'f32[32,1]{1,0:T(8,128)}', space=vmem, size = 0x4000, scoped, tag = 'scratch operand']
  #allocation4 [shape = 'f32[32,1]{1,0:T(8,128)}', space=vmem, size = 0x4000, scoped, tag = 'scratch operand']
  #allocation5 [shape = 'f32[32,128]{1,0:T(8,128)}', space=vmem, size = 0x4000, scoped, tag = 'scratch operand']
  %s0 = inlined_call_operand.hbm [shape: bf16[2,2,16,128], index: 0, kind: input, shape index: {}]
  %s1 = inlined_call_operand.hbm [shape: bf16[2,1,16,128], index: 1, kind: input, shape index: {}]
  %s2 = inlined_call_operand.hbm [shape: bf16[2,1,16,128], index: 2, kind: input, shape index: {}]
  %s3 = inlined_call_operand.hbm [shape: f32[16,128], index: 3, kind: input, shape index: {}, may-alias: {3,5}]
  %s4 = inlined_call_operand.hbm [shape: f32[16,128], index: 4, kind: input, shape index: {}, may-alias: {4,6}]
  %s5 = inlined_call_operand.hbm [shape: f32[16,128], index: 5, kind: input, shape index: {}, may-alias: {3,5}]
  %s6 = inlined_call_operand.hbm [shape: f32[16,128], index: 6, kind: input, shape index: {}, may-alias: {4,6}]
  %s7 = inlined_call_operand.hbm [shape: bf16[2,2,16,128], index: 7, kind: output, shape index: {}]
  %s8 = sld [smem:[#allocation0]]
  $region101: #{llama3_forward.10} parent=0
    _
  %s10 = ssub.s32 1, %s8
  %s11 = scalar_select 0, %s10, %s8
  $region1: #{llama3_forward.10} parent=0
    #allocation6 [shape = 'u8[16384]{0}', space=vmem, size = 0x4000, scoped, tag = 'input window, operand 0']
    #allocation7 [shape = 's32[2]{0}', space=sflag, size = 0x8, scoped, tag = 'scoped memory for llama3_forward.10']
    #allocation8 [shape = 's32[2]{0}', space=sflag, size = 0x8, scoped, tag = 'scoped memory for llama3_forward.10']
    #allocation9 [shape = 'u8[8192]{0}', space=vmem, size = 0x2000, scoped, tag = 'input window, operand 1']
    #allocation10 [shape = 's32[2]{0}', space=sflag, size = 0x8, scoped, tag = 'scoped memory for llama3_forward.10']
    #allocation11 [shape = 'u8[8192]{0}', space=vmem, size = 0x2000, scoped, tag = 'input window, operand 2']
    #allocation12 [shape = 'u8[8192]{0}', space=vmem, size = 0x2000, scoped, tag = 'input window, operand 3, single buffered']
    #allocation13 [shape = 's32[1]{0}', space=sflag, size = 0x4, scoped, tag = 'scoped memory for llama3_forward.10']
    #allocation14 [shape = 'u8[8192]{0}', space=vmem, size = 0x2000, scoped, tag = 'input window, operand 4, single buffered']
    #allocation15 [shape = 'u8[8192]{0}', space=vmem, size = 0x2000, scoped, tag = 'input window, operand 5, single buffered']
    #allocation16 [shape = 's32[1]{0}', space=sflag, size = 0x4, scoped, tag = 'scoped memory for llama3_forward.10']
    #allocation17 [shape = 'u8[8192]{0}', space=vmem, size = 0x2000, scoped, tag = 'input window, operand 6, single buffered']
    #allocation18 [shape = 'u8[16384]{0}', space=vmem, size = 0x4000, scoped, tag = 'output window, operand 0']
    %12 = vsyncpa [#allocation7], 0
    %s13 = scalar_lea.sflag [#allocation7], 1
    %14 = vsyncpa %s13, 0
    %15 = vsyncpa [#allocation10], 0
    %s16 = scalar_lea.sflag [#allocation10], 1
    %17 = vsyncpa %s16, 0
    %18 = vsyncpa [#allocation13], 0
    %19 = vsyncpa [#allocation16], 0
    %20 = vsyncpa [#allocation8], 0
    %s21 = scalar_lea.sflag [#allocation8], 1
    %22 = vsyncpa %s21, 0
    loop: start=0, step=1, limit=4
    $region2: #{llama3_forward.10} parent=1 // loop_pre_header
      _
    $region3: #{llama3_forward.10} parent=1 // loop_header
      %s24 = sphi 0, %s28
      %p25 = scmp.ge.s32.totalorder %s24, 4
      %s31 = sphi 0, %s57
      %s32 = sphi 0, %s53
      %s33 = sphi 0, %s49
      %s34 = sphi 0, %s45
      %s35 = sphi 0, %s31
      %s36 = sphi 0, %s32
      %s37 = sphi 0, %s33
      %s38 = sphi 0, %s34
      %s39 = sphi 0, %s35
      %s40 = sphi 0, %s36
      %s41 = sphi 0, %s37
      %s42 = sphi 0, %s38
      %s64 = sphi 0, %s66
      %s67 = sphi 0, %s64
      %s68 = sphi 0, %s67
      %s84 = sphi 0, %s68
      %s94 = sphi 0, %s96
      %s97 = sphi 0, %s94
      %s98 = sphi 0, %s97
      %s114 = sphi 0, %s98
      %s124 = sphi 0, %s126
      %s127 = sphi 0, %s124
      %s128 = sphi 0, %s127
      %s144 = sphi 0, %s128
      %s150 = sphi 0, %s152
      %s153 = sphi 0, %s150
      %s154 = sphi 0, %s153
      %s170 = sphi 0, %s154
      %s176 = sphi 0, %s178
      %s179 = sphi 0, %s176
      %s180 = sphi 0, %s179
      %s196 = sphi 0, %s180
      %s202 = sphi 0, %s204
      %s205 = sphi 0, %s202
      %s206 = sphi 0, %s205
      %s222 = sphi 0, %s206
      %s228 = sphi 0, %s230
      %s231 = sphi 0, %s228
      %s232 = sphi 0, %s231
      %s248 = sphi 0, %s232
      %s258 = sphi 0, %s260
      %s261 = sphi 0, %s258
      %s262 = sphi 0, %s261
      %s278 = sphi 0, %s262
    $region4: #{llama3_forward.10} parent=1 // loop_header_branch
      %27 = sbr.rel (%p25) target = $region8
    $region5: #{llama3_forward.10} parent=1 // loop_body
      %s29 = ssub.s32 %s24, 1
      %s30 = ssub.s32 %s24, 2
      %s43 = sadd.s32 1, %s34
      %p44 = scmp.ge.s32.totalorder %s43, 1
      %s45 = scalar_select %p44, 0, %s43
      %s46 = sadd.s32 1, %s33
      %s47 = scalar_select %p44, %s46, %s33
      %p48 = scmp.ge.s32.totalorder %s47, 1
      %s49 = scalar_select %p48, 0, %s47
      %s50 = sadd.s32 1, %s32
      %s51 = scalar_select %p48, %s50, %s32
      %p52 = scmp.ge.s32.totalorder %s51, 1
      %s53 = scalar_select %p52, 0, %s51
      %s54 = sadd.s32 1, %s31
      %s55 = scalar_select %p52, %s54, %s31
      %p56 = scmp.ge.s32.totalorder %s55, 2
      %s57 = scalar_select %p56, 0, %s55
      %s58 = ssub.s32 %s31, %s57
      %s59 = ssub.s32 %s32, %s53
      %s60 = sor.u32 %s58, %s59
      %s61 = ssub.s32 %s33, %s49
      %s62 = sor.u32 %s60, %s61
      %p63 = scmp.eq.s32.totalorder %s62, 0
      %s65 = sadd.s32 %s64, 1
      %s66 = scalar_select %p63, %s64, %s65
      %p69 = pneg %p63
      %p70 = scmp.eq.s32.totalorder %s24, 1
      %p71 = por %p69, %p70
      %p72 = scmp.ne.s32.totalorder %s64, %s67
      %p73 = scmp.eq.s32.totalorder %s24, 0
      %p74 = por %p72, %p73
      %p75 = scmp.ne.s32.totalorder %s64, %s67
      %p76 = scmp.eq.s32.totalorder %s29, 1
      %p77 = por %p75, %p76
      %p78 = scmp.ne.s32.totalorder %s67, %s68
      %p79 = scmp.eq.s32.totalorder %s29, 0
      %p80 = por %p78, %p79
      %p81 = scmp.ne.s32.totalorder %s67, %s68
      %p82 = scmp.eq.s32.totalorder %s30, 1
      %p83 = por %p81, %p82
      %p85 = scmp.ne.s32.totalorder %s68, %s84
      %p86 = scmp.eq.s32.totalorder %s30, 0
      %p87 = por %p85, %p86
      %s88 = ssub.s32 %s31, %s57
      %s89 = ssub.s32 %s32, %s53
      %s90 = sor.u32 %s88, %s89
      %s91 = ssub.s32 %s34, %s45
      %s92 = sor.u32 %s90, %s91
      %p93 = scmp.eq.s32.totalorder %s92, 0
      %s95 = sadd.s32 %s94, 1
      %s96 = scalar_select %p93, %s94, %s95
      %p99 = pneg %p93
      %p100 = scmp.eq.s32.totalorder %s24, 1
      %p101 = por %p99, %p100
      %p102 = scmp.ne.s32.totalorder %s94, %s97
      %p103 = scmp.eq.s32.totalorder %s24, 0
      %p104 = por %p102, %p103
      %p105 = scmp.ne.s32.totalorder %s94, %s97
      %p106 = scmp.eq.s32.totalorder %s29, 1
      %p107 = por %p105, %p106
      %p108 = scmp.ne.s32.totalorder %s97, %s98
      %p109 = scmp.eq.s32.totalorder %s29, 0
      %p110 = por %p108, %p109
      %p111 = scmp.ne.s32.totalorder %s97, %s98
      %p112 = scmp.eq.s32.totalorder %s30, 1
      %p113 = por %p111, %p112
      %p115 = scmp.ne.s32.totalorder %s98, %s114
      %p116 = scmp.eq.s32.totalorder %s30, 0
      %p117 = por %p115, %p116
      %s118 = ssub.s32 %s31, %s57
      %s119 = ssub.s32 %s32, %s53
      %s120 = sor.u32 %s118, %s119
      %s121 = ssub.s32 %s34, %s45
      %s122 = sor.u32 %s120, %s121
      %p123 = scmp.eq.s32.totalorder %s122, 0
      %s125 = sadd.s32 %s124, 1
      %s126 = scalar_select %p123, %s124, %s125
      %p129 = pneg %p123
      %p130 = scmp.eq.s32.totalorder %s24, 1
      %p131 = por %p129, %p130
      %p132 = scmp.ne.s32.totalorder %s124, %s127
      %p133 = scmp.eq.s32.totalorder %s24, 0
      %p134 = por %p132, %p133
      %p135 = scmp.ne.s32.totalorder %s124, %s127
      %p136 = scmp.eq.s32.totalorder %s29, 1
      %p137 = por %p135, %p136
      %p138 = scmp.ne.s32.totalorder %s127, %s128
      %p139 = scmp.eq.s32.totalorder %s29, 0
      %p140 = por %p138, %p139
      %p141 = scmp.ne.s32.totalorder %s127, %s128
      %p142 = scmp.eq.s32.totalorder %s30, 1
      %p143 = por %p141, %p142
      %p145 = scmp.ne.s32.totalorder %s128, %s144
      %p146 = scmp.eq.s32.totalorder %s30, 0
      %p147 = por %p145, %p146
      %s148 = ssub.s32 %s33, %s49
      %p149 = scmp.eq.s32.totalorder %s148, 0
      %s151 = sadd.s32 %s150, 1
      %s152 = scalar_select %p149, %s150, %s151
      %p155 = pneg %p149
      %p156 = scmp.eq.s32.totalorder %s24, 1
      %p157 = por %p155, %p156
      %p158 = scmp.ne.s32.totalorder %s150, %s153
      %p159 = scmp.eq.s32.totalorder %s24, 0
      %p160 = por %p158, %p159
      %p161 = scmp.ne.s32.totalorder %s150, %s153
      %p162 = scmp.eq.s32.totalorder %s29, 1
      %p163 = por %p161, %p162
      %p164 = scmp.ne.s32.totalorder %s153, %s154
      %p165 = scmp.eq.s32.totalorder %s29, 0
      %p166 = por %p164, %p165
      %p167 = scmp.ne.s32.totalorder %s153, %s154
      %p168 = scmp.eq.s32.totalorder %s30, 1
      %p169 = por %p167, %p168
      %p171 = scmp.ne.s32.totalorder %s154, %s170
      %p172 = scmp.eq.s32.totalorder %s30, 0
      %p173 = por %p171, %p172
      %s174 = ssub.s32 %s33, %s49
      %p175 = scmp.eq.s32.totalorder %s174, 0
      %s177 = sadd.s32 %s176, 1
      %s178 = scalar_select %p175, %s176, %s177
      %p181 = pneg %p175
      %p182 = scmp.eq.s32.totalorder %s24, 1
      %p183 = por %p181, %p182
      %p184 = scmp.ne.s32.totalorder %s176, %s179
      %p185 = scmp.eq.s32.totalorder %s24, 0
      %p186 = por %p184, %p185
      %p187 = scmp.ne.s32.totalorder %s176, %s179
      %p188 = scmp.eq.s32.totalorder %s29, 1
      %p189 = por %p187, %p188
      %p190 = scmp.ne.s32.totalorder %s179, %s180
      %p191 = scmp.eq.s32.totalorder %s29, 0
      %p192 = por %p190, %p191
      %p193 = scmp.ne.s32.totalorder %s179, %s180
      %p194 = scmp.eq.s32.totalorder %s30, 1
      %p195 = por %p193, %p194
      %p197 = scmp.ne.s32.totalorder %s180, %s196
      %p198 = scmp.eq.s32.totalorder %s30, 0
      %p199 = por %p197, %p198
      %s200 = ssub.s32 %s34, %s45
      %p201 = scmp.eq.s32.totalorder %s200, 0
      %s203 = sadd.s32 %s202, 1
      %s204 = scalar_select %p201, %s202, %s203
      %p207 = pneg %p201
      %p208 = scmp.eq.s32.totalorder %s24, 1
      %p209 = por %p207, %p208
      %p210 = scmp.ne.s32.totalorder %s202, %s205
      %p211 = scmp.eq.s32.totalorder %s24, 0
      %p212 = por %p210, %p211
      %p213 = scmp.ne.s32.totalorder %s202, %s205
      %p214 = scmp.eq.s32.totalorder %s29, 1
      %p215 = por %p213, %p214
      %p216 = scmp.ne.s32.totalorder %s205, %s206
      %p217 = scmp.eq.s32.totalorder %s29, 0
      %p218 = por %p216, %p217
      %p219 = scmp.ne.s32.totalorder %s205, %s206
      %p220 = scmp.eq.s32.totalorder %s30, 1
      %p221 = por %p219, %p220
      %p223 = scmp.ne.s32.totalorder %s206, %s222
      %p224 = scmp.eq.s32.totalorder %s30, 0
      %p225 = por %p223, %p224
      %s226 = ssub.s32 %s34, %s45
      %p227 = scmp.eq.s32.totalorder %s226, 0
      %s229 = sadd.s32 %s228, 1
      %s230 = scalar_select %p227, %s228, %s229
      %p233 = pneg %p227
      %p234 = scmp.eq.s32.totalorder %s24, 1
      %p235 = por %p233, %p234
      %p236 = scmp.ne.s32.totalorder %s228, %s231
      %p237 = scmp.eq.s32.totalorder %s24, 0
      %p238 = por %p236, %p237
      %p239 = scmp.ne.s32.totalorder %s228, %s231
      %p240 = scmp.eq.s32.totalorder %s29, 1
      %p241 = por %p239, %p240
      %p242 = scmp.ne.s32.totalorder %s231, %s232
      %p243 = scmp.eq.s32.totalorder %s29, 0
      %p244 = por %p242, %p243
      %p245 = scmp.ne.s32.totalorder %s231, %s232
      %p246 = scmp.eq.s32.totalorder %s30, 1
      %p247 = por %p245, %p246
      %p249 = scmp.ne.s32.totalorder %s232, %s248
      %p250 = scmp.eq.s32.totalorder %s30, 0
      %p251 = por %p249, %p250
      %s252 = ssub.s32 %s31, %s57
      %s253 = ssub.s32 %s32, %s53
      %s254 = sor.u32 %s252, %s253
      %s255 = ssub.s32 %s33, %s49
      %s256 = sor.u32 %s254, %s255
      %p257 = scmp.eq.s32.totalorder %s256, 0
      %s259 = sadd.s32 %s258, 1
      %s260 = scalar_select %p257, %s258, %s259
      %p263 = pneg %p257
      %p264 = scmp.eq.s32.totalorder %s24, 1
      %p265 = por %p263, %p264
      %p266 = scmp.ne.s32.totalorder %s258, %s261
      %p267 = scmp.eq.s32.totalorder %s24, 0
      %p268 = por %p266, %p267
      %p269 = scmp.ne.s32.totalorder %s258, %s261
      %p270 = scmp.eq.s32.totalorder %s29, 1
      %p271 = por %p269, %p270
      %p272 = scmp.ne.s32.totalorder %s261, %s262
      %p273 = scmp.eq.s32.totalorder %s29, 0
      %p274 = por %p272, %p273
      %p275 = scmp.ne.s32.totalorder %s261, %s262
      %p276 = scmp.eq.s32.totalorder %s30, 1
      %p277 = por %p275, %p276
      %p279 = scmp.ne.s32.totalorder %s262, %s278
      %p280 = scmp.eq.s32.totalorder %s30, 0
      %p281 = por %p279, %p280
      %p282 = scmp.le.s32.totalorder 1, %s24
      %p283 = scmp.lt.s32.totalorder %s24, 3
      %p284 = pnand %p282, %p283
      %p285 = pneg %p284
      // Predicated region
      $region9: #{llama3_forward.10} parent=5 // pred_check
        _
      $region10: #{llama3_forward.10} parent=5 // pred_check_branch
        %287 = sbr.rel (%p284) target = $region12
      $region11: #{llama3_forward.10} parent=5 // pred_region
        %s288 = ssub.s32 %s24, 1
        // Predicated region
        $region13: #{llama3_forward.10} parent=11 // pred_check
          %p289 = pneg %p166
        $region14: #{llama3_forward.10} parent=11 // pred_check_branch
          %291 = sbr.rel (%p289) target = $region16
        $region15: #{llama3_forward.10} parent=11 // pred_region
          %s292 = smul.u32 2, %s37
          %s294 = ssub.s32 256, 256
          %295 = vsyncadd [#allocation13], %s294
          %s296 = smul.addr %s292, 128
          %s297 = scalar_lea.hbm %s3, %s296
          %s298 = sshll.u32 [#allocation12], 4
          %s299 = int_to_ptr.vmem [resolvable:$true] %s298
          %304 = dma.hbm_to_vmem [thread:$0]  %s297, 256, %s299, [#allocation13], 128, 128, 8
        $region16: #{llama3_forward.10} parent=11 // pred_fallthru
          _
        // Predicated region
        $region17: #{llama3_forward.10} parent=11 // pred_check
          %p305 = pneg %p192
        $region18: #{llama3_forward.10} parent=11 // pred_check_branch
          %307 = sbr.rel (%p305) target = $region20
        $region19: #{llama3_forward.10} parent=11 // pred_region
          %s308 = smul.u32 2, %s37
          %s310 = ssub.s32 256, 256
          %311 = vsyncadd [#allocation13], %s310
          %s312 = smul.addr %s308, 128
          %s313 = scalar_lea.hbm %s4, %s312
          %s314 = sshll.u32 [#allocation14], 4
          %s315 = int_to_ptr.vmem [resolvable:$true] %s314
          %320 = dma.hbm_to_vmem [thread:$0]  %s313, 256, %s315, [#allocation13], 128, 128, 8
        $region20: #{llama3_forward.10} parent=11 // pred_fallthru
          _
        // Predicated region
        $region21: #{llama3_forward.10} parent=11 // pred_check
          %p321 = pneg %p218
        $region22: #{llama3_forward.10} parent=11 // pred_check_branch
          %323 = sbr.rel (%p321) target = $region24
        $region23: #{llama3_forward.10} parent=11 // pred_region
          %s324 = smul.u32 2, %s38
          %s326 = ssub.s32 256, 256
          %327 = vsyncadd [#allocation16], %s326
          %s328 = smul.addr %s324, 128
          %s329 = scalar_lea.hbm %s5, %s328
          %s330 = sshll.u32 [#allocation15], 4
          %s331 = int_to_ptr.vmem [resolvable:$true] %s330
          %336 = dma.hbm_to_vmem [thread:$0]  %s329, 256, %s331, [#allocation16], 128, 128, 8
        $region24: #{llama3_forward.10} parent=11 // pred_fallthru
          _
        // Predicated region
        $region25: #{llama3_forward.10} parent=11 // pred_check
          %p337 = pneg %p244
        $region26: #{llama3_forward.10} parent=11 // pred_check_branch
          %339 = sbr.rel (%p337) target = $region28
        $region27: #{llama3_forward.10} parent=11 // pred_region
          %s340 = smul.u32 2, %s38
          %s342 = ssub.s32 256, 256
          %343 = vsyncadd [#allocation16], %s342
          %s344 = smul.addr %s340, 128
          %s345 = scalar_lea.hbm %s6, %s344
          %s346 = sshll.u32 [#allocation17], 4
          %s347 = int_to_ptr.vmem [resolvable:$true] %s346
          %352 = dma.hbm_to_vmem [thread:$0]  %s345, 256, %s347, [#allocation16], 128, 128, 8
        $region28: #{llama3_forward.10} parent=11 // pred_fallthru
          _
      $region12: #{llama3_forward.10} parent=5 // pred_fallthru
        _
      %p353 = scmp.lt.s32.totalorder %s24, 2
      // Predicated region
      $region29: #{llama3_forward.10} parent=5 // pred_check
        %p354 = pneg %p353
      $region30: #{llama3_forward.10} parent=5 // pred_check_branch
        %356 = sbr.rel (%p354) target = $region32
      $region31: #{llama3_forward.10} parent=5 // pred_region
        // Predicated region
        $region33: #{llama3_forward.10} parent=31 // pred_check
          %p357 = pneg %p74
        $region34: #{llama3_forward.10} parent=31 // pred_check_branch
          %359 = sbr.rel (%p357) target = $region36
        $region35: #{llama3_forward.10} parent=31 // pred_region
          %s360 = sand.u32 %s64, 1
          %s361 = scalar_lea.sflag [#allocation7], %s360
          %s362 = sand.u32 %s64, 1
          %s363 = smul.addr %s362, 16
          %s364 = scalar_lea.vmem [#allocation6], %s363
          %s365 = smul.u32 2, %s32
          %s366 = smul.u32 2, %s33
          %s368 = ssub.s32 256, 256
          %369 = vsyncadd %s361, %s368
          %s370 = smul.addr %s365, 2
          %s371 = sadd.s32 %s366, %s370
          %s372 = smul.addr %s31, 4
          %s373 = sadd.s32 %s371, %s372
          %s374 = smul.addr %s373, 64
          %s375 = scalar_lea.hbm %s0, %s374
          %s376 = sshll.u32 %s364, 4
          %s377 = int_to_ptr.vmem [resolvable:$true] %s376
          %382 = dma.hbm_to_vmem [thread:$0]  %s375, 256, %s377, %s361, 64, 64, 4
        $region36: #{llama3_forward.10} parent=31 // pred_fallthru
          _
        // Predicated region
        $region37: #{llama3_forward.10} parent=31 // pred_check
          %p383 = pneg %p104
        $region38: #{llama3_forward.10} parent=31 // pred_check_branch
          %385 = sbr.rel (%p383) target = $region40
        $region39: #{llama3_forward.10} parent=31 // pred_region
          %s386 = sand.u32 %s24, 1
          %s387 = scalar_lea.sflag [#allocation10], %s386
          %s388 = sand.u32 %s94, 1
          %s389 = smul.addr %s388, 8
          %s390 = scalar_lea.vmem [#allocation9], %s389
          %s391 = smul.u32 2, %s34
          %s393 = ssub.s32 128, 128
          %394 = vsyncadd %s387, %s393
          %s395 = smul.addr %s32, 2
          %s396 = sadd.s32 %s391, %s395
          %s397 = smul.addr %s31, 2
          %s398 = sadd.s32 %s396, %s397
          %s399 = smul.addr %s398, 64
          %s400 = scalar_lea.hbm %s1, %s399
          %s401 = sshll.u32 %s390, 4
          %s402 = int_to_ptr.vmem [resolvable:$true] %s401
          %407 = dma.hbm_to_vmem [thread:$0]  %s400, 128, %s402, %s387, 64, 64, 4
        $region40: #{llama3_forward.10} parent=31 // pred_fallthru
          _
        // Predicated region
        $region41: #{llama3_forward.10} parent=31 // pred_check
          %p408 = pneg %p134
        $region42: #{llama3_forward.10} parent=31 // pred_check_branch
          %410 = sbr.rel (%p408) target = $region44
        $region43: #{llama3_forward.10} parent=31 // pred_region
          %s411 = sand.u32 %s24, 1
          %s412 = scalar_lea.sflag [#allocation10], %s411
          %s413 = sand.u32 %s124, 1
          %s414 = smul.addr %s413, 8
          %s415 = scalar_lea.vmem [#allocation11], %s414
          %s416 = smul.u32 2, %s34
          %s418 = ssub.s32 128, 128
          %419 = vsyncadd %s412, %s418
          %s420 = smul.addr %s32, 2
          %s421 = sadd.s32 %s416, %s420
          %s422 = smul.addr %s31, 2
          %s423 = sadd.s32 %s421, %s422
          %s424 = smul.addr %s423, 64
          %s425 = scalar_lea.hbm %s2, %s424
          %s426 = sshll.u32 %s415, 4
          %s427 = int_to_ptr.vmem [resolvable:$true] %s426
          %432 = dma.hbm_to_vmem [thread:$0]  %s425, 128, %s427, %s412, 64, 64, 4
        $region44: #{llama3_forward.10} parent=31 // pred_fallthru
          _
      $region32: #{llama3_forward.10} parent=5 // pred_fallthru
        _
      %p433 = scmp.le.s32.totalorder 1, %s24
      %p434 = scmp.lt.s32.totalorder %s24, 3
      %p435 = pnand %p433, %p434
      %p436 = pneg %p435
      // Predicated region
      $region45: #{llama3_forward.10} parent=5 // pred_check
        _
      $region46: #{llama3_forward.10} parent=5 // pred_check_branch
        %438 = sbr.rel (%p435) target = $region48
      $region47: #{llama3_forward.10} parent=5 // pred_region
        %s439 = ssub.s32 %s24, 1
        %s440 = sand.u32 %s67, 1
        %s441 = scalar_lea.sflag [#allocation7], %s440
        %s442 = sand.u32 %s67, 1
        %s443 = smul.addr %s442, 16
        %s444 = scalar_lea.vmem [#allocation6], %s443
        // Predicated region
        $region49: #{llama3_forward.10} parent=47 // pred_check
          %p445 = pneg %p80
        $region50: #{llama3_forward.10} parent=47 // pred_check_branch
          %447 = sbr.rel (%p445) target = $region52
        $region51: #{llama3_forward.10} parent=47 // pred_region
          %448 = dma.done %s441, 256
        $region52: #{llama3_forward.10} parent=47 // pred_fallthru
          _
        %s449 = sand.u32 %s29, 1
        %s450 = scalar_lea.sflag [#allocation10], %s449
        %s451 = sand.u32 %s97, 1
        %s452 = smul.addr %s451, 8
        %s453 = scalar_lea.vmem [#allocation9], %s452
        // Predicated region
        $region53: #{llama3_forward.10} parent=47 // pred_check
          %p454 = pneg %p110
        $region54: #{llama3_forward.10} parent=47 // pred_check_branch
          %456 = sbr.rel (%p454) target = $region56
        $region55: #{llama3_forward.10} parent=47 // pred_region
          %457 = dma.done %s450, 128
        $region56: #{llama3_forward.10} parent=47 // pred_fallthru
          _
        %s458 = sand.u32 %s29, 1
        %s459 = scalar_lea.sflag [#allocation10], %s458
        %s460 = sand.u32 %s127, 1
        %s461 = smul.addr %s460, 8
        %s462 = scalar_lea.vmem [#allocation11], %s461
        // Predicated region
        $region57: #{llama3_forward.10} parent=47 // pred_check
          %p463 = pneg %p140
        $region58: #{llama3_forward.10} parent=47 // pred_check_branch
          %465 = sbr.rel (%p463) target = $region60
        $region59: #{llama3_forward.10} parent=47 // pred_region
          %466 = dma.done %s459, 128
        $region60: #{llama3_forward.10} parent=47 // pred_fallthru
          _
        // Predicated region
        $region61: #{llama3_forward.10} parent=47 // pred_check
          %p467 = pneg %p166
        $region62: #{llama3_forward.10} parent=47 // pred_check_branch
          %469 = sbr.rel (%p467) target = $region64
        $region63: #{llama3_forward.10} parent=47 // pred_region
          %470 = dma.done [#allocation13], 256
        $region64: #{llama3_forward.10} parent=47 // pred_fallthru
          _
        // Predicated region
        $region65: #{llama3_forward.10} parent=47 // pred_check
          %p471 = pneg %p192
        $region66: #{llama3_forward.10} parent=47 // pred_check_branch
          %473 = sbr.rel (%p471) target = $region68
        $region67: #{llama3_forward.10} parent=47 // pred_region
          %474 = dma.done [#allocation13], 256
        $region68: #{llama3_forward.10} parent=47 // pred_fallthru
          _
        // Predicated region
        $region69: #{llama3_forward.10} parent=47 // pred_check
          %p475 = pneg %p218
        $region70: #{llama3_forward.10} parent=47 // pred_check_branch
          %477 = sbr.rel (%p475) target = $region72
        $region71: #{llama3_forward.10} parent=47 // pred_region
          %478 = dma.done [#allocation16], 256
        $region72: #{llama3_forward.10} parent=47 // pred_fallthru
          _
        // Predicated region
        $region73: #{llama3_forward.10} parent=47 // pred_check
          %p479 = pneg %p244
        $region74: #{llama3_forward.10} parent=47 // pred_check_branch
          %481 = sbr.rel (%p479) target = $region76
        $region75: #{llama3_forward.10} parent=47 // pred_region
          %482 = dma.done [#allocation16], 256
        $region76: #{llama3_forward.10} parent=47 // pred_fallthru
          _
        %s483 = sand.u32 %s67, 1
        %s484 = scalar_lea.sflag [#allocation7], %s483
        %s485 = sand.u32 %s67, 1
        %s486 = smul.addr %s485, 16
        %s487 = scalar_lea.vmem [#allocation6], %s486
        %p488 = pneg %p80
        %p489 = pneg %p77
        %s490 = sand.u32 %s29, 1
        %s491 = scalar_lea.sflag [#allocation10], %s490
        %s492 = sand.u32 %s97, 1
        %s493 = smul.addr %s492, 8
        %s494 = scalar_lea.vmem [#allocation9], %s493
        %p495 = pneg %p110
        %p496 = pneg %p107
        %s497 = sand.u32 %s29, 1
        %s498 = scalar_lea.sflag [#allocation10], %s497
        %s499 = sand.u32 %s127, 1
        %s500 = smul.addr %s499, 8
        %s501 = scalar_lea.vmem [#allocation11], %s500
        %p502 = pneg %p140
        %p503 = pneg %p137
        %p504 = pneg %p166
        %p505 = pneg %p163
        %p506 = pneg %p192
        %p507 = pneg %p189
        %p508 = pneg %p218
        %p509 = pneg %p215
        %p510 = pneg %p244
        %p511 = pneg %p241
        %p512 = pneg %p274
        %p513 = pneg %p271
        %s514 = sand.u32 %s261, 1
        %s515 = scalar_lea.sflag [#allocation8], %s514
        %s516 = sand.u32 %s261, 1
        %s517 = smul.addr %s516, 16
        %s518 = scalar_lea.vmem [#allocation18], %s517
        %s519 = smul.u32 2, %s36
        %s520 = smul.u32 2, %s37
        %s521 = smul.u32 2, %s38
        %s522 = smul.u32 2, %s38
        %s523 = smul.u32 2, %s37
        %s524 = smul.u32 2, %s37
        %s525 = smul.u32 2, %s38
        %s526 = smul.u32 2, %s38
        %s527 = smul.u32 2, %s36
        %s528 = smul.u32 2, %s37
        %s530 = smul.u32 %s37, 16
        %s531 = smul.u32 %s38, 16
        %v532 = vlaneseq
        %v533 = vand.u32 %v532, 127
        %vm534 = vcmp.lt.s32.totalorder %v533, 64
        %v535 = vsel %vm534, -1.0, 1.0
        %p536 = scmp.eq.s32.totalorder %s38, 0
        // Predicated region
        $region77: #{llama3_forward.10} parent=47 // pred_check
          %p537 = pneg %p536
        $region78: #{llama3_forward.10} parent=47 // pred_check_branch
          %539 = sbr.rel (%p537) target = $region80
        $region79: #{llama3_forward.10} parent=47 // pred_region
          %vm540 = vcmask 7168
          %541 = vst.msk [vmem:[#allocation3] sm:$0xff] %vm540, -inf
          %542 = vst.msk [vmem:[#allocation3 + $0x8] sm:$0xff] %vm540, -inf
          %543 = vst.msk [vmem:[#allocation3 + $0x10] sm:$0xff] %vm540, -inf
          %544 = vst.msk [vmem:[#allocation3 + $0x18] sm:$0xff] %vm540, -inf
          %545 = vst.msk [vmem:[#allocation4] sm:$0xff] %vm540, 0.0
          %546 = vst.msk [vmem:[#allocation4 + $0x8] sm:$0xff] %vm540, 0.0
          %547 = vst.msk [vmem:[#allocation4 + $0x10] sm:$0xff] %vm540, 0.0
          %548 = vst.msk [vmem:[#allocation4 + $0x18] sm:$0xff] %vm540, 0.0
          %549 = vst [vmem:[#allocation5] sm:$0xff] 0.0
          %550 = vst [vmem:[#allocation5 + $0x8] sm:$0xff] 0.0
          %551 = vst [vmem:[#allocation5 + $0x10] sm:$0xff] 0.0
          %552 = vst [vmem:[#allocation5 + $0x18] sm:$0xff] 0.0
          %v553 = vld [vmem:[#allocation12] sm:$0xff]
          %v554 = vld [vmem:[#allocation12 + $0x8] sm:$0xff]
          %v555 = vld [vmem:[#allocation14] sm:$0xff]
          %v556 = vld [vmem:[#allocation14 + $0x8] sm:$0xff]
          %v557 = vld [vmem:[%s444] sm:$0xf]
          %v558 = vld [vmem:[%s444 + $0x4] sm:$0xf]
          %v559 = vunpack.c.l.bf16 %v557
          %v560 = vunpack.c.l.bf16 %v558
          %v561 = vmul.f32 %v559, %v553
          %v562 = vmul.f32 %v560, %v554
          %563 = vrot.lane.b32.xlu0 %v559, 64
          %v564 = vpop.permute.xlu0 %563
          %565 = vrot.lane.b32.xlu0 %v560, 64
          %v566 = vpop.permute.xlu0 %565
          %v567 = vmul.f32 %v564, %v535
          %v568 = vmul.f32 %v566, %v535
          %v569 = vmul.f32 %v567, %v555
          %v570 = vmul.f32 %v568, %v556
          %v571 = vadd.f32 %v561, %v569
          %v572 = vadd.f32 %v562, %v570
          %v573 = vmul.f32 %v571, 0.088388346
          %v574 = vmul.f32 %v572, 0.088388346
          %v575 = vpack.c.bf16 %v574, %v573
          %576 = vst [vmem:[#allocation2] sm:$0xff] %v575
          %s577 = scalar_lea.vmem %s444, 8 [#allocation6]
          %v578 = vld [vmem:[%s577] sm:$0xf]
          %v579 = vld [vmem:[%s577 + $0x4] sm:$0xf]
          %v580 = vunpack.c.l.bf16 %v578
          %v581 = vunpack.c.l.bf16 %v579
          %v582 = vmul.f32 %v580, %v553
          %v583 = vmul.f32 %v581, %v554
          %584 = vrot.lane.b32.xlu0 %v580, 64
          %v585 = vpop.permute.xlu0 %584
          %586 = vrot.lane.b32.xlu0 %v581, 64
          %v587 = vpop.permute.xlu0 %586
          %v588 = vmul.f32 %v585, %v535
          %v589 = vmul.f32 %v587, %v535
          %v590 = vmul.f32 %v588, %v555
          %v591 = vmul.f32 %v589, %v556
          %v592 = vadd.f32 %v582, %v590
          %v593 = vadd.f32 %v583, %v591
          %v594 = vmul.f32 %v592, 0.088388346
          %v595 = vmul.f32 %v593, 0.088388346
          %v596 = vpack.c.bf16 %v595, %v594
          %597 = vst [vmem:[#allocation2 + $0x8] sm:$0xff] %v596
        $region80: #{llama3_forward.10} parent=47 // pred_fallthru
          _
        %s598 = sadd.s32 %s530, 15
        %p599 = scmp.le.s32.totalorder %s531, %s598
        // Predicated region
        $region81: #{llama3_forward.10} parent=47 // pred_check
          %p600 = pneg %p599
        $region82: #{llama3_forward.10} parent=47 // pred_check_branch
          %602 = sbr.rel (%p600) target = $region84
        $region83: #{llama3_forward.10} parent=47 // pred_region
          %v603 = vld [vmem:[%s453] sm:$0xf]
          %v604 = vld [vmem:[%s453 + $0x4] sm:$0xf]
          %v605 = vunpack.c.l.bf16 %v603
          %v606 = vunpack.c.l.bf16 %v604
          %v607 = vld [vmem:[#allocation15] sm:$0xff]
          %v608 = vld [vmem:[#allocation15 + $0x8] sm:$0xff]
          %v609 = vmul.f32 %v605, %v607
          %v610 = vmul.f32 %v606, %v608
          %611 = vrot.lane.b32.xlu0 %v605, 64
          %v612 = vpop.permute.xlu0 %611
          %613 = vrot.lane.b32.xlu0 %v606, 64
          %v614 = vpop.permute.xlu0 %613
          %v615 = vmul.f32 %v612, %v535
          %v616 = vmul.f32 %v614, %v535
          %v617 = vld [vmem:[#allocation17] sm:$0xff]
          %v618 = vld [vmem:[#allocation17 + $0x8] sm:$0xff]
          %v619 = vmul.f32 %v615, %v617
          %v620 = vmul.f32 %v616, %v618
          %v621 = vadd.f32 %v609, %v619
          %v622 = vadd.f32 %v610, %v620
          %v623 = vpack.c.bf16 %v622, %v621
          %v624 = vld [vmem:[%s462] sm:$0xf]
          %v625 = vld [vmem:[%s462 + $0x4] sm:$0xf]
          %v626 = vld [vmem:[#allocation2] sm:$0xff]
          %v627 = vld [vmem:[#allocation2 + $0x8] sm:$0xff]
          %628 = vmatprep.subr.bf16.mxu0 0
          %629 = vmatpush1.bf16.xpose.msra.mxu0 %v623
          %630 = vmatprep.subr.bf16.mxu0 0
          %631 = vmatpush1.bf16.xpose.msra.mxu0 0
          %632 = vmatprep.subr.bf16.mxu0 0
          %633 = vmatpush1.bf16.xpose.msra.mxu0 0
          %634 = vmatprep.subr.bf16.mxu0 0
          %635 = vmatpush1.bf16.xpose.msra.mxu0 0
          %636 = vmatprep.subr.bf16.mxu0 0
          %637 = vmatpush1.bf16.xpose.msra.mxu0 0
          %638 = vmatprep.subr.bf16.mxu0 0
          %639 = vmatpush1.bf16.xpose.msra.mxu0 0
          %640 = vmatprep.subr.bf16.mxu0 0
          %641 = vmatpush1.bf16.xpose.msra.mxu0 0
          %642 = vmatprep.subr.bf16.mxu0 0
          %643 = vmatpush1.bf16.xpose.msra.mxu0 0
          %644 = vmatprep.subr.bf16.mxu0 0
          %645 = vmatpush1.bf16.xpose.msra.mxu0 0
          %646 = vmatprep.subr.bf16.mxu0 0
          %647 = vmatpush1.bf16.xpose.msra.mxu0 0
          %648 = vmatprep.subr.bf16.mxu0 0
          %649 = vmatpush1.bf16.xpose.msra.mxu0 0
          %650 = vmatprep.subr.bf16.mxu0 0
          %651 = vmatpush1.bf16.xpose.msra.mxu0 0
          %652 = vmatprep.subr.bf16.mxu0 0
          %653 = vmatpush1.bf16.xpose.msra.mxu0 0
          %654 = vmatprep.subr.bf16.mxu0 0
          %655 = vmatpush1.bf16.xpose.msra.mxu0 0
          %656 = vmatprep.subr.bf16.mxu0 0
          %657 = vmatpush1.bf16.xpose.msra.mxu0 0
          %658 = vmatprep.subr.bf16.mxu0 0
          %659 = vmatpush1.bf16.xpose.msra.mxu0 0
          %660 = vmatprep.mubr.bf16.mxu0 0
          %661 = vmatmul.mubr.bf16.gmra.mrb[0].mxu0 %v626
          %v662 = vpop.f32.mrb[0].mxu0
          %v663 = vadd.f32 0.0, %v662
          %v664 = vpop.f32.mrb[0].mxu0
          %v665 = vpop.f32.mrb[0].mxu0
          %v666 = vadd.f32 0.0, %v665
          %v667 = vpop.f32.mrb[0].mxu0
          %668 = vmatprep.mubr.bf16.mxu0 0
          %669 = vmatmul.mubr.bf16.gmra.mrb[0].mxu0 %v627
          %v670 = vpop.f32.mrb[0].mxu0
          %v671 = vadd.f32 0.0, %v670
          %v672 = vpop.f32.mrb[0].mxu0
          %v673 = vpop.f32.mrb[0].mxu0
          %v674 = vadd.f32 0.0, %v673
          %v675 = vpop.f32.mrb[0].mxu0
          %676 = vdwg.mxu0
          %v677 = vlaneseq
          %v678 = vshrl.u32 %v677, 7
          %v679 = vadd.s32 %v678, 8
          %v680 = vadd.s32 %v678, 16
          %v681 = vadd.s32 %v678, 24
          %vm682 = vcmp.lt.s32.totalorder %v678, 0
          %v683 = vsub.s32 0, %v678
          %v684 = vsel %vm682, %v683, %v678
          %v685 = vshrl.u32 %v684, 4
          %v686 = vand.u32 %v684, 15
          %v687 = vsub.s32 0, %v686
          %v688 = vsel %vm682, %v687, %v686
          %vm689 = vcmp.lt.s32.totalorder %v679, 0
          %v690 = vsub.s32 0, %v679
          %v691 = vsel %vm689, %v690, %v679
          %v692 = vshrl.u32 %v691, 4
          %v693 = vand.u32 %v691, 15
          %v694 = vsub.s32 0, %v693
          %v695 = vsel %vm689, %v694, %v693
          %vm696 = vcmp.lt.s32.totalorder %v680, 0
          %v697 = vsub.s32 0, %v680
          %v698 = vsel %vm696, %v697, %v680
          %v699 = vshrl.u32 %v698, 4
          %v700 = vand.u32 %v698, 15
          %v701 = vsub.s32 0, %v700
          %v702 = vsel %vm696, %v701, %v700
          %vm703 = vcmp.lt.s32.totalorder %v681, 0
          %v704 = vsub.s32 0, %v681
          %v705 = vsel %vm703, %v704, %v681
          %v706 = vshrl.u32 %v705, 4
          %v707 = vand.u32 %v705, 15
          %v708 = vsub.s32 0, %v707
          %v709 = vsel %vm703, %v708, %v707
          %vm710 = vcmp.ne.s32.totalorder %v688, 0
          %vm711 = vcmp.ne.s32.totalorder %v695, 0
          %vm712 = vcmp.ne.s32.totalorder %v702, 0
          %vm713 = vcmp.ne.s32.totalorder %v709, 0
          %vm714 = vcmp.lt.s32.totalorder %v688, 0
          %vm715 = vcmp.lt.s32.totalorder %v695, 0
          %vm716 = vcmp.lt.s32.totalorder %v702, 0
          %vm717 = vcmp.lt.s32.totalorder %v709, 0
          %vm718 = vmand %vm714, %vm710
          %vm719 = vmand %vm715, %vm711
          %vm720 = vmand %vm716, %vm712
          %vm721 = vmand %vm717, %vm713
          %v722 = vadd.s32 %v688, 16
          %v723 = vadd.s32 %v695, 16
          %v724 = vadd.s32 %v702, 16
          %v725 = vadd.s32 %v709, 16
          %v726 = vsel %vm718, %v722, %v688
          %v727 = vsel %vm719, %v723, %v695
          %v728 = vsel %vm720, %v724, %v702
          %v729 = vsel %vm721, %v725, %v709
          %v730 = vstv %s530
          %v731 = vadd.s32 %v730, %v726
          %v732 = vadd.s32 %v730, %v727
          %v733 = vadd.s32 %v730, %v728
          %v734 = vadd.s32 %v730, %v729
          %v735 = vstv %s531
          %v736 = vadd.s32 %v735, %v533
          %vm737 = vcmp.le.s32.totalorder %v736, %v731
          %vm738 = vcmp.le.s32.totalorder %v736, %v732
          %vm739 = vcmp.le.s32.totalorder %v736, %v733
          %vm740 = vcmp.le.s32.totalorder %v736, %v734
          %v741 = vsel %vm737, %v663, -1e+30
          %v742 = vsel %vm738, %v666, -1e+30
          %v743 = vsel %vm739, %v671, -1e+30
          %v744 = vsel %vm740, %v674, -1e+30
          %v745 = vld [vmem:[#allocation3] sm:$0xff]
          %v746 = vld [vmem:[#allocation3 + $0x8] sm:$0xff]
          %v747 = vld [vmem:[#allocation3 + $0x10] sm:$0xff]
          %v748 = vld [vmem:[#allocation3 + $0x18] sm:$0xff]
          %vm749 = vcmask 130048
          %v750 = vsel %vm749, %v741, -inf
          %751 = vmax.xlane.f32.xlu0 %v750
          %v752 = vpop.xlane.xlu0 %751
          %v753 = vsel %vm749, %v742, -inf
          %754 = vmax.xlane.f32.xlu0 %v753
          %v755 = vpop.xlane.xlu0 %754
          %v756 = vsel %vm749, %v743, -inf
          %757 = vmax.xlane.f32.xlu0 %v756
          %v758 = vpop.xlane.xlu0 %757
          %v759 = vsel %vm749, %v744, -inf
          %760 = vmax.xlane.f32.xlu0 %v759
          %v761 = vpop.xlane.xlu0 %760
          %v762 = vmax.f32 %v745, %v752
          %v763 = vmax.f32 %v746, %v755
          %v764 = vmax.f32 %v747, %v758
          %v765 = vmax.f32 %v748, %v761
          %v766 = vsub.f32 %v745, %v762
          %v767 = vsub.f32 %v746, %v763
          %v768 = vsub.f32 %v747, %v764
          %v769 = vsub.f32 %v748, %v765
          %v770 = vmul.f32 %v766, 1.442695
          %v771 = vpow.pop %v770
          %v772 = vmul.f32 %v767, 1.442695
          %v773 = vpow.pop %v772
          %v774 = vmul.f32 %v768, 1.442695
          %v775 = vpow.pop %v774
          %v776 = vmul.f32 %v769, 1.442695
          %v777 = vpow.pop %v776
          %779 = vset.pattern.permute.xlu0 0
          %780 = vperm.xlu0 %779, %v762
          %v781 = vpop.permute.xlu0 %780
          %784 = vset.pattern.permute.xlu0 0
          %785 = vperm.xlu0 %784, %v763
          %v786 = vpop.permute.xlu0 %785
          %789 = vset.pattern.permute.xlu0 0
          %790 = vperm.xlu0 %789, %v764
          %v791 = vpop.permute.xlu0 %790
          %794 = vset.pattern.permute.xlu0 0
          %795 = vperm.xlu0 %794, %v765
          %v796 = vpop.permute.xlu0 %795
          %v798 = vsub.f32 %v741, %v781
          %v799 = vsub.f32 %v742, %v786
          %v800 = vsub.f32 %v743, %v791
          %v801 = vsub.f32 %v744, %v796
          %v802 = vmul.f32 %v798, 1.442695
          %v803 = vpow.pop %v802
          %v804 = vmul.f32 %v799, 1.442695
          %v805 = vpow.pop %v804
          %v806 = vmul.f32 %v800, 1.442695
          %v807 = vpow.pop %v806
          %v808 = vmul.f32 %v801, 1.442695
          %v809 = vpow.pop %v808
          %v810 = vld [vmem:[#allocation4] sm:$0xff]
          %v811 = vld [vmem:[#allocation4 + $0x8] sm:$0xff]
          %v812 = vld [vmem:[#allocation4 + $0x10] sm:$0xff]
          %v813 = vld [vmem:[#allocation4 + $0x18] sm:$0xff]
          %v814 = vmul.f32 %v771, %v810
          %v815 = vmul.f32 %v773, %v811
          %v816 = vmul.f32 %v775, %v812
          %v817 = vmul.f32 %v777, %v813
          %v818 = vsel %vm749, %v803, 0.0
          %819 = vadd.xlane.f32.xlu0 %v818
          %v820 = vpop.xlane.xlu0 %819
          %v821 = vsel %vm749, %v805, 0.0
          %822 = vadd.xlane.f32.xlu0 %v821
          %v823 = vpop.xlane.xlu0 %822
          %v824 = vsel %vm749, %v807, 0.0
          %825 = vadd.xlane.f32.xlu0 %v824
          %v826 = vpop.xlane.xlu0 %825
          %v827 = vsel %vm749, %v809, 0.0
          %828 = vadd.xlane.f32.xlu0 %v827
          %v829 = vpop.xlane.xlu0 %828
          %v830 = vadd.f32 %v814, %v820
          %v831 = vadd.f32 %v815, %v823
          %v832 = vadd.f32 %v816, %v826
          %v833 = vadd.f32 %v817, %v829
          %vm834 = vcmask 7168
          %835 = vst.msk [vmem:[#allocation4] sm:$0xff] %vm834, %v830
          %836 = vst.msk [vmem:[#allocation4 + $0x8] sm:$0xff] %vm834, %v831
          %837 = vst.msk [vmem:[#allocation4 + $0x10] sm:$0xff] %vm834, %v832
          %838 = vst.msk [vmem:[#allocation4 + $0x18] sm:$0xff] %vm834, %v833
          %v839 = vld [vmem:[#allocation5] sm:$0xff]
          %v840 = vld [vmem:[#allocation5 + $0x8] sm:$0xff]
          %v841 = vld [vmem:[#allocation5 + $0x10] sm:$0xff]
          %v842 = vld [vmem:[#allocation5 + $0x18] sm:$0xff]
          %844 = vset.pattern.permute.xlu0 0
          %845 = vperm.xlu0 %844, %v771
          %v846 = vpop.permute.xlu0 %845
          %849 = vset.pattern.permute.xlu0 0
          %850 = vperm.xlu0 %849, %v773
          %v851 = vpop.permute.xlu0 %850
          %854 = vset.pattern.permute.xlu0 0
          %855 = vperm.xlu0 %854, %v775
          %v856 = vpop.permute.xlu0 %855
          %859 = vset.pattern.permute.xlu0 0
          %860 = vperm.xlu0 %859, %v777
          %v861 = vpop.permute.xlu0 %860
          %v863 = vmul.f32 %v846, %v839
          %v864 = vmul.f32 %v851, %v840
          %v865 = vmul.f32 %v856, %v841
          %v866 = vmul.f32 %v861, %v842
          %v867 = vpack.c.bf16 %v805, %v803
          %v868 = vpack.c.bf16 %v809, %v807
          %v871 = vunpack.c.l.b16 %v624
          %v872 = vunpack.c.l.b16 %v625
          %v873 = vpack.c.b16 %v872, %v871
          %v876 = vsel %vm749, %v867, 0
          %v879 = vsel %vm749, %v868, 0
          %881 = vmatprep.subr.bf16.mxu0 0
          %882 = vmatpush1.bf16.msra.mxu0 %v873
          %883 = vmatprep.subr.bf16.mxu0 0
          %884 = vmatpush1.bf16.msra.mxu0 0
          %885 = vmatprep.subr.bf16.mxu0 0
          %886 = vmatpush1.bf16.msra.mxu0 0
          %887 = vmatprep.subr.bf16.mxu0 0
          %888 = vmatpush1.bf16.msra.mxu0 0
          %889 = vmatprep.subr.bf16.mxu0 0
          %890 = vmatpush1.bf16.msra.mxu0 0
          %891 = vmatprep.subr.bf16.mxu0 0
          %892 = vmatpush1.bf16.msra.mxu0 0
          %893 = vmatprep.subr.bf16.mxu0 0
          %894 = vmatpush1.bf16.msra.mxu0 0
          %895 = vmatprep.subr.bf16.mxu0 0
          %896 = vmatpush1.bf16.msra.mxu0 0
          %897 = vmatprep.subr.bf16.mxu0 0
          %898 = vmatpush1.bf16.msra.mxu0 0
          %899 = vmatprep.subr.bf16.mxu0 0
          %900 = vmatpush1.bf16.msra.mxu0 0
          %901 = vmatprep.subr.bf16.mxu0 0
          %902 = vmatpush1.bf16.msra.mxu0 0
          %903 = vmatprep.subr.bf16.mxu0 0
          %904 = vmatpush1.bf16.msra.mxu0 0
          %905 = vmatprep.subr.bf16.mxu0 0
          %906 = vmatpush1.bf16.msra.mxu0 0
          %907 = vmatprep.subr.bf16.mxu0 0
          %908 = vmatpush1.bf16.msra.mxu0 0
          %909 = vmatprep.subr.bf16.mxu0 0
          %910 = vmatpush1.bf16.msra.mxu0 0
          %911 = vmatprep.subr.bf16.mxu0 0
          %912 = vmatpush1.bf16.msra.mxu0 0
          %913 = vmatprep.mubr.bf16.mxu0 0
          %914 = vmatmul.mubr.bf16.gmra.mrb[0].mxu0 %v876
          %v915 = vpop.f32.mrb[0].mxu0
          %v916 = vadd.f32 0.0, %v915
          %v917 = vpop.f32.mrb[0].mxu0
          %v918 = vpop.f32.mrb[0].mxu0
          %v919 = vadd.f32 0.0, %v918
          %v920 = vpop.f32.mrb[0].mxu0
          %921 = vmatprep.mubr.bf16.mxu0 0
          %922 = vmatmul.mubr.bf16.gmra.mrb[0].mxu0 %v879
          %v923 = vpop.f32.mrb[0].mxu0
          %v924 = vadd.f32 0.0, %v923
          %v925 = vpop.f32.mrb[0].mxu0
          %v926 = vpop.f32.mrb[0].mxu0
          %v927 = vadd.f32 0.0, %v926
          %v928 = vpop.f32.mrb[0].mxu0
          %929 = vdwg.mxu0
          %v930 = vadd.f32 %v863, %v916
          %v931 = vadd.f32 %v864, %v919
          %v932 = vadd.f32 %v865, %v924
          %v933 = vadd.f32 %v866, %v927
          %934 = vst [vmem:[#allocation5] sm:$0xff] %v930
          %935 = vst [vmem:[#allocation5 + $0x8] sm:$0xff] %v931
          %936 = vst [vmem:[#allocation5 + $0x10] sm:$0xff] %v932
          %937 = vst [vmem:[#allocation5 + $0x18] sm:$0xff] %v933
          %938 = vst.msk [vmem:[#allocation3] sm:$0xff] %vm834, %v762
          %939 = vst.msk [vmem:[#allocation3 + $0x8] sm:$0xff] %vm834, %v763
          %940 = vst.msk [vmem:[#allocation3 + $0x10] sm:$0xff] %vm834, %v764
          %941 = vst.msk [vmem:[#allocation3 + $0x18] sm:$0xff] %vm834, %v765
        $region84: #{llama3_forward.10} parent=47 // pred_fallthru
          _
        // Predicated region
        $region85: #{llama3_forward.10} parent=47 // pred_check
          %p942 = pneg %p536
        $region86: #{llama3_forward.10} parent=47 // pred_check_branch
          %944 = sbr.rel (%p942) target = $region88
        $region87: #{llama3_forward.10} parent=47 // pred_region
          %v945 = vld [vmem:[#allocation5] sm:$0xff]
          %v946 = vld [vmem:[#allocation5 + $0x8] sm:$0xff]
          %v947 = vld [vmem:[#allocation5 + $0x10] sm:$0xff]
          %v948 = vld [vmem:[#allocation5 + $0x18] sm:$0xff]
          %v949 = vld [vmem:[#allocation4] sm:$0xff]
          %v950 = vld [vmem:[#allocation4 + $0x8] sm:$0xff]
          %v951 = vld [vmem:[#allocation4 + $0x10] sm:$0xff]
          %v952 = vld [vmem:[#allocation4 + $0x18] sm:$0xff]
          %v953 = vrcp.pop %v949
          %v954 = vrcp.pop %v950
          %v955 = vrcp.pop %v951
          %v956 = vrcp.pop %v952
          %958 = vset.pattern.permute.xlu0 0
          %959 = vperm.xlu0 %958, %v953
          %v960 = vpop.permute.xlu0 %959
          %963 = vset.pattern.permute.xlu0 0
          %964 = vperm.xlu0 %963, %v954
          %v965 = vpop.permute.xlu0 %964
          %968 = vset.pattern.permute.xlu0 0
          %969 = vperm.xlu0 %968, %v955
          %v970 = vpop.permute.xlu0 %969
          %973 = vset.pattern.permute.xlu0 0
          %974 = vperm.xlu0 %973, %v956
          %v975 = vpop.permute.xlu0 %974
          %v977 = vmul.f32 %v945, %v960
          %v978 = vmul.f32 %v946, %v965
          %v979 = vmul.f32 %v947, %v970
          %v980 = vmul.f32 %v948, %v975
          %v981 = vpack.c.bf16 %v978, %v977
          %v982 = vpack.c.bf16 %v980, %v979
          %v985 = vunpack.c.l.b16 %v981
          %v986 = vunpack.c.h.b16 %v981
          %v987 = vunpack.c.l.b16 %v982
          %v988 = vunpack.c.h.b16 %v982
          %v989 = vpack.c.b16 %v985, %v985
          %v990 = vpack.c.b16 %v986, %v986
          %v991 = vpack.c.b16 %v987, %v987
          %v992 = vpack.c.b16 %v988, %v988
          %997 = vst [vmem:[%s518] sm:$0xf] %v989
          %998 = vst [vmem:[%s518 + $0x4] sm:$0xf] %v990
          %999 = vst [vmem:[%s518 + $0x8] sm:$0xf] %v991
          %1000 = vst [vmem:[%s518 + $0xc] sm:$0xf] %v992
        $region88: #{llama3_forward.10} parent=47 // pred_fallthru
          _
        %s1001 = sand.u32 %s261, 1
        %s1002 = scalar_lea.sflag [#allocation8], %s1001
        %s1003 = sand.u32 %s261, 1
        %s1004 = smul.addr %s1003, 16
        %s1005 = scalar_lea.vmem [#allocation18], %s1004
        // Predicated region
        $region89: #{llama3_forward.10} parent=47 // pred_check
          %p1006 = pneg %p271
        $region90: #{llama3_forward.10} parent=47 // pred_check_branch
          %1008 = sbr.rel (%p1006) target = $region92
        $region91: #{llama3_forward.10} parent=47 // pred_region
          %s1009 = smul.u32 2, %s36
          %s1010 = smul.u32 2, %s37
          %s1012 = ssub.s32 256, 256
          %1013 = vsyncadd %s1002, %s1012
          %s1014 = smul.addr %s1009, 2
          %s1015 = sadd.s32 %s1010, %s1014
          %s1016 = smul.addr %s35, 4
          %s1017 = sadd.s32 %s1015, %s1016
          %s1018 = smul.addr %s1017, 64
          %s1019 = scalar_lea.hbm %s7, %s1018
          %s1020 = sshll.u32 %s1005, 4
          %s1021 = int_to_ptr.vmem [resolvable:$true] %s1020
          %1026 = dma.vmem_to_hbm [thread:$0]  %s1021, 256, %s1019, %s1002, 64, 64, 4
        $region92: #{llama3_forward.10} parent=47 // pred_fallthru
          _
      $region48: #{llama3_forward.10} parent=5 // pred_fallthru
        _
      %p1027 = scmp.le.s32.totalorder 2, %s24
      // Predicated region
      $region93: #{llama3_forward.10} parent=5 // pred_check
        %p1028 = pneg %p1027
      $region94: #{llama3_forward.10} parent=5 // pred_check_branch
        %1030 = sbr.rel (%p1028) target = $region96
      $region95: #{llama3_forward.10} parent=5 // pred_region
        %s1031 = ssub.s32 %s24, 2
        // Predicated region
        $region97: #{llama3_forward.10} parent=95 // pred_check
          %p1032 = pneg %p277
        $region98: #{llama3_forward.10} parent=95 // pred_check_branch
          %1034 = sbr.rel (%p1032) target = $region100
        $region99: #{llama3_forward.10} parent=95 // pred_region
          %s1035 = sand.u32 %s262, 1
          %s1036 = scalar_lea.sflag [#allocation8], %s1035
          %s1037 = sand.u32 %s262, 1
          %s1038 = smul.addr %s1037, 16
          %s1039 = scalar_lea.vmem [#allocation18], %s1038
          %1040 = dma.done %s1036, 256
        $region100: #{llama3_forward.10} parent=95 // pred_fallthru
          _
      $region96: #{llama3_forward.10} parent=5 // pred_fallthru
        _
    $region6: #{llama3_forward.10} parent=1 // loop_footer
      %s28 = sadd.s32 1, %s24
    $region7: #{llama3_forward.10} parent=1 // loop_footer_branch
      %23 = sbr.rel target = $region3
    $region8: #{llama3_forward.10} parent=1 // loop_exit
      _
    %1041 = vsyncpa [#allocation7], 1
    %s1042 = scalar_lea.sflag [#allocation7], 1
    %1043 = vsyncpa %s1042, 1
    %1044 = vsyncpa [#allocation10], 1
    %s1045 = scalar_lea.sflag [#allocation10], 1
    %1046 = vsyncpa %s1045, 1
    %1047 = vsyncpa [#allocation13], 1
    %1048 = vsyncpa [#allocation16], 1
    %1049 = vsyncpa [#allocation8], 1
    %s1050 = scalar_lea.sflag [#allocation8], 1
    %1051 = vsyncpa %s1050, 1

// kernel: llama3_forward.17
$region0: #{llama3_forward.17}
  #allocation0 [shape = 'u32[]', space=smem, size = 0x4, offset = 0x4, fixed_abs, tag = 'smem constant byte address 0x4 - core index']
  #allocation1 [shape = 'u32[144,128]{1,0:T(1,128)}', space=vmem, size = 0x12000, scoped, tag = 'internal scratch']
  #allocation2 [shape = 'bf16[32,256]{1,0:T(16,128)(2,1)}', space=vmem, size = 0x4000, scoped, tag = 'scratch operand']
  %s0 = inlined_call_operand.hbm [shape: bf16[32,256], index: 0, kind: input, shape index: {}]
  %s1 = inlined_call_operand.hbm [shape: f32[1,256], index: 1, kind: input, shape index: {}]
  %s2 = inlined_call_operand.hbm [shape: bf16[256,256], index: 2, kind: input, shape index: {}]
  %s3 = inlined_call_operand.hbm [shape: bf16[32,256], index: 3, kind: output, shape index: {}]
  %s4 = sld [smem:[#allocation0]]
  $region38: #{llama3_forward.17} parent=0
    _
  %s6 = ssub.s32 1, %s4
  %s7 = scalar_select 0, %s6, %s4
  $region1: #{llama3_forward.17} parent=0
    #allocation3 [shape = 'u8[16384]{0}', space=vmem, size = 0x4000, scoped, tag = 'input window, operand 0, single buffered']
    #allocation4 [shape = 's32[1]{0}', space=sflag, size = 0x4, scoped, tag = 'scoped memory for llama3_forward.17']
    #allocation5 [shape = 's32[1]{0}', space=sflag, size = 0x4, scoped, tag = 'scoped memory for llama3_forward.17']
    #allocation6 [shape = 'u8[1024]{0}', space=vmem, size = 0x400, scoped, tag = 'input window, operand 1, single buffered']
    #allocation7 [shape = 's32[1]{0}', space=sflag, size = 0x4, scoped, tag = 'scoped memory for llama3_forward.17']
    #allocation8 [shape = 'u8[131072]{0}', space=vmem, size = 0x20000, scoped, tag = 'input window, operand 2, single buffered']
    #allocation9 [shape = 'u8[16384]{0}', space=vmem, size = 0x4000, scoped, tag = 'output window, operand 0, single buffered']
    %8 = vsyncpa [#allocation4], 0
    %9 = vsyncpa [#allocation7], 0
    %10 = vsyncpa [#allocation5], 0
    // Predicated region
    $region2: #{llama3_forward.17} parent=1 // pred_check
      _
    $region3: #{llama3_forward.17} parent=1 // pred_check_branch
      %12 = sbr.rel (0) target = $region5
    $region4: #{llama3_forward.17} parent=1 // pred_region
      %s14 = ssub.s32 512, 512
      %15 = vsyncadd [#allocation4], %s14
      %s16 = sshll.u32 [#allocation3], 4
      %s17 = int_to_ptr.vmem [resolvable:$true] %s16
      %22 = dma.hbm_to_vmem [thread:$0]  %s0, 512, %s17, [#allocation4], 128, 128, 8
    $region5: #{llama3_forward.17} parent=1 // pred_fallthru
      _
    // Predicated region
    $region6: #{llama3_forward.17} parent=1 // pred_check
      _
    $region7: #{llama3_forward.17} parent=1 // pred_check_branch
      %24 = sbr.rel (0) target = $region9
    $region8: #{llama3_forward.17} parent=1 // pred_region
      %s26 = ssub.s32 32, 32
      %27 = vsyncadd [#allocation7], %s26
      %s29 = sshll.u32 [#allocation6], 4
      %s30 = int_to_ptr.vmem [resolvable:$true] %s29
      %32 = dma.hbm_to_vmem [thread:$0]  %s1, 32, %s30, [#allocation7]
    $region9: #{llama3_forward.17} parent=1 // pred_fallthru
      _
    // Predicated region
    $region10: #{llama3_forward.17} parent=1 // pred_check
      _
    $region11: #{llama3_forward.17} parent=1 // pred_check_branch
      %34 = sbr.rel (0) target = $region13
    $region12: #{llama3_forward.17} parent=1 // pred_region
      %s36 = ssub.s32 4096, 4096
      %37 = vsyncadd [#allocation7], %s36
      %s38 = sshll.u32 [#allocation8], 4
      %s39 = int_to_ptr.vmem [resolvable:$true] %s38
      %44 = dma.hbm_to_vmem [thread:$0]  %s2, 4096, %s39, [#allocation7], 128, 128, 8
    $region13: #{llama3_forward.17} parent=1 // pred_fallthru
      _
    // Predicated region
    $region14: #{llama3_forward.17} parent=1 // pred_check
      _
    $region15: #{llama3_forward.17} parent=1 // pred_check_branch
      %46 = sbr.rel (0) target = $region17
    $region16: #{llama3_forward.17} parent=1 // pred_region
      %47 = dma.done [#allocation4], 512
    $region17: #{llama3_forward.17} parent=1 // pred_fallthru
      _
    // Predicated region
    $region18: #{llama3_forward.17} parent=1 // pred_check
      _
    $region19: #{llama3_forward.17} parent=1 // pred_check_branch
      %49 = sbr.rel (0) target = $region21
    $region20: #{llama3_forward.17} parent=1 // pred_region
      %50 = dma.done [#allocation7], 32
    $region21: #{llama3_forward.17} parent=1 // pred_fallthru
      _
    // Predicated region
    $region22: #{llama3_forward.17} parent=1 // pred_check
      _
    $region23: #{llama3_forward.17} parent=1 // pred_check_branch
      %52 = sbr.rel (0) target = $region25
    $region24: #{llama3_forward.17} parent=1 // pred_region
      %53 = dma.done [#allocation7], 4096
    $region25: #{llama3_forward.17} parent=1 // pred_fallthru
      _
    %p54 = scmp.eq.s32.totalorder 0, 0
    // Predicated region
    $region26: #{llama3_forward.17} parent=1 // pred_check
      %p55 = pneg %p54
    $region27: #{llama3_forward.17} parent=1 // pred_check_branch
      %57 = sbr.rel (%p55) target = $region29
    $region28: #{llama3_forward.17} parent=1 // pred_region
      %v58 = vld [vmem:[#allocation3] sm:$0xff]
      %v59 = vld [vmem:[#allocation3 + $0x8] sm:$0xff]
      %v60 = vld [vmem:[#allocation3 + $0x10] sm:$0xff]
      %v61 = vld [vmem:[#allocation3 + $0x18] sm:$0xff]
      %v62 = vunpack.c.l.bf16 %v58
      %v63 = vunpack.c.h.bf16 %v58
      %v64 = vunpack.c.l.bf16 %v59
      %v65 = vunpack.c.h.bf16 %v59
      %v66 = vunpack.c.l.bf16 %v60
      %v67 = vunpack.c.h.bf16 %v60
      %v68 = vunpack.c.l.bf16 %v61
      %v69 = vunpack.c.h.bf16 %v61
      %v70 = vmul.f32 %v62, %v62
      %v71 = vmul.f32 %v63, %v63
      %v72 = vmul.f32 %v64, %v64
      %v73 = vmul.f32 %v65, %v65
      %v74 = vmul.f32 %v66, %v66
      %v75 = vmul.f32 %v67, %v67
      %v76 = vmul.f32 %v68, %v68
      %v77 = vmul.f32 %v69, %v69
      %v78 = vadd.f32 %v70, %v71
      %79 = vadd.xlane.f32.xlu0 %v78
      %v80 = vpop.xlane.xlu0 %79
      %v81 = vadd.f32 %v72, %v73
      %82 = vadd.xlane.f32.xlu0 %v81
      %v83 = vpop.xlane.xlu0 %82
      %v84 = vadd.f32 %v74, %v75
      %85 = vadd.xlane.f32.xlu0 %v84
      %v86 = vpop.xlane.xlu0 %85
      %v87 = vadd.f32 %v76, %v77
      %88 = vadd.xlane.f32.xlu0 %v87
      %v89 = vpop.xlane.xlu0 %88
      %v90 = vrcp.pop 256.0
      %v91 = vmul.f32 %v80, %v90
      %v92 = vmul.f32 %v83, %v90
      %v93 = vmul.f32 %v86, %v90
      %v94 = vmul.f32 %v89, %v90
      %v95 = vadd.f32 %v91, 1e-05
      %v96 = vadd.f32 %v92, 1e-05
      %v97 = vadd.f32 %v93, 1e-05
      %v98 = vadd.f32 %v94, 1e-05
      %v99 = vrsqrt.pop %v95
      %v100 = vrsqrt.pop %v96
      %v101 = vrsqrt.pop %v97
      %v102 = vrsqrt.pop %v98
      %v103 = vmul.f32 %v62, %v99
      %v104 = vmul.f32 %v63, %v99
      %v105 = vmul.f32 %v64, %v100
      %v106 = vmul.f32 %v65, %v100
      %v107 = vmul.f32 %v66, %v101
      %v108 = vmul.f32 %v67, %v101
      %v109 = vmul.f32 %v68, %v102
      %v110 = vmul.f32 %v69, %v102
      %v111 = vld [vmem:[#allocation6] sm:$0x3]
      %v113 = vlaneseq
      %v114 = vshrl.u32 %v113, 7
      %v115 = vsub.s32 0, %v114
      %v116 = vrot.slane %v111, %v115
      %v117 = vlaneseq
      %v118 = vshrl.u32 %v117, 7
      %v119 = vsub.s32 1, %v118
      %v120 = vrot.slane %v111, %v119
      %v123 = vmul.f32 %v103, %v116
      %v124 = vmul.f32 %v104, %v120
      %v125 = vmul.f32 %v105, %v116
      %v126 = vmul.f32 %v106, %v120
      %v127 = vmul.f32 %v107, %v116
      %v128 = vmul.f32 %v108, %v120
      %v129 = vmul.f32 %v109, %v116
      %v130 = vmul.f32 %v110, %v120
      %v131 = vpack.c.bf16 %v125, %v123
      %v132 = vpack.c.bf16 %v126, %v124
      %v133 = vpack.c.bf16 %v129, %v127
      %v134 = vpack.c.bf16 %v130, %v128
      %135 = vst [vmem:[#allocation2] sm:$0xff] %v131
      %136 = vst [vmem:[#allocation2 + $0x8] sm:$0xff] %v132
      %137 = vst [vmem:[#allocation2 + $0x10] sm:$0xff] %v133
      %138 = vst [vmem:[#allocation2 + $0x18] sm:$0xff] %v134
    $region29: #{llama3_forward.17} parent=1 // pred_fallthru
      _
    %v139 = vld [vmem:[#allocation2] sm:$0xff]
    %v140 = vld [vmem:[#allocation2 + $0x8] sm:$0xff]
    %v141 = vld [vmem:[#allocation2 + $0x10] sm:$0xff]
    %v142 = vld [vmem:[#allocation2 + $0x18] sm:$0xff]
    %v143 = vld [vmem:[#allocation8] sm:$0xff]
    %v144 = vld [vmem:[#allocation8 + $0x8] sm:$0xff]
    %v145 = vld [vmem:[#allocation8 + $0x10] sm:$0xff]
    %v146 = vld [vmem:[#allocation8 + $0x18] sm:$0xff]
    %v147 = vld [vmem:[#allocation8 + $0x20] sm:$0xff]
    %v148 = vld [vmem:[#allocation8 + $0x28] sm:$0xff]
    %v149 = vld [vmem:[#allocation8 + $0x30] sm:$0xff]
    %v150 = vld [vmem:[#allocation8 + $0x38] sm:$0xff]
    %v151 = vld [vmem:[#allocation8 + $0x40] sm:$0xff]
    %v152 = vld [vmem:[#allocation8 + $0x48] sm:$0xff]
    %v153 = vld [vmem:[#allocation8 + $0x50] sm:$0xff]
    %v154 = vld [vmem:[#allocation8 + $0x58] sm:$0xff]
    %v155 = vld [vmem:[#allocation8 + $0x60] sm:$0xff]
    %v156 = vld [vmem:[#allocation8 + $0x68] sm:$0xff]
    %v157 = vld [vmem:[#allocation8 + $0x70] sm:$0xff]
    %v158 = vld [vmem:[#allocation8 + $0x78] sm:$0xff]
    %v159 = vld [vmem:[#allocation8 + $0x80] sm:$0xff]
    %v160 = vld [vmem:[#allocation8 + $0x88] sm:$0xff]
    %v161 = vld [vmem:[#allocation8 + $0x90] sm:$0xff]
    %v162 = vld [vmem:[#allocation8 + $0x98] sm:$0xff]
    %v163 = vld [vmem:[#allocation8 + $0xa0] sm:$0xff]
    %v164 = vld [vmem:[#allocation8 + $0xa8] sm:$0xff]
    %v165 = vld [vmem:[#allocation8 + $0xb0] sm:$0xff]
    %v166 = vld [vmem:[#allocation8 + $0xb8] sm:$0xff]
    %v167 = vld [vmem:[#allocation8 + $0xc0] sm:$0xff]
    %v168 = vld [vmem:[#allocation8 + $0xc8] sm:$0xff]
    %v169 = vld [vmem:[#allocation8 + $0xd0] sm:$0xff]
    %v170 = vld [vmem:[#allocation8 + $0xd8] sm:$0xff]
    %v171 = vld [vmem:[#allocation8 + $0xe0] sm:$0xff]
    %v172 = vld [vmem:[#allocation8 + $0xe8] sm:$0xff]
    %v173 = vld [vmem:[#allocation8 + $0xf0] sm:$0xff]
    %v174 = vld [vmem:[#allocation8 + $0xf8] sm:$0xff]
    %v207 = vunpack.c.l.b16 %v143
    %v208 = vunpack.c.h.b16 %v143
    %v209 = vunpack.c.l.b16 %v144
    %v210 = vunpack.c.h.b16 %v144
    %v211 = vunpack.c.l.b16 %v145
    %v212 = vunpack.c.h.b16 %v145
    %v213 = vunpack.c.l.b16 %v146
    %v214 = vunpack.c.h.b16 %v146
    %v215 = vunpack.c.l.b16 %v147
    %v216 = vunpack.c.h.b16 %v147
    %v217 = vunpack.c.l.b16 %v148
    %v218 = vunpack.c.h.b16 %v148
    %v219 = vunpack.c.l.b16 %v149
    %v220 = vunpack.c.h.b16 %v149
    %v221 = vunpack.c.l.b16 %v150
    %v222 = vunpack.c.h.b16 %v150
    %v223 = vunpack.c.l.b16 %v151
    %v224 = vunpack.c.h.b16 %v151
    %v225 = vunpack.c.l.b16 %v152
    %v226 = vunpack.c.h.b16 %v152
    %v227 = vunpack.c.l.b16 %v153
    %v228 = vunpack.c.h.b16 %v153
    %v229 = vunpack.c.l.b16 %v154
    %v230 = vunpack.c.h.b16 %v154
    %v231 = vunpack.c.l.b16 %v155
    %v232 = vunpack.c.h.b16 %v155
    %v233 = vunpack.c.l.b16 %v156
    %v234 = vunpack.c.h.b16 %v156
    %v235 = vunpack.c.l.b16 %v157
    %v236 = vunpack.c.h.b16 %v157
    %v237 = vunpack.c.l.b16 %v158
    %v238 = vunpack.c.h.b16 %v158
    %v239 = vunpack.c.l.b16 %v159
    %v240 = vunpack.c.h.b16 %v159
    %v241 = vunpack.c.l.b16 %v160
    %v242 = vunpack.c.h.b16 %v160
    %v243 = vunpack.c.l.b16 %v161
    %v244 = vunpack.c.h.b16 %v161
    %v245 = vunpack.c.l.b16 %v162
    %v246 = vunpack.c.h.b16 %v162
    %v247 = vunpack.c.l.b16 %v163
    %v248 = vunpack.c.h.b16 %v163
    %v249 = vunpack.c.l.b16 %v164
    %v250 = vunpack.c.h.b16 %v164
    %v251 = vunpack.c.l.b16 %v165
    %v252 = vunpack.c.h.b16 %v165
    %v253 = vunpack.c.l.b16 %v166
    %v254 = vunpack.c.h.b16 %v166
    %v255 = vunpack.c.l.b16 %v167
    %v256 = vunpack.c.h.b16 %v167
    %v257 = vunpack.c.l.b16 %v168
    %v258 = vunpack.c.h.b16 %v168
    %v259 = vunpack.c.l.b16 %v169
    %v260 = vunpack.c.h.b16 %v169
    %v261 = vunpack.c.l.b16 %v170
    %v262 = vunpack.c.h.b16 %v170
    %v263 = vunpack.c.l.b16 %v171
    %v264 = vunpack.c.h.b16 %v171
    %v265 = vunpack.c.l.b16 %v172
    %v266 = vunpack.c.h.b16 %v172
    %v267 = vunpack.c.l.b16 %v173
    %v268 = vunpack.c.h.b16 %v173
    %v269 = vunpack.c.l.b16 %v174
    %v270 = vunpack.c.h.b16 %v174
    %v271 = vpack.c.b16 %v209, %v207
    %v272 = vpack.c.b16 %v210, %v208
    %v273 = vpack.c.b16 %v213, %v211
    %v274 = vpack.c.b16 %v214, %v212
    %v275 = vpack.c.b16 %v217, %v215
    %v276 = vpack.c.b16 %v218, %v216
    %v277 = vpack.c.b16 %v221, %v219
    %v278 = vpack.c.b16 %v222, %v220
    %v279 = vpack.c.b16 %v225, %v223
    %v280 = vpack.c.b16 %v226, %v224
    %v281 = vpack.c.b16 %v229, %v227
    %v282 = vpack.c.b16 %v230, %v228
    %v283 = vpack.c.b16 %v233, %v231
    %v284 = vpack.c.b16 %v234, %v232
    %v285 = vpack.c.b16 %v237, %v235
    %v286 = vpack.c.b16 %v238, %v236
    %v287 = vpack.c.b16 %v241, %v239
    %v288 = vpack.c.b16 %v242, %v240
    %v289 = vpack.c.b16 %v245, %v243
    %v290 = vpack.c.b16 %v246, %v244
    %v291 = vpack.c.b16 %v249, %v247
    %v292 = vpack.c.b16 %v250, %v248
    %v293 = vpack.c.b16 %v253, %v251
    %v294 = vpack.c.b16 %v254, %v252
    %v295 = vpack.c.b16 %v257, %v255
    %v296 = vpack.c.b16 %v258, %v256
    %v297 = vpack.c.b16 %v261, %v259
    %v298 = vpack.c.b16 %v262, %v260
    %v299 = vpack.c.b16 %v265, %v263
    %v300 = vpack.c.b16 %v266, %v264
    %v301 = vpack.c.b16 %v269, %v267
    %v302 = vpack.c.b16 %v270, %v268
    %335 = vmatprep.subr.bf16.mxu0 %v272
    %336 = vmatpush1.bf16.msra.mxu0 %v271
    %337 = vmatprep.subr.bf16.mxu0 %v274
    %338 = vmatpush1.bf16.msra.mxu0 %v273
    %339 = vmatprep.subr.bf16.mxu0 %v276
    %340 = vmatpush1.bf16.msra.mxu0 %v275
    %341 = vmatprep.subr.bf16.mxu0 %v278
    %342 = vmatpush1.bf16.msra.mxu0 %v277
    %343 = vmatprep.subr.bf16.mxu0 %v280
    %344 = vmatpush1.bf16.msra.mxu0 %v279
    %345 = vmatprep.subr.bf16.mxu0 %v282
    %346 = vmatpush1.bf16.msra.mxu0 %v281
    %347 = vmatprep.subr.bf16.mxu0 %v284
    %348 = vmatpush1.bf16.msra.mxu0 %v283
    %349 = vmatprep.subr.bf16.mxu0 %v286
    %350 = vmatpush1.bf16.msra.mxu0 %v285
    %351 = vmatprep.subr.bf16.mxu0 %v288
    %352 = vmatpush1.bf16.msra.mxu0 %v287
    %353 = vmatprep.subr.bf16.mxu0 %v290
    %354 = vmatpush1.bf16.msra.mxu0 %v289
    %355 = vmatprep.subr.bf16.mxu0 %v292
    %356 = vmatpush1.bf16.msra.mxu0 %v291
    %357 = vmatprep.subr.bf16.mxu0 %v294
    %358 = vmatpush1.bf16.msra.mxu0 %v293
    %359 = vmatprep.subr.bf16.mxu0 %v296
    %360 = vmatpush1.bf16.msra.mxu0 %v295
    %361 = vmatprep.subr.bf16.mxu0 %v298
    %362 = vmatpush1.bf16.msra.mxu0 %v297
    %363 = vmatprep.subr.bf16.mxu0 %v300
    %364 = vmatpush1.bf16.msra.mxu0 %v299
    %365 = vmatprep.subr.bf16.mxu0 %v302
    %366 = vmatpush1.bf16.msra.mxu0 %v301
    %367 = vmatprep.mubr.bf16.mxu0 %v140
    %368 = vmatmul.mubr.bf16.gmra.mrb[0].mxu0 %v139
    %v369 = vpop.f32.mrb[0].mxu0
    %v370 = vadd.f32 0.0, %v369
    %v371 = vpop.f32.mrb[0].mxu0
    %v372 = vadd.f32 0.0, %v371
    %v373 = vpop.f32.mrb[0].mxu0
    %v374 = vadd.f32 0.0, %v373
    %v375 = vpop.f32.mrb[0].mxu0
    %v376 = vadd.f32 0.0, %v375
    %377 = vmatprep.mubr.bf16.mxu0 %v142
    %378 = vmatmul.mubr.bf16.gmra.mrb[0].mxu0 %v141
    %v379 = vpop.f32.mrb[0].mxu0
    %v380 = vadd.f32 0.0, %v379
    %v381 = vpop.f32.mrb[0].mxu0
    %v382 = vadd.f32 0.0, %v381
    %v383 = vpop.f32.mrb[0].mxu0
    %v384 = vadd.f32 0.0, %v383
    %v385 = vpop.f32.mrb[0].mxu0
    %v386 = vadd.f32 0.0, %v385
    %387 = vdwg.mxu0
    %v388 = vpack.c.bf16 %v374, %v370
    %v389 = vpack.c.bf16 %v376, %v372
    %v390 = vpack.c.bf16 %v384, %v380
    %v391 = vpack.c.bf16 %v386, %v382
    %v396 = vunpack.c.l.b16 %v388
    %v397 = vunpack.c.l.b16 %v389
    %v398 = vunpack.c.h.b16 %v388
    %v399 = vunpack.c.h.b16 %v389
    %v400 = vunpack.c.l.b16 %v390
    %v401 = vunpack.c.l.b16 %v391
    %v402 = vunpack.c.h.b16 %v390
    %v403 = vunpack.c.h.b16 %v391
    %v404 = vpack.c.b16 %v397, %v396
    %v405 = vpack.c.b16 %v399, %v398
    %v406 = vpack.c.b16 %v401, %v400
    %v407 = vpack.c.b16 %v403, %v402
    %412 = vst [vmem:[#allocation9] sm:$0xff] %v404
    %413 = vst [vmem:[#allocation9 + $0x8] sm:$0xff] %v405
    %414 = vst [vmem:[#allocation9 + $0x10] sm:$0xff] %v406
    %415 = vst [vmem:[#allocation9 + $0x18] sm:$0xff] %v407
    // Predicated region
    $region30: #{llama3_forward.17} parent=1 // pred_check
      _
    $region31: #{llama3_forward.17} parent=1 // pred_check_branch
      %417 = sbr.rel (0) target = $region33
    $region32: #{llama3_forward.17} parent=1 // pred_region
      %s419 = ssub.s32 512, 512
      %420 = vsyncadd [#allocation5], %s419
      %s421 = sshll.u32 [#allocation9], 4
      %s422 = int_to_ptr.vmem [resolvable:$true] %s421
      %427 = dma.vmem_to_hbm [thread:$0]  %s422, 512, %s3, [#allocation5], 128, 128, 8
    $region33: #{llama3_forward.17} parent=1 // pred_fallthru
      _
    // Predicated region
    $region34: #{llama3_forward.17} parent=1 // pred_check
      _
    $region35: #{llama3_forward.17} parent=1 // pred_check_branch
      %429 = sbr.rel (0) target = $region37
    $region36: #{llama3_forward.17} parent=1 // pred_region
      %430 = dma.done [#allocation5], 512
    $region37: #{llama3_forward.17} parent=1 // pred_fallthru
      _
    %431 = vsyncpa [#allocation4], 1
    %432 = vsyncpa [#allocation7], 1
    %433 = vsyncpa [#allocation5], 1

// kernel: llama3_forward.12
$region0: #{llama3_forward.12}
  #allocation0 [shape = 'u32[]', space=smem, size = 0x4, offset = 0x4, fixed_abs, tag = 'smem constant byte address 0x4 - core index']
  #allocation1 [shape = 'u32[144,128]{1,0:T(1,128)}', space=vmem, size = 0x12000, scoped, tag = 'internal scratch']
  #allocation2 [shape = 'f32[32,256]{1,0:T(8,128)}', space=vmem, size = 0x8000, scoped, tag = 'scratch operand']
  #allocation3 [shape = 'bf16[32,256]{1,0:T(16,128)(2,1)}', space=vmem, size = 0x4000, scoped, tag = 'scratch operand']
  %s0 = inlined_call_operand.hbm [shape: bf16[32,256], index: 0, kind: input, shape index: {}]
  %s1 = inlined_call_operand.hbm [shape: f32[1,256], index: 1, kind: input, shape index: {}]
  %s2 = inlined_call_operand.hbm [shape: bf16[256,512], index: 2, kind: input, shape index: {}]
  %s3 = inlined_call_operand.hbm [shape: bf16[256,512], index: 3, kind: input, shape index: {}]
  %s4 = inlined_call_operand.hbm [shape: bf16[512,256], index: 4, kind: input, shape index: {}]
  %s5 = inlined_call_operand.hbm [shape: bf16[32,256], index: 5, kind: output, shape index: {}]
  %s6 = sld [smem:[#allocation0]]
  $region58: #{llama3_forward.12} parent=0
    _
  %s8 = ssub.s32 1, %s6
  %s9 = scalar_select 0, %s8, %s6
  $region1: #{llama3_forward.12} parent=0
    #allocation4 [shape = 'u8[16384]{0}', space=vmem, size = 0x4000, scoped, tag = 'input window, operand 0, single buffered']
    #allocation5 [shape = 's32[1]{0}', space=sflag, size = 0x4, scoped, tag = 'scoped memory for llama3_forward.12']
    #allocation6 [shape = 's32[1]{0}', space=sflag, size = 0x4, scoped, tag = 'scoped memory for llama3_forward.12']
    #allocation7 [shape = 'u8[1024]{0}', space=vmem, size = 0x400, scoped, tag = 'input window, operand 1, single buffered']
    #allocation8 [shape = 's32[1]{0}', space=sflag, size = 0x4, scoped, tag = 'scoped memory for llama3_forward.12']
    #allocation9 [shape = 'u8[262144]{0}', space=vmem, size = 0x40000, scoped, tag = 'input window, operand 2, single buffered']
    #allocation10 [shape = 'u8[262144]{0}', space=vmem, size = 0x40000, scoped, tag = 'input window, operand 3, single buffered']
    #allocation11 [shape = 's32[1]{0}', space=sflag, size = 0x4, scoped, tag = 'scoped memory for llama3_forward.12']
    #allocation12 [shape = 'u8[262144]{0}', space=vmem, size = 0x40000, scoped, tag = 'input window, operand 4, single buffered']
    #allocation13 [shape = 'u8[16384]{0}', space=vmem, size = 0x4000, scoped, tag = 'output window, operand 0, single buffered']
    %10 = vsyncpa [#allocation5], 0
    %11 = vsyncpa [#allocation8], 0
    %12 = vsyncpa [#allocation11], 0
    %13 = vsyncpa [#allocation6], 0
    // Predicated region
    $region2: #{llama3_forward.12} parent=1 // pred_check
      _
    $region3: #{llama3_forward.12} parent=1 // pred_check_branch
      %15 = sbr.rel (0) target = $region5
    $region4: #{llama3_forward.12} parent=1 // pred_region
      %s17 = ssub.s32 512, 512
      %18 = vsyncadd [#allocation5], %s17
      %s19 = sshll.u32 [#allocation4], 4
      %s20 = int_to_ptr.vmem [resolvable:$true] %s19
      %25 = dma.hbm_to_vmem [thread:$0]  %s0, 512, %s20, [#allocation5], 128, 128, 8
    $region5: #{llama3_forward.12} parent=1 // pred_fallthru
      _
    // Predicated region
    $region6: #{llama3_forward.12} parent=1 // pred_check
      _
    $region7: #{llama3_forward.12} parent=1 // pred_check_branch
      %27 = sbr.rel (0) target = $region9
    $region8: #{llama3_forward.12} parent=1 // pred_region
      %s29 = ssub.s32 32, 32
      %30 = vsyncadd [#allocation8], %s29
      %s32 = sshll.u32 [#allocation7], 4
      %s33 = int_to_ptr.vmem [resolvable:$true] %s32
      %35 = dma.hbm_to_vmem [thread:$0]  %s1, 32, %s33, [#allocation8]
    $region9: #{llama3_forward.12} parent=1 // pred_fallthru
      _
    // Predicated region
    $region10: #{llama3_forward.12} parent=1 // pred_check
      _
    $region11: #{llama3_forward.12} parent=1 // pred_check_branch
      %37 = sbr.rel (0) target = $region13
    $region12: #{llama3_forward.12} parent=1 // pred_region
      %s39 = ssub.s32 8192, 8192
      %40 = vsyncadd [#allocation8], %s39
      %s41 = sshll.u32 [#allocation9], 4
      %s42 = int_to_ptr.vmem [resolvable:$true] %s41
      %47 = dma.hbm_to_vmem [thread:$0]  %s2, 8192, %s42, [#allocation8], 256, 256, 16
    $region13: #{llama3_forward.12} parent=1 // pred_fallthru
      _
    // Predicated region
    $region14: #{llama3_forward.12} parent=1 // pred_check
      _
    $region15: #{llama3_forward.12} parent=1 // pred_check_branch
      %49 = sbr.rel (0) target = $region17
    $region16: #{llama3_forward.12} parent=1 // pred_region
      %s51 = ssub.s32 8192, 8192
      %52 = vsyncadd [#allocation11], %s51
      %s53 = sshll.u32 [#allocation10], 4
      %s54 = int_to_ptr.vmem [resolvable:$true] %s53
      %59 = dma.hbm_to_vmem [thread:$0]  %s3, 8192, %s54, [#allocation11], 256, 256, 16
    $region17: #{llama3_forward.12} parent=1 // pred_fallthru
      _
    // Predicated region
    $region18: #{llama3_forward.12} parent=1 // pred_check
      _
    $region19: #{llama3_forward.12} parent=1 // pred_check_branch
      %61 = sbr.rel (0) target = $region21
    $region20: #{llama3_forward.12} parent=1 // pred_region
      %s63 = ssub.s32 8192, 8192
      %64 = vsyncadd [#allocation11], %s63
      %s65 = sshll.u32 [#allocation12], 4
      %s66 = int_to_ptr.vmem [resolvable:$true] %s65
      %71 = dma.hbm_to_vmem [thread:$0]  %s4, 8192, %s66, [#allocation11], 128, 128, 8
    $region21: #{llama3_forward.12} parent=1 // pred_fallthru
      _
    // Predicated region
    $region22: #{llama3_forward.12} parent=1 // pred_check
      _
    $region23: #{llama3_forward.12} parent=1 // pred_check_branch
      %73 = sbr.rel (0) target = $region25
    $region24: #{llama3_forward.12} parent=1 // pred_region
      %74 = dma.done [#allocation5], 512
    $region25: #{llama3_forward.12} parent=1 // pred_fallthru
      _
    // Predicated region
    $region26: #{llama3_forward.12} parent=1 // pred_check
      _
    $region27: #{llama3_forward.12} parent=1 // pred_check_branch
      %76 = sbr.rel (0) target = $region29
    $region28: #{llama3_forward.12} parent=1 // pred_region
      %77 = dma.done [#allocation8], 32
    $region29: #{llama3_forward.12} parent=1 // pred_fallthru
      _
    // Predicated region
    $region30: #{llama3_forward.12} parent=1 // pred_check
      _
    $region31: #{llama3_forward.12} parent=1 // pred_check_branch
      %79 = sbr.rel (0) target = $region33
    $region32: #{llama3_forward.12} parent=1 // pred_region
      %80 = dma.done [#allocation8], 8192
    $region33: #{llama3_forward.12} parent=1 // pred_fallthru
      _
    // Predicated region
    $region34: #{llama3_forward.12} parent=1 // pred_check
      _
    $region35: #{llama3_forward.12} parent=1 // pred_check_branch
      %82 = sbr.rel (0) target = $region37
    $region36: #{llama3_forward.12} parent=1 // pred_region
      %83 = dma.done [#allocation11], 8192
    $region37: #{llama3_forward.12} parent=1 // pred_fallthru
      _
    // Predicated region
    $region38: #{llama3_forward.12} parent=1 // pred_check
      _
    $region39: #{llama3_forward.12} parent=1 // pred_check_branch
      %85 = sbr.rel (0) target = $region41
    $region40: #{llama3_forward.12} parent=1 // pred_region
      %86 = dma.done [#allocation11], 8192
    $region41: #{llama3_forward.12} parent=1 // pred_fallthru
      _
    %p87 = scmp.eq.s32.totalorder 0, 0
    // Predicated region
    $region42: #{llama3_forward.12} parent=1 // pred_check
      %p88 = pneg %p87
    $region43: #{llama3_forward.12} parent=1 // pred_check_branch
      %90 = sbr.rel (%p88) target = $region45
    $region44: #{llama3_forward.12} parent=1 // pred_region
      %91 = vst [vmem:[#allocation2] sm:$0xff] 0.0
      %92 = vst [vmem:[#allocation2 + $0x8] sm:$0xff] 0.0
      %93 = vst [vmem:[#allocation2 + $0x10] sm:$0xff] 0.0
      %94 = vst [vmem:[#allocation2 + $0x18] sm:$0xff] 0.0
      %95 = vst [vmem:[#allocation2 + $0x20] sm:$0xff] 0.0
      %96 = vst [vmem:[#allocation2 + $0x28] sm:$0xff] 0.0
      %97 = vst [vmem:[#allocation2 + $0x30] sm:$0xff] 0.0
      %98 = vst [vmem:[#allocation2 + $0x38] sm:$0xff] 0.0
      %v99 = vld [vmem:[#allocation4] sm:$0xff]
      %v100 = vld [vmem:[#allocation4 + $0x8] sm:$0xff]
      %v101 = vld [vmem:[#allocation4 + $0x10] sm:$0xff]
      %v102 = vld [vmem:[#allocation4 + $0x18] sm:$0xff]
      %v103 = vunpack.c.l.bf16 %v99
      %v104 = vunpack.c.h.bf16 %v99
      %v105 = vunpack.c.l.bf16 %v100
      %v106 = vunpack.c.h.bf16 %v100
      %v107 = vunpack.c.l.bf16 %v101
      %v108 = vunpack.c.h.bf16 %v101
      %v109 = vunpack.c.l.bf16 %v102
      %v110 = vunpack.c.h.bf16 %v102
      %v111 = vmul.f32 %v103, %v103
      %v112 = vmul.f32 %v104, %v104
      %v113 = vmul.f32 %v105, %v105
      %v114 = vmul.f32 %v106, %v106
      %v115 = vmul.f32 %v107, %v107
      %v116 = vmul.f32 %v108, %v108
      %v117 = vmul.f32 %v109, %v109
      %v118 = vmul.f32 %v110, %v110
      %v119 = vadd.f32 %v111, %v112
      %120 = vadd.xlane.f32.xlu0 %v119
      %v121 = vpop.xlane.xlu0 %120
      %v122 = vadd.f32 %v113, %v114
      %123 = vadd.xlane.f32.xlu0 %v122
      %v124 = vpop.xlane.xlu0 %123
      %v125 = vadd.f32 %v115, %v116
      %126 = vadd.xlane.f32.xlu0 %v125
      %v127 = vpop.xlane.xlu0 %126
      %v128 = vadd.f32 %v117, %v118
      %129 = vadd.xlane.f32.xlu0 %v128
      %v130 = vpop.xlane.xlu0 %129
      %v131 = vrcp.pop 256.0
      %v132 = vmul.f32 %v121, %v131
      %v133 = vmul.f32 %v124, %v131
      %v134 = vmul.f32 %v127, %v131
      %v135 = vmul.f32 %v130, %v131
      %v136 = vadd.f32 %v132, 1e-05
      %v137 = vadd.f32 %v133, 1e-05
      %v138 = vadd.f32 %v134, 1e-05
      %v139 = vadd.f32 %v135, 1e-05
      %v140 = vrsqrt.pop %v136
      %v141 = vrsqrt.pop %v137
      %v142 = vrsqrt.pop %v138
      %v143 = vrsqrt.pop %v139
      %v144 = vmul.f32 %v103, %v140
      %v145 = vmul.f32 %v104, %v140
      %v146 = vmul.f32 %v105, %v141
      %v147 = vmul.f32 %v106, %v141
      %v148 = vmul.f32 %v107, %v142
      %v149 = vmul.f32 %v108, %v142
      %v150 = vmul.f32 %v109, %v143
      %v151 = vmul.f32 %v110, %v143
      %v152 = vld [vmem:[#allocation7] sm:$0x3]
      %v154 = vlaneseq
      %v155 = vshrl.u32 %v154, 7
      %v156 = vsub.s32 0, %v155
      %v157 = vrot.slane %v152, %v156
      %v158 = vlaneseq
      %v159 = vshrl.u32 %v158, 7
      %v160 = vsub.s32 1, %v159
      %v161 = vrot.slane %v152, %v160
      %v164 = vmul.f32 %v144, %v157
      %v165 = vmul.f32 %v145, %v161
      %v166 = vmul.f32 %v146, %v157
      %v167 = vmul.f32 %v147, %v161
      %v168 = vmul.f32 %v148, %v157
      %v169 = vmul.f32 %v149, %v161
      %v170 = vmul.f32 %v150, %v157
      %v171 = vmul.f32 %v151, %v161
      %v172 = vpack.c.bf16 %v166, %v164
      %v173 = vpack.c.bf16 %v167, %v165
      %v174 = vpack.c.bf16 %v170, %v168
      %v175 = vpack.c.bf16 %v171, %v169
      %176 = vst [vmem:[#allocation3] sm:$0xff] %v172
      %177 = vst [vmem:[#allocation3 + $0x8] sm:$0xff] %v173
      %178 = vst [vmem:[#allocation3 + $0x10] sm:$0xff] %v174
      %179 = vst [vmem:[#allocation3 + $0x18] sm:$0xff] %v175
    $region45: #{llama3_forward.12} parent=1 // pred_fallthru
      _
    %v180 = vld [vmem:[#allocation3] sm:$0xff]
    %v181 = vld [vmem:[#allocation3 + $0x8] sm:$0xff]
    %v182 = vld [vmem:[#allocation3 + $0x10] sm:$0xff]
    %v183 = vld [vmem:[#allocation3 + $0x18] sm:$0xff]
    %v184 = vld [vmem:[#allocation9] sm:$0xff]
    %v185 = vld [vmem:[#allocation9 + $0x8] sm:$0xff]
    %v186 = vld [vmem:[#allocation9 + $0x10] sm:$0xff]
    %v187 = vld [vmem:[#allocation9 + $0x18] sm:$0xff]
    %v188 = vld [vmem:[#allocation9 + $0x20] sm:$0xff]
    %v189 = vld [vmem:[#allocation9 + $0x28] sm:$0xff]
    %v190 = vld [vmem:[#allocation9 + $0x30] sm:$0xff]
    %v191 = vld [vmem:[#allocation9 + $0x38] sm:$0xff]
    %v192 = vld [vmem:[#allocation9 + $0x40] sm:$0xff]
    %v193 = vld [vmem:[#allocation9 + $0x48] sm:$0xff]
    %v194 = vld [vmem:[#allocation9 + $0x50] sm:$0xff]
    %v195 = vld [vmem:[#allocation9 + $0x58] sm:$0xff]
    %v196 = vld [vmem:[#allocation9 + $0x60] sm:$0xff]
    %v197 = vld [vmem:[#allocation9 + $0x68] sm:$0xff]
    %v198 = vld [vmem:[#allocation9 + $0x70] sm:$0xff]
    %v199 = vld [vmem:[#allocation9 + $0x78] sm:$0xff]
    %v200 = vld [vmem:[#allocation9 + $0x80] sm:$0xff]
    %v201 = vld [vmem:[#allocation9 + $0x88] sm:$0xff]
    %v202 = vld [vmem:[#allocation9 + $0x90] sm:$0xff]
    %v203 = vld [vmem:[#allocation9 + $0x98] sm:$0xff]
    %v204 = vld [vmem:[#allocation9 + $0xa0] sm:$0xff]
    %v205 = vld [vmem:[#allocation9 + $0xa8] sm:$0xff]
    %v206 = vld [vmem:[#allocation9 + $0xb0] sm:$0xff]
    %v207 = vld [vmem:[#allocation9 + $0xb8] sm:$0xff]
    %v208 = vld [vmem:[#allocation9 + $0xc0] sm:$0xff]
    %v209 = vld [vmem:[#allocation9 + $0xc8] sm:$0xff]
    %v210 = vld [vmem:[#allocation9 + $0xd0] sm:$0xff]
    %v211 = vld [vmem:[#allocation9 + $0xd8] sm:$0xff]
    %v212 = vld [vmem:[#allocation9 + $0xe0] sm:$0xff]
    %v213 = vld [vmem:[#allocation9 + $0xe8] sm:$0xff]
    %v214 = vld [vmem:[#allocation9 + $0xf0] sm:$0xff]
    %v215 = vld [vmem:[#allocation9 + $0xf8] sm:$0xff]
    %v216 = vld [vmem:[#allocation9 + $0x100] sm:$0xff]
    %v217 = vld [vmem:[#allocation9 + $0x108] sm:$0xff]
    %v218 = vld [vmem:[#allocation9 + $0x110] sm:$0xff]
    %v219 = vld [vmem:[#allocation9 + $0x118] sm:$0xff]
    %v220 = vld [vmem:[#allocation9 + $0x120] sm:$0xff]
    %v221 = vld [vmem:[#allocation9 + $0x128] sm:$0xff]
    %v222 = vld [vmem:[#allocation9 + $0x130] sm:$0xff]
    %v223 = vld [vmem:[#allocation9 + $0x138] sm:$0xff]
    %v224 = vld [vmem:[#allocation9 + $0x140] sm:$0xff]
    %v225 = vld [vmem:[#allocation9 + $0x148] sm:$0xff]
    %v226 = vld [vmem:[#allocation9 + $0x150] sm:$0xff]
    %v227 = vld [vmem:[#allocation9 + $0x158] sm:$0xff]
    %v228 = vld [vmem:[#allocation9 + $0x160] sm:$0xff]
    %v229 = vld [vmem:[#allocation9 + $0x168] sm:$0xff]
    %v230 = vld [vmem:[#allocation9 + $0x170] sm:$0xff]
    %v231 = vld [vmem:[#allocation9 + $0x178] sm:$0xff]
    %v232 = vld [vmem:[#allocation9 + $0x180] sm:$0xff]
    %v233 = vld [vmem:[#allocation9 + $0x188] sm:$0xff]
    %v234 = vld [vmem:[#allocation9 + $0x190] sm:$0xff]
    %v235 = vld [vmem:[#allocation9 + $0x198] sm:$0xff]
    %v236 = vld [vmem:[#allocation9 + $0x1a0] sm:$0xff]
    %v237 = vld [vmem:[#allocation9 + $0x1a8] sm:$0xff]
    %v238 = vld [vmem:[#allocation9 + $0x1b0] sm:$0xff]
    %v239 = vld [vmem:[#allocation9 + $0x1b8] sm:$0xff]
    %v240 = vld [vmem:[#allocation9 + $0x1c0] sm:$0xff]
    %v241 = vld [vmem:[#allocation9 + $0x1c8] sm:$0xff]
    %v242 = vld [vmem:[#allocation9 + $0x1d0] sm:$0xff]
    %v243 = vld [vmem:[#allocation9 + $0x1d8] sm:$0xff]
    %v244 = vld [vmem:[#allocation9 + $0x1e0] sm:$0xff]
    %v245 = vld [vmem:[#allocation9 + $0x1e8] sm:$0xff]
    %v246 = vld [vmem:[#allocation9 + $0x1f0] sm:$0xff]
    %v247 = vld [vmem:[#allocation9 + $0x1f8] sm:$0xff]
    %v312 = vunpack.c.l.b16 %v184
    %v313 = vunpack.c.h.b16 %v184
    %v314 = vunpack.c.l.b16 %v185
    %v315 = vunpack.c.h.b16 %v185
    %v316 = vunpack.c.l.b16 %v186
    %v317 = vunpack.c.h.b16 %v186
    %v318 = vunpack.c.l.b16 %v187
    %v319 = vunpack.c.h.b16 %v187
    %v320 = vunpack.c.l.b16 %v188
    %v321 = vunpack.c.h.b16 %v188
    %v322 = vunpack.c.l.b16 %v189
    %v323 = vunpack.c.h.b16 %v189
    %v324 = vunpack.c.l.b16 %v190
    %v325 = vunpack.c.h.b16 %v190
    %v326 = vunpack.c.l.b16 %v191
    %v327 = vunpack.c.h.b16 %v191
    %v328 = vunpack.c.l.b16 %v192
    %v329 = vunpack.c.h.b16 %v192
    %v330 = vunpack.c.l.b16 %v193
    %v331 = vunpack.c.h.b16 %v193
    %v332 = vunpack.c.l.b16 %v194
    %v333 = vunpack.c.h.b16 %v194
    %v334 = vunpack.c.l.b16 %v195
    %v335 = vunpack.c.h.b16 %v195
    %v336 = vunpack.c.l.b16 %v196
    %v337 = vunpack.c.h.b16 %v196
    %v338 = vunpack.c.l.b16 %v197
    %v339 = vunpack.c.h.b16 %v197
    %v340 = vunpack.c.l.b16 %v198
    %v341 = vunpack.c.h.b16 %v198
    %v342 = vunpack.c.l.b16 %v199
    %v343 = vunpack.c.h.b16 %v199
    %v344 = vunpack.c.l.b16 %v200
    %v345 = vunpack.c.h.b16 %v200
    %v346 = vunpack.c.l.b16 %v201
    %v347 = vunpack.c.h.b16 %v201
    %v348 = vunpack.c.l.b16 %v202
    %v349 = vunpack.c.h.b16 %v202
    %v350 = vunpack.c.l.b16 %v203
    %v351 = vunpack.c.h.b16 %v203
    %v352 = vunpack.c.l.b16 %v204
    %v353 = vunpack.c.h.b16 %v204
    %v354 = vunpack.c.l.b16 %v205
    %v355 = vunpack.c.h.b16 %v205
    %v356 = vunpack.c.l.b16 %v206
    %v357 = vunpack.c.h.b16 %v206
    %v358 = vunpack.c.l.b16 %v207
    %v359 = vunpack.c.h.b16 %v207
    %v360 = vunpack.c.l.b16 %v208
    %v361 = vunpack.c.h.b16 %v208
    %v362 = vunpack.c.l.b16 %v209
    %v363 = vunpack.c.h.b16 %v209
    %v364 = vunpack.c.l.b16 %v210
    %v365 = vunpack.c.h.b16 %v210
    %v366 = vunpack.c.l.b16 %v211
    %v367 = vunpack.c.h.b16 %v211
    %v368 = vunpack.c.l.b16 %v212
    %v369 = vunpack.c.h.b16 %v212
    %v370 = vunpack.c.l.b16 %v213
    %v371 = vunpack.c.h.b16 %v213
    %v372 = vunpack.c.l.b16 %v214
    %v373 = vunpack.c.h.b16 %v214
    %v374 = vunpack.c.l.b16 %v215
    %v375 = vunpack.c.h.b16 %v215
    %v376 = vunpack.c.l.b16 %v216
    %v377 = vunpack.c.h.b16 %v216
    %v378 = vunpack.c.l.b16 %v217
    %v379 = vunpack.c.h.b16 %v217
    %v380 = vunpack.c.l.b16 %v218
    %v381 = vunpack.c.h.b16 %v218
    %v382 = vunpack.c.l.b16 %v219
    %v383 = vunpack.c.h.b16 %v219
    %v384 = vunpack.c.l.b16 %v220
    %v385 = vunpack.c.h.b16 %v220
    %v386 = vunpack.c.l.b16 %v221
    %v387 = vunpack.c.h.b16 %v221
    %v388 = vunpack.c.l.b16 %v222
    %v389 = vunpack.c.h.b16 %v222
    %v390 = vunpack.c.l.b16 %v223
    %v391 = vunpack.c.h.b16 %v223
    %v392 = vunpack.c.l.b16 %v224
    %v393 = vunpack.c.h.b16 %v224
    %v394 = vunpack.c.l.b16 %v225
    %v395 = vunpack.c.h.b16 %v225
    %v396 = vunpack.c.l.b16 %v226
    %v397 = vunpack.c.h.b16 %v226
    %v398 = vunpack.c.l.b16 %v227
    %v399 = vunpack.c.h.b16 %v227
    %v400 = vunpack.c.l.b16 %v228
    %v401 = vunpack.c.h.b16 %v228
    %v402 = vunpack.c.l.b16 %v229
    %v403 = vunpack.c.h.b16 %v229
    %v404 = vunpack.c.l.b16 %v230
    %v405 = vunpack.c.h.b16 %v230
    %v406 = vunpack.c.l.b16 %v231
    %v407 = vunpack.c.h.b16 %v231
    %v408 = vunpack.c.l.b16 %v232
    %v409 = vunpack.c.h.b16 %v232
    %v410 = vunpack.c.l.b16 %v233
    %v411 = vunpack.c.h.b16 %v233
    %v412 = vunpack.c.l.b16 %v234
    %v413 = vunpack.c.h.b16 %v234
    %v414 = vunpack.c.l.b16 %v235
    %v415 = vunpack.c.h.b16 %v235
    %v416 = vunpack.c.l.b16 %v236
    %v417 = vunpack.c.h.b16 %v236
    %v418 = vunpack.c.l.b16 %v237
    %v419 = vunpack.c.h.b16 %v237
    %v420 = vunpack.c.l.b16 %v238
    %v421 = vunpack.c.h.b16 %v238
    %v422 = vunpack.c.l.b16 %v239
    %v423 = vunpack.c.h.b16 %v239
    %v424 = vunpack.c.l.b16 %v240
    %v425 = vunpack.c.h.b16 %v240
    %v426 = vunpack.c.l.b16 %v241
    %v427 = vunpack.c.h.b16 %v241
    %v428 = vunpack.c.l.b16 %v242
    %v429 = vunpack.c.h.b16 %v242
    %v430 = vunpack.c.l.b16 %v243
    %v431 = vunpack.c.h.b16 %v243
    %v432 = vunpack.c.l.b16 %v244
    %v433 = vunpack.c.h.b16 %v244
    %v434 = vunpack.c.l.b16 %v245
    %v435 = vunpack.c.h.b16 %v245
    %v436 = vunpack.c.l.b16 %v246
    %v437 = vunpack.c.h.b16 %v246
    %v438 = vunpack.c.l.b16 %v247
    %v439 = vunpack.c.h.b16 %v247
    %v440 = vpack.c.b16 %v316, %v312
    %v441 = vpack.c.b16 %v317, %v313
    %v442 = vpack.c.b16 %v318, %v314
    %v443 = vpack.c.b16 %v319, %v315
    %v444 = vpack.c.b16 %v324, %v320
    %v445 = vpack.c.b16 %v325, %v321
    %v446 = vpack.c.b16 %v326, %v322
    %v447 = vpack.c.b16 %v327, %v323
    %v448 = vpack.c.b16 %v332, %v328
    %v449 = vpack.c.b16 %v333, %v329
    %v450 = vpack.c.b16 %v334, %v330
    %v451 = vpack.c.b16 %v335, %v331
    %v452 = vpack.c.b16 %v340, %v336
    %v453 = vpack.c.b16 %v341, %v337
    %v454 = vpack.c.b16 %v342, %v338
    %v455 = vpack.c.b16 %v343, %v339
    %v456 = vpack.c.b16 %v348, %v344
    %v457 = vpack.c.b16 %v349, %v345
    %v458 = vpack.c.b16 %v350, %v346
    %v459 = vpack.c.b16 %v351, %v347
    %v460 = vpack.c.b16 %v356, %v352
    %v461 = vpack.c.b16 %v357, %v353
    %v462 = vpack.c.b16 %v358, %v354
    %v463 = vpack.c.b16 %v359, %v355
    %v464 = vpack.c.b16 %v364, %v360
    %v465 = vpack.c.b16 %v365, %v361
    %v466 = vpack.c.b16 %v366, %v362
    %v467 = vpack.c.b16 %v367, %v363
    %v468 = vpack.c.b16 %v372, %v368
    %v469 = vpack.c.b16 %v373, %v369
    %v470 = vpack.c.b16 %v374, %v370
    %v471 = vpack.c.b16 %v375, %v371
    %v472 = vpack.c.b16 %v380, %v376
    %v473 = vpack.c.b16 %v381, %v377
    %v474 = vpack.c.b16 %v382, %v378
    %v475 = vpack.c.b16 %v383, %v379
    %v476 = vpack.c.b16 %v388, %v384
    %v477 = vpack.c.b16 %v389, %v385
    %v478 = vpack.c.b16 %v390, %v386
    %v479 = vpack.c.b16 %v391, %v387
    %v480 = vpack.c.b16 %v396, %v392
    %v481 = vpack.c.b16 %v397, %v393
    %v482 = vpack.c.b16 %v398, %v394
    %v483 = vpack.c.b16 %v399, %v395
    %v484 = vpack.c.b16 %v404, %v400
    %v485 = vpack.c.b16 %v405, %v401
    %v486 = vpack.c.b16 %v406, %v402
    %v487 = vpack.c.b16 %v407, %v403
    %v488 = vpack.c.b16 %v412, %v408
    %v489 = vpack.c.b16 %v413, %v409
    %v490 = vpack.c.b16 %v414, %v410
    %v491 = vpack.c.b16 %v415, %v411
    %v492 = vpack.c.b16 %v420, %v416
    %v493 = vpack.c.b16 %v421, %v417
    %v494 = vpack.c.b16 %v422, %v418
    %v495 = vpack.c.b16 %v423, %v419
    %v496 = vpack.c.b16 %v428, %v424
    %v497 = vpack.c.b16 %v429, %v425
    %v498 = vpack.c.b16 %v430, %v426
    %v499 = vpack.c.b16 %v431, %v427
    %v500 = vpack.c.b16 %v436, %v432
    %v501 = vpack.c.b16 %v437, %v433
    %v502 = vpack.c.b16 %v438, %v434
    %v503 = vpack.c.b16 %v439, %v435
    %568 = vmatprep.subr.bf16.mxu0 %v441
    %569 = vmatpush1.bf16.msra.mxu0 %v440
    %570 = vmatprep.subr.bf16.mxu0 %v445
    %571 = vmatpush1.bf16.msra.mxu0 %v444
    %572 = vmatprep.subr.bf16.mxu0 %v449
    %573 = vmatpush1.bf16.msra.mxu0 %v448
    %574 = vmatprep.subr.bf16.mxu0 %v453
    %575 = vmatpush1.bf16.msra.mxu0 %v452
    %576 = vmatprep.subr.bf16.mxu0 %v457
    %577 = vmatpush1.bf16.msra.mxu0 %v456
    %578 = vmatprep.subr.bf16.mxu0 %v461
    %579 = vmatpush1.bf16.msra.mxu0 %v460
    %580 = vmatprep.subr.bf16.mxu0 %v465
    %581 = vmatpush1.bf16.msra.mxu0 %v464
    %582 = vmatprep.subr.bf16.mxu0 %v469
    %583 = vmatpush1.bf16.msra.mxu0 %v468
    %584 = vmatprep.subr.bf16.mxu0 %v473
    %585 = vmatpush1.bf16.msra.mxu0 %v472
    %586 = vmatprep.subr.bf16.mxu0 %v477
    %587 = vmatpush1.bf16.msra.mxu0 %v476
    %588 = vmatprep.subr.bf16.mxu0 %v481
    %589 = vmatpush1.bf16.msra.mxu0 %v480
    %590 = vmatprep.subr.bf16.mxu0 %v485
    %591 = vmatpush1.bf16.msra.mxu0 %v484
    %592 = vmatprep.subr.bf16.mxu0 %v489
    %593 = vmatpush1.bf16.msra.mxu0 %v488
    %594 = vmatprep.subr.bf16.mxu0 %v493
    %595 = vmatpush1.bf16.msra.mxu0 %v492
    %596 = vmatprep.subr.bf16.mxu0 %v497
    %597 = vmatpush1.bf16.msra.mxu0 %v496
    %598 = vmatprep.subr.bf16.mxu0 %v501
    %599 = vmatpush1.bf16.msra.mxu0 %v500
    %600 = vmatprep.mubr.bf16.mxu0 %v181
    %601 = vmatmul.mubr.bf16.gmra.mrb[0].mxu0 %v180
    %v602 = vpop.f32.mrb[0].mxu0
    %v603 = vadd.f32 0.0, %v602
    %v604 = vpop.f32.mrb[0].mxu0
    %v605 = vadd.f32 0.0, %v604
    %v606 = vpop.f32.mrb[0].mxu0
    %v607 = vadd.f32 0.0, %v606
    %v608 = vpop.f32.mrb[0].mxu0
    %v609 = vadd.f32 0.0, %v608
    %610 = vmatprep.mubr.bf16.mxu0 %v183
    %611 = vmatmul.mubr.bf16.gmra.mrb[0].mxu0 %v182
    %v612 = vpop.f32.mrb[0].mxu0
    %v613 = vadd.f32 0.0, %v612
    %v614 = vpop.f32.mrb[0].mxu0
    %v615 = vadd.f32 0.0, %v614
    %v616 = vpop.f32.mrb[0].mxu0
    %v617 = vadd.f32 0.0, %v616
    %v618 = vpop.f32.mrb[0].mxu0
    %v619 = vadd.f32 0.0, %v618
    %620 = vdwg.mxu0
    %621 = vmatprep.subr.bf16.mxu0 %v443
    %622 = vmatpush1.bf16.msra.mxu0 %v442
    %623 = vmatprep.subr.bf16.mxu0 %v447
    %624 = vmatpush1.bf16.msra.mxu0 %v446
    %625 = vmatprep.subr.bf16.mxu0 %v451
    %626 = vmatpush1.bf16.msra.mxu0 %v450
    %627 = vmatprep.subr.bf16.mxu0 %v455
    %628 = vmatpush1.bf16.msra.mxu0 %v454
    %629 = vmatprep.subr.bf16.mxu0 %v459
    %630 = vmatpush1.bf16.msra.mxu0 %v458
    %631 = vmatprep.subr.bf16.mxu0 %v463
    %632 = vmatpush1.bf16.msra.mxu0 %v462
    %633 = vmatprep.subr.bf16.mxu0 %v467
    %634 = vmatpush1.bf16.msra.mxu0 %v466
    %635 = vmatprep.subr.bf16.mxu0 %v471
    %636 = vmatpush1.bf16.msra.mxu0 %v470
    %637 = vmatprep.subr.bf16.mxu0 %v475
    %638 = vmatpush1.bf16.msra.mxu0 %v474
    %639 = vmatprep.subr.bf16.mxu0 %v479
    %640 = vmatpush1.bf16.msra.mxu0 %v478
    %641 = vmatprep.subr.bf16.mxu0 %v483
    %642 = vmatpush1.bf16.msra.mxu0 %v482
    %643 = vmatprep.subr.bf16.mxu0 %v487
    %644 = vmatpush1.bf16.msra.mxu0 %v486
    %645 = vmatprep.subr.bf16.mxu0 %v491
    %646 = vmatpush1.bf16.msra.mxu0 %v490
    %647 = vmatprep.subr.bf16.mxu0 %v495
    %648 = vmatpush1.bf16.msra.mxu0 %v494
    %649 = vmatprep.subr.bf16.mxu0 %v499
    %650 = vmatpush1.bf16.msra.mxu0 %v498
    %651 = vmatprep.subr.bf16.mxu0 %v503
    %652 = vmatpush1.bf16.msra.mxu0 %v502
    %653 = vmatprep.mubr.bf16.mxu0 %v181
    %654 = vmatmul.mubr.bf16.gmra.mrb[0].mxu0 %v180
    %v655 = vpop.f32.mrb[0].mxu0
    %v656 = vadd.f32 0.0, %v655
    %v657 = vpop.f32.mrb[0].mxu0
    %v658 = vadd.f32 0.0, %v657
    %v659 = vpop.f32.mrb[0].mxu0
    %v660 = vadd.f32 0.0, %v659
    %v661 = vpop.f32.mrb[0].mxu0
    %v662 = vadd.f32 0.0, %v661
    %663 = vmatprep.mubr.bf16.mxu0 %v183
    %664 = vmatmul.mubr.bf16.gmra.mrb[0].mxu0 %v182
    %v665 = vpop.f32.mrb[0].mxu0
    %v666 = vadd.f32 0.0, %v665
    %v667 = vpop.f32.mrb[0].mxu0
    %v668 = vadd.f32 0.0, %v667
    %v669 = vpop.f32.mrb[0].mxu0
    %v670 = vadd.f32 0.0, %v669
    %v671 = vpop.f32.mrb[0].mxu0
    %v672 = vadd.f32 0.0, %v671
    %673 = vdwg.mxu0
    %v674 = vld [vmem:[#allocation10] sm:$0xff]
    %v675 = vld [vmem:[#allocation10 + $0x8] sm:$0xff]
    %v676 = vld [vmem:[#allocation10 + $0x10] sm:$0xff]
    %v677 = vld [vmem:[#allocation10 + $0x18] sm:$0xff]
    %v678 = vld [vmem:[#allocation10 + $0x20] sm:$0xff]
    %v679 = vld [vmem:[#allocation10 + $0x28] sm:$0xff]
    %v680 = vld [vmem:[#allocation10 + $0x30] sm:$0xff]
    %v681 = vld [vmem:[#allocation10 + $0x38] sm:$0xff]
    %v682 = vld [vmem:[#allocation10 + $0x40] sm:$0xff]
    %v683 = vld [vmem:[#allocation10 + $0x48] sm:$0xff]
    %v684 = vld [vmem:[#allocation10 + $0x50] sm:$0xff]
    %v685 = vld [vmem:[#allocation10 + $0x58] sm:$0xff]
    %v686 = vld [vmem:[#allocation10 + $0x60] sm:$0xff]
    %v687 = vld [vmem:[#allocation10 + $0x68] sm:$0xff]
    %v688 = vld [vmem:[#allocation10 + $0x70] sm:$0xff]
    %v689 = vld [vmem:[#allocation10 + $0x78] sm:$0xff]
    %v690 = vld [vmem:[#allocation10 + $0x80] sm:$0xff]
    %v691 = vld [vmem:[#allocation10 + $0x88] sm:$0xff]
    %v692 = vld [vmem:[#allocation10 + $0x90] sm:$0xff]
    %v693 = vld [vmem:[#allocation10 + $0x98] sm:$0xff]
    %v694 = vld [vmem:[#allocation10 + $0xa0] sm:$0xff]
    %v695 = vld [vmem:[#allocation10 + $0xa8] sm:$0xff]
    %v696 = vld [vmem:[#allocation10 + $0xb0] sm:$0xff]
    %v697 = vld [vmem:[#allocation10 + $0xb8] sm:$0xff]
    %v698 = vld [vmem:[#allocation10 + $0xc0] sm:$0xff]
    %v699 = vld [vmem:[#allocation10 + $0xc8] sm:$0xff]
    %v700 = vld [vmem:[#allocation10 + $0xd0] sm:$0xff]
    %v701 = vld [vmem:[#allocation10 + $0xd8] sm:$0xff]
    %v702 = vld [vmem:[#allocation10 + $0xe0] sm:$0xff]
    %v703 = vld [vmem:[#allocation10 + $0xe8] sm:$0xff]
    %v704 = vld [vmem:[#allocation10 + $0xf0] sm:$0xff]
    %v705 = vld [vmem:[#allocation10 + $0xf8] sm:$0xff]
    %v706 = vld [vmem:[#allocation10 + $0x100] sm:$0xff]
    %v707 = vld [vmem:[#allocation10 + $0x108] sm:$0xff]
    %v708 = vld [vmem:[#allocation10 + $0x110] sm:$0xff]
    %v709 = vld [vmem:[#allocation10 + $0x118] sm:$0xff]
    %v710 = vld [vmem:[#allocation10 + $0x120] sm:$0xff]
    %v711 = vld [vmem:[#allocation10 + $0x128] sm:$0xff]
    %v712 = vld [vmem:[#allocation10 + $0x130] sm:$0xff]
    %v713 = vld [vmem:[#allocation10 + $0x138] sm:$0xff]
    %v714 = vld [vmem:[#allocation10 + $0x140] sm:$0xff]
    %v715 = vld [vmem:[#allocation10 + $0x148] sm:$0xff]
    %v716 = vld [vmem:[#allocation10 + $0x150] sm:$0xff]
    %v717 = vld [vmem:[#allocation10 + $0x158] sm:$0xff]
    %v718 = vld [vmem:[#allocation10 + $0x160] sm:$0xff]
    %v719 = vld [vmem:[#allocation10 + $0x168] sm:$0xff]
    %v720 = vld [vmem:[#allocation10 + $0x170] sm:$0xff]
    %v721 = vld [vmem:[#allocation10 + $0x178] sm:$0xff]
    %v722 = vld [vmem:[#allocation10 + $0x180] sm:$0xff]
    %v723 = vld [vmem:[#allocation10 + $0x188] sm:$0xff]
    %v724 = vld [vmem:[#allocation10 + $0x190] sm:$0xff]
    %v725 = vld [vmem:[#allocation10 + $0x198] sm:$0xff]
    %v726 = vld [vmem:[#allocation10 + $0x1a0] sm:$0xff]
    %v727 = vld [vmem:[#allocation10 + $0x1a8] sm:$0xff]
    %v728 = vld [vmem:[#allocation10 + $0x1b0] sm:$0xff]
    %v729 = vld [vmem:[#allocation10 + $0x1b8] sm:$0xff]
    %v730 = vld [vmem:[#allocation10 + $0x1c0] sm:$0xff]
    %v731 = vld [vmem:[#allocation10 + $0x1c8] sm:$0xff]
    %v732 = vld [vmem:[#allocation10 + $0x1d0] sm:$0xff]
    %v733 = vld [vmem:[#allocation10 + $0x1d8] sm:$0xff]
    %v734 = vld [vmem:[#allocation10 + $0x1e0] sm:$0xff]
    %v735 = vld [vmem:[#allocation10 + $0x1e8] sm:$0xff]
    %v736 = vld [vmem:[#allocation10 + $0x1f0] sm:$0xff]
    %v737 = vld [vmem:[#allocation10 + $0x1f8] sm:$0xff]
    %v802 = vunpack.c.l.b16 %v674
    %v803 = vunpack.c.h.b16 %v674
    %v804 = vunpack.c.l.b16 %v675
    %v805 = vunpack.c.h.b16 %v675
    %v806 = vunpack.c.l.b16 %v676
    %v807 = vunpack.c.h.b16 %v676
    %v808 = vunpack.c.l.b16 %v677
    %v809 = vunpack.c.h.b16 %v677
    %v810 = vunpack.c.l.b16 %v678
    %v811 = vunpack.c.h.b16 %v678
    %v812 = vunpack.c.l.b16 %v679
    %v813 = vunpack.c.h.b16 %v679
    %v814 = vunpack.c.l.b16 %v680
    %v815 = vunpack.c.h.b16 %v680
    %v816 = vunpack.c.l.b16 %v681
    %v817 = vunpack.c.h.b16 %v681
    %v818 = vunpack.c.l.b16 %v682
    %v819 = vunpack.c.h.b16 %v682
    %v820 = vunpack.c.l.b16 %v683
    %v821 = vunpack.c.h.b16 %v683
    %v822 = vunpack.c.l.b16 %v684
    %v823 = vunpack.c.h.b16 %v684
    %v824 = vunpack.c.l.b16 %v685
    %v825 = vunpack.c.h.b16 %v685
    %v826 = vunpack.c.l.b16 %v686
    %v827 = vunpack.c.h.b16 %v686
    %v828 = vunpack.c.l.b16 %v687
    %v829 = vunpack.c.h.b16 %v687
    %v830 = vunpack.c.l.b16 %v688
    %v831 = vunpack.c.h.b16 %v688
    %v832 = vunpack.c.l.b16 %v689
    %v833 = vunpack.c.h.b16 %v689
    %v834 = vunpack.c.l.b16 %v690
    %v835 = vunpack.c.h.b16 %v690
    %v836 = vunpack.c.l.b16 %v691
    %v837 = vunpack.c.h.b16 %v691
    %v838 = vunpack.c.l.b16 %v692
    %v839 = vunpack.c.h.b16 %v692
    %v840 = vunpack.c.l.b16 %v693
    %v841 = vunpack.c.h.b16 %v693
    %v842 = vunpack.c.l.b16 %v694
    %v843 = vunpack.c.h.b16 %v694
    %v844 = vunpack.c.l.b16 %v695
    %v845 = vunpack.c.h.b16 %v695
    %v846 = vunpack.c.l.b16 %v696
    %v847 = vunpack.c.h.b16 %v696
    %v848 = vunpack.c.l.b16 %v697
    %v849 = vunpack.c.h.b16 %v697
    %v850 = vunpack.c.l.b16 %v698
    %v851 = vunpack.c.h.b16 %v698
    %v852 = vunpack.c.l.b16 %v699
    %v853 = vunpack.c.h.b16 %v699
    %v854 = vunpack.c.l.b16 %v700
    %v855 = vunpack.c.h.b16 %v700
    %v856 = vunpack.c.l.b16 %v701
    %v857 = vunpack.c.h.b16 %v701
    %v858 = vunpack.c.l.b16 %v702
    %v859 = vunpack.c.h.b16 %v702
    %v860 = vunpack.c.l.b16 %v703
    %v861 = vunpack.c.h.b16 %v703
    %v862 = vunpack.c.l.b16 %v704
    %v863 = vunpack.c.h.b16 %v704
    %v864 = vunpack.c.l.b16 %v705
    %v865 = vunpack.c.h.b16 %v705
    %v866 = vunpack.c.l.b16 %v706
    %v867 = vunpack.c.h.b16 %v706
    %v868 = vunpack.c.l.b16 %v707
    %v869 = vunpack.c.h.b16 %v707
    %v870 = vunpack.c.l.b16 %v708
    %v871 = vunpack.c.h.b16 %v708
    %v872 = vunpack.c.l.b16 %v709
    %v873 = vunpack.c.h.b16 %v709
    %v874 = vunpack.c.l.b16 %v710
    %v875 = vunpack.c.h.b16 %v710
    %v876 = vunpack.c.l.b16 %v711
    %v877 = vunpack.c.h.b16 %v711
    %v878 = vunpack.c.l.b16 %v712
    %v879 = vunpack.c.h.b16 %v712
    %v880 = vunpack.c.l.b16 %v713
    %v881 = vunpack.c.h.b16 %v713
    %v882 = vunpack.c.l.b16 %v714
    %v883 = vunpack.c.h.b16 %v714
    %v884 = vunpack.c.l.b16 %v715
    %v885 = vunpack.c.h.b16 %v715
    %v886 = vunpack.c.l.b16 %v716
    %v887 = vunpack.c.h.b16 %v716
    %v888 = vunpack.c.l.b16 %v717
    %v889 = vunpack.c.h.b16 %v717
    %v890 = vunpack.c.l.b16 %v718
    %v891 = vunpack.c.h.b16 %v718
    %v892 = vunpack.c.l.b16 %v719
    %v893 = vunpack.c.h.b16 %v719
    %v894 = vunpack.c.l.b16 %v720
    %v895 = vunpack.c.h.b16 %v720
    %v896 = vunpack.c.l.b16 %v721
    %v897 = vunpack.c.h.b16 %v721
    %v898 = vunpack.c.l.b16 %v722
    %v899 = vunpack.c.h.b16 %v722
    %v900 = vunpack.c.l.b16 %v723
    %v901 = vunpack.c.h.b16 %v723
    %v902 = vunpack.c.l.b16 %v724
    %v903 = vunpack.c.h.b16 %v724
    %v904 = vunpack.c.l.b16 %v725
    %v905 = vunpack.c.h.b16 %v725
    %v906 = vunpack.c.l.b16 %v726
    %v907 = vunpack.c.h.b16 %v726
    %v908 = vunpack.c.l.b16 %v727
    %v909 = vunpack.c.h.b16 %v727
    %v910 = vunpack.c.l.b16 %v728
    %v911 = vunpack.c.h.b16 %v728
    %v912 = vunpack.c.l.b16 %v729
    %v913 = vunpack.c.h.b16 %v729
    %v914 = vunpack.c.l.b16 %v730
    %v915 = vunpack.c.h.b16 %v730
    %v916 = vunpack.c.l.b16 %v731
    %v917 = vunpack.c.h.b16 %v731
    %v918 = vunpack.c.l.b16 %v732
    %v919 = vunpack.c.h.b16 %v732
    %v920 = vunpack.c.l.b16 %v733
    %v921 = vunpack.c.h.b16 %v733
    %v922 = vunpack.c.l.b16 %v734
    %v923 = vunpack.c.h.b16 %v734
    %v924 = vunpack.c.l.b16 %v735
    %v925 = vunpack.c.h.b16 %v735
    %v926 = vunpack.c.l.b16 %v736
    %v927 = vunpack.c.h.b16 %v736
    %v928 = vunpack.c.l.b16 %v737
    %v929 = vunpack.c.h.b16 %v737
    %v930 = vpack.c.b16 %v806, %v802
    %v931 = vpack.c.b16 %v807, %v803
    %v932 = vpack.c.b16 %v808, %v804
    %v933 = vpack.c.b16 %v809, %v805
    %v934 = vpack.c.b16 %v814, %v810
    %v935 = vpack.c.b16 %v815, %v811
    %v936 = vpack.c.b16 %v816, %v812
    %v937 = vpack.c.b16 %v817, %v813
    %v938 = vpack.c.b16 %v822, %v818
    %v939 = vpack.c.b16 %v823, %v819
    %v940 = vpack.c.b16 %v824, %v820
    %v941 = vpack.c.b16 %v825, %v821
    %v942 = vpack.c.b16 %v830, %v826
    %v943 = vpack.c.b16 %v831, %v827
    %v944 = vpack.c.b16 %v832, %v828
    %v945 = vpack.c.b16 %v833, %v829
    %v946 = vpack.c.b16 %v838, %v834
    %v947 = vpack.c.b16 %v839, %v835
    %v948 = vpack.c.b16 %v840, %v836
    %v949 = vpack.c.b16 %v841, %v837
    %v950 = vpack.c.b16 %v846, %v842
    %v951 = vpack.c.b16 %v847, %v843
    %v952 = vpack.c.b16 %v848, %v844
    %v953 = vpack.c.b16 %v849, %v845
    %v954 = vpack.c.b16 %v854, %v850
    %v955 = vpack.c.b16 %v855, %v851
    %v956 = vpack.c.b16 %v856, %v852
    %v957 = vpack.c.b16 %v857, %v853
    %v958 = vpack.c.b16 %v862, %v858
    %v959 = vpack.c.b16 %v863, %v859
    %v960 = vpack.c.b16 %v864, %v860
    %v961 = vpack.c.b16 %v865, %v861
    %v962 = vpack.c.b16 %v870, %v866
    %v963 = vpack.c.b16 %v871, %v867
    %v964 = vpack.c.b16 %v872, %v868
    %v965 = vpack.c.b16 %v873, %v869
    %v966 = vpack.c.b16 %v878, %v874
    %v967 = vpack.c.b16 %v879, %v875
    %v968 = vpack.c.b16 %v880, %v876
    %v969 = vpack.c.b16 %v881, %v877
    %v970 = vpack.c.b16 %v886, %v882
    %v971 = vpack.c.b16 %v887, %v883
    %v972 = vpack.c.b16 %v888, %v884
    %v973 = vpack.c.b16 %v889, %v885
    %v974 = vpack.c.b16 %v894, %v890
    %v975 = vpack.c.b16 %v895, %v891
    %v976 = vpack.c.b16 %v896, %v892
    %v977 = vpack.c.b16 %v897, %v893
    %v978 = vpack.c.b16 %v902, %v898
    %v979 = vpack.c.b16 %v903, %v899
    %v980 = vpack.c.b16 %v904, %v900
    %v981 = vpack.c.b16 %v905, %v901
    %v982 = vpack.c.b16 %v910, %v906
    %v983 = vpack.c.b16 %v911, %v907
    %v984 = vpack.c.b16 %v912, %v908
    %v985 = vpack.c.b16 %v913, %v909
    %v986 = vpack.c.b16 %v918, %v914
    %v987 = vpack.c.b16 %v919, %v915
    %v988 = vpack.c.b16 %v920, %v916
    %v989 = vpack.c.b16 %v921, %v917
    %v990 = vpack.c.b16 %v926, %v922
    %v991 = vpack.c.b16 %v927, %v923
    %v992 = vpack.c.b16 %v928, %v924
    %v993 = vpack.c.b16 %v929, %v925
    %1058 = vmatprep.subr.bf16.mxu0 %v931
    %1059 = vmatpush1.bf16.msra.mxu0 %v930
    %1060 = vmatprep.subr.bf16.mxu0 %v935
    %1061 = vmatpush1.bf16.msra.mxu0 %v934
    %1062 = vmatprep.subr.bf16.mxu0 %v939
    %1063 = vmatpush1.bf16.msra.mxu0 %v938
    %1064 = vmatprep.subr.bf16.mxu0 %v943
    %1065 = vmatpush1.bf16.msra.mxu0 %v942
    %1066 = vmatprep.subr.bf16.mxu0 %v947
    %1067 = vmatpush1.bf16.msra.mxu0 %v946
    %1068 = vmatprep.subr.bf16.mxu0 %v951
    %1069 = vmatpush1.bf16.msra.mxu0 %v950
    %1070 = vmatprep.subr.bf16.mxu0 %v955
    %1071 = vmatpush1.bf16.msra.mxu0 %v954
    %1072 = vmatprep.subr.bf16.mxu0 %v959
    %1073 = vmatpush1.bf16.msra.mxu0 %v958
    %1074 = vmatprep.subr.bf16.mxu0 %v963
    %1075 = vmatpush1.bf16.msra.mxu0 %v962
    %1076 = vmatprep.subr.bf16.mxu0 %v967
    %1077 = vmatpush1.bf16.msra.mxu0 %v966
    %1078 = vmatprep.subr.bf16.mxu0 %v971
    %1079 = vmatpush1.bf16.msra.mxu0 %v970
    %1080 = vmatprep.subr.bf16.mxu0 %v975
    %1081 = vmatpush1.bf16.msra.mxu0 %v974
    %1082 = vmatprep.subr.bf16.mxu0 %v979
    %1083 = vmatpush1.bf16.msra.mxu0 %v978
    %1084 = vmatprep.subr.bf16.mxu0 %v983
    %1085 = vmatpush1.bf16.msra.mxu0 %v982
    %1086 = vmatprep.subr.bf16.mxu0 %v987
    %1087 = vmatpush1.bf16.msra.mxu0 %v986
    %1088 = vmatprep.subr.bf16.mxu0 %v991
    %1089 = vmatpush1.bf16.msra.mxu0 %v990
    %1090 = vmatprep.mubr.bf16.mxu0 %v181
    %1091 = vmatmul.mubr.bf16.gmra.mrb[0].mxu0 %v180
    %v1092 = vpop.f32.mrb[0].mxu0
    %v1093 = vadd.f32 0.0, %v1092
    %v1094 = vpop.f32.mrb[0].mxu0
    %v1095 = vadd.f32 0.0, %v1094
    %v1096 = vpop.f32.mrb[0].mxu0
    %v1097 = vadd.f32 0.0, %v1096
    %v1098 = vpop.f32.mrb[0].mxu0
    %v1099 = vadd.f32 0.0, %v1098
    %1100 = vmatprep.mubr.bf16.mxu0 %v183
    %1101 = vmatmul.mubr.bf16.gmra.mrb[0].mxu0 %v182
    %v1102 = vpop.f32.mrb[0].mxu0
    %v1103 = vadd.f32 0.0, %v1102
    %v1104 = vpop.f32.mrb[0].mxu0
    %v1105 = vadd.f32 0.0, %v1104
    %v1106 = vpop.f32.mrb[0].mxu0
    %v1107 = vadd.f32 0.0, %v1106
    %v1108 = vpop.f32.mrb[0].mxu0
    %v1109 = vadd.f32 0.0, %v1108
    %1110 = vdwg.mxu0
    %1111 = vmatprep.subr.bf16.mxu0 %v933
    %1112 = vmatpush1.bf16.msra.mxu0 %v932
    %1113 = vmatprep.subr.bf16.mxu0 %v937
    %1114 = vmatpush1.bf16.msra.mxu0 %v936
    %1115 = vmatprep.subr.bf16.mxu0 %v941
    %1116 = vmatpush1.bf16.msra.mxu0 %v940
    %1117 = vmatprep.subr.bf16.mxu0 %v945
    %1118 = vmatpush1.bf16.msra.mxu0 %v944
    %1119 = vmatprep.subr.bf16.mxu0 %v949
    %1120 = vmatpush1.bf16.msra.mxu0 %v948
    %1121 = vmatprep.subr.bf16.mxu0 %v953
    %1122 = vmatpush1.bf16.msra.mxu0 %v952
    %1123 = vmatprep.subr.bf16.mxu0 %v957
    %1124 = vmatpush1.bf16.msra.mxu0 %v956
    %1125 = vmatprep.subr.bf16.mxu0 %v961
    %1126 = vmatpush1.bf16.msra.mxu0 %v960
    %1127 = vmatprep.subr.bf16.mxu0 %v965
    %1128 = vmatpush1.bf16.msra.mxu0 %v964
    %1129 = vmatprep.subr.bf16.mxu0 %v969
    %1130 = vmatpush1.bf16.msra.mxu0 %v968
    %1131 = vmatprep.subr.bf16.mxu0 %v973
    %1132 = vmatpush1.bf16.msra.mxu0 %v972
    %1133 = vmatprep.subr.bf16.mxu0 %v977
    %1134 = vmatpush1.bf16.msra.mxu0 %v976
    %1135 = vmatprep.subr.bf16.mxu0 %v981
    %1136 = vmatpush1.bf16.msra.mxu0 %v980
    %1137 = vmatprep.subr.bf16.mxu0 %v985
    %1138 = vmatpush1.bf16.msra.mxu0 %v984
    %1139 = vmatprep.subr.bf16.mxu0 %v989
    %1140 = vmatpush1.bf16.msra.mxu0 %v988
    %1141 = vmatprep.subr.bf16.mxu0 %v993
    %1142 = vmatpush1.bf16.msra.mxu0 %v992
    %1143 = vmatprep.mubr.bf16.mxu0 %v181
    %1144 = vmatmul.mubr.bf16.gmra.mrb[0].mxu0 %v180
    %v1145 = vpop.f32.mrb[0].mxu0
    %v1146 = vadd.f32 0.0, %v1145
    %v1147 = vpop.f32.mrb[0].mxu0
    %v1148 = vadd.f32 0.0, %v1147
    %v1149 = vpop.f32.mrb[0].mxu0
    %v1150 = vadd.f32 0.0, %v1149
    %v1151 = vpop.f32.mrb[0].mxu0
    %v1152 = vadd.f32 0.0, %v1151
    %1153 = vmatprep.mubr.bf16.mxu0 %v183
    %1154 = vmatmul.mubr.bf16.gmra.mrb[0].mxu0 %v182
    %v1155 = vpop.f32.mrb[0].mxu0
    %v1156 = vadd.f32 0.0, %v1155
    %v1157 = vpop.f32.mrb[0].mxu0
    %v1158 = vadd.f32 0.0, %v1157
    %v1159 = vpop.f32.mrb[0].mxu0
    %v1160 = vadd.f32 0.0, %v1159
    %v1161 = vpop.f32.mrb[0].mxu0
    %v1162 = vadd.f32 0.0, %v1161
    %1163 = vdwg.mxu0
    %v1164 = vxor.u32 %v603, 2147483648
    %v1165 = vxor.u32 %v605, 2147483648
    %v1166 = vxor.u32 %v656, 2147483648
    %v1167 = vxor.u32 %v658, 2147483648
    %v1168 = vxor.u32 %v607, 2147483648
    %v1169 = vxor.u32 %v609, 2147483648
    %v1170 = vxor.u32 %v660, 2147483648
    %v1171 = vxor.u32 %v662, 2147483648
    %v1172 = vxor.u32 %v613, 2147483648
    %v1173 = vxor.u32 %v615, 2147483648
    %v1174 = vxor.u32 %v666, 2147483648
    %v1175 = vxor.u32 %v668, 2147483648
    %v1176 = vxor.u32 %v617, 2147483648
    %v1177 = vxor.u32 %v619, 2147483648
    %v1178 = vxor.u32 %v670, 2147483648
    %v1179 = vxor.u32 %v672, 2147483648
    %v1180 = vmul.f32 %v1164, 1.442695
    %v1181 = vpow.pop %v1180
    %v1182 = vmul.f32 %v1165, 1.442695
    %v1183 = vpow.pop %v1182
    %v1184 = vmul.f32 %v1166, 1.442695
    %v1185 = vpow.pop %v1184
    %v1186 = vmul.f32 %v1167, 1.442695
    %v1187 = vpow.pop %v1186
    %v1188 = vmul.f32 %v1168, 1.442695
    %v1189 = vpow.pop %v1188
    %v1190 = vmul.f32 %v1169, 1.442695
    %v1191 = vpow.pop %v1190
    %v1192 = vmul.f32 %v1170, 1.442695
    %v1193 = vpow.pop %v1192
    %v1194 = vmul.f32 %v1171, 1.442695
    %v1195 = vpow.pop %v1194
    %v1196 = vmul.f32 %v1172, 1.442695
    %v1197 = vpow.pop %v1196
    %v1198 = vmul.f32 %v1173, 1.442695
    %v1199 = vpow.pop %v1198
    %v1200 = vmul.f32 %v1174, 1.442695
    %v1201 = vpow.pop %v1200
    %v1202 = vmul.f32 %v1175, 1.442695
    %v1203 = vpow.pop %v1202
    %v1204 = vmul.f32 %v1176, 1.442695
    %v1205 = vpow.pop %v1204
    %v1206 = vmul.f32 %v1177, 1.442695
    %v1207 = vpow.pop %v1206
    %v1208 = vmul.f32 %v1178, 1.442695
    %v1209 = vpow.pop %v1208
    %v1210 = vmul.f32 %v1179, 1.442695
    %v1211 = vpow.pop %v1210
    %v1212 = vadd.f32 %v1181, 1.0
    %v1213 = vadd.f32 %v1183, 1.0
    %v1214 = vadd.f32 %v1185, 1.0
    %v1215 = vadd.f32 %v1187, 1.0
    %v1216 = vadd.f32 %v1189, 1.0
    %v1217 = vadd.f32 %v1191, 1.0
    %v1218 = vadd.f32 %v1193, 1.0
    %v1219 = vadd.f32 %v1195, 1.0
    %v1220 = vadd.f32 %v1197, 1.0
    %v1221 = vadd.f32 %v1199, 1.0
    %v1222 = vadd.f32 %v1201, 1.0
    %v1223 = vadd.f32 %v1203, 1.0
    %v1224 = vadd.f32 %v1205, 1.0
    %v1225 = vadd.f32 %v1207, 1.0
    %v1226 = vadd.f32 %v1209, 1.0
    %v1227 = vadd.f32 %v1211, 1.0
    %v1228 = vrcp.pop %v1212
    %v1229 = vmul.f32 1.0, %v1228
    %v1230 = vrcp.pop %v1213
    %v1231 = vmul.f32 1.0, %v1230
    %v1232 = vrcp.pop %v1214
    %v1233 = vmul.f32 1.0, %v1232
    %v1234 = vrcp.pop %v1215
    %v1235 = vmul.f32 1.0, %v1234
    %v1236 = vrcp.pop %v1216
    %v1237 = vmul.f32 1.0, %v1236
    %v1238 = vrcp.pop %v1217
    %v1239 = vmul.f32 1.0, %v1238
    %v1240 = vrcp.pop %v1218
    %v1241 = vmul.f32 1.0, %v1240
    %v1242 = vrcp.pop %v1219
    %v1243 = vmul.f32 1.0, %v1242
    %v1244 = vrcp.pop %v1220
    %v1245 = vmul.f32 1.0, %v1244
    %v1246 = vrcp.pop %v1221
    %v1247 = vmul.f32 1.0, %v1246
    %v1248 = vrcp.pop %v1222
    %v1249 = vmul.f32 1.0, %v1248
    %v1250 = vrcp.pop %v1223
    %v1251 = vmul.f32 1.0, %v1250
    %v1252 = vrcp.pop %v1224
    %v1253 = vmul.f32 1.0, %v1252
    %v1254 = vrcp.pop %v1225
    %v1255 = vmul.f32 1.0, %v1254
    %v1256 = vrcp.pop %v1226
    %v1257 = vmul.f32 1.0, %v1256
    %v1258 = vrcp.pop %v1227
    %v1259 = vmul.f32 1.0, %v1258
    %v1260 = vmul.f32 %v603, %v1229
    %v1261 = vmul.f32 %v605, %v1231
    %v1262 = vmul.f32 %v656, %v1233
    %v1263 = vmul.f32 %v658, %v1235
    %v1264 = vmul.f32 %v607, %v1237
    %v1265 = vmul.f32 %v609, %v1239
    %v1266 = vmul.f32 %v660, %v1241
    %v1267 = vmul.f32 %v662, %v1243
    %v1268 = vmul.f32 %v613, %v1245
    %v1269 = vmul.f32 %v615, %v1247
    %v1270 = vmul.f32 %v666, %v1249
    %v1271 = vmul.f32 %v668, %v1251
    %v1272 = vmul.f32 %v617, %v1253
    %v1273 = vmul.f32 %v619, %v1255
    %v1274 = vmul.f32 %v670, %v1257
    %v1275 = vmul.f32 %v672, %v1259
    %v1276 = vmul.f32 %v1260, %v1093
    %v1277 = vmul.f32 %v1261, %v1095
    %v1278 = vmul.f32 %v1262, %v1146
    %v1279 = vmul.f32 %v1263, %v1148
    %v1280 = vmul.f32 %v1264, %v1097
    %v1281 = vmul.f32 %v1265, %v1099
    %v1282 = vmul.f32 %v1266, %v1150
    %v1283 = vmul.f32 %v1267, %v1152
    %v1284 = vmul.f32 %v1268, %v1103
    %v1285 = vmul.f32 %v1269, %v1105
    %v1286 = vmul.f32 %v1270, %v1156
    %v1287 = vmul.f32 %v1271, %v1158
    %v1288 = vmul.f32 %v1272, %v1107
    %v1289 = vmul.f32 %v1273, %v1109
    %v1290 = vmul.f32 %v1274, %v1160
    %v1291 = vmul.f32 %v1275, %v1162
    %v1292 = vld [vmem:[#allocation2] sm:$0xff]
    %v1293 = vld [vmem:[#allocation2 + $0x8] sm:$0xff]
    %v1294 = vld [vmem:[#allocation2 + $0x10] sm:$0xff]
    %v1295 = vld [vmem:[#allocation2 + $0x18] sm:$0xff]
    %v1296 = vld [vmem:[#allocation2 + $0x20] sm:$0xff]
    %v1297 = vld [vmem:[#allocation2 + $0x28] sm:$0xff]
    %v1298 = vld [vmem:[#allocation2 + $0x30] sm:$0xff]
    %v1299 = vld [vmem:[#allocation2 + $0x38] sm:$0xff]
    %v1300 = vpack.c.bf16 %v1280, %v1276
    %v1301 = vpack.c.bf16 %v1281, %v1277
    %v1302 = vpack.c.bf16 %v1282, %v1278
    %v1303 = vpack.c.bf16 %v1283, %v1279
    %v1304 = vpack.c.bf16 %v1288, %v1284
    %v1305 = vpack.c.bf16 %v1289, %v1285
    %v1306 = vpack.c.bf16 %v1290, %v1286
    %v1307 = vpack.c.bf16 %v1291, %v1287
    %v1308 = vld [vmem:[#allocation12] sm:$0xff]
    %v1309 = vld [vmem:[#allocation12 + $0x8] sm:$0xff]
    %v1310 = vld [vmem:[#allocation12 + $0x10] sm:$0xff]
    %v1311 = vld [vmem:[#allocation12 + $0x18] sm:$0xff]
    %v1312 = vld [vmem:[#allocation12 + $0x20] sm:$0xff]
    %v1313 = vld [vmem:[#allocation12 + $0x28] sm:$0xff]
    %v1314 = vld [vmem:[#allocation12 + $0x30] sm:$0xff]
    %v1315 = vld [vmem:[#allocation12 + $0x38] sm:$0xff]
    %v1316 = vld [vmem:[#allocation12 + $0x40] sm:$0xff]
    %v1317 = vld [vmem:[#allocation12 + $0x48] sm:$0xff]
    %v1318 = vld [vmem:[#allocation12 + $0x50] sm:$0xff]
    %v1319 = vld [vmem:[#allocation12 + $0x58] sm:$0xff]
    %v1320 = vld [vmem:[#allocation12 + $0x60] sm:$0xff]
    %v1321 = vld [vmem:[#allocation12 + $0x68] sm:$0xff]
    %v1322 = vld [vmem:[#allocation12 + $0x70] sm:$0xff]
    %v1323 = vld [vmem:[#allocation12 + $0x78] sm:$0xff]
    %v1324 = vld [vmem:[#allocation12 + $0x80] sm:$0xff]
    %v1325 = vld [vmem:[#allocation12 + $0x88] sm:$0xff]
    %v1326 = vld [vmem:[#allocation12 + $0x90] sm:$0xff]
    %v1327 = vld [vmem:[#allocation12 + $0x98] sm:$0xff]
    %v1328 = vld [vmem:[#allocation12 + $0xa0] sm:$0xff]
    %v1329 = vld [vmem:[#allocation12 + $0xa8] sm:$0xff]
    %v1330 = vld [vmem:[#allocation12 + $0xb0] sm:$0xff]
    %v1331 = vld [vmem:[#allocation12 + $0xb8] sm:$0xff]
    %v1332 = vld [vmem:[#allocation12 + $0xc0] sm:$0xff]
    %v1333 = vld [vmem:[#allocation12 + $0xc8] sm:$0xff]
    %v1334 = vld [vmem:[#allocation12 + $0xd0] sm:$0xff]
    %v1335 = vld [vmem:[#allocation12 + $0xd8] sm:$0xff]
    %v1336 = vld [vmem:[#allocation12 + $0xe0] sm:$0xff]
    %v1337 = vld [vmem:[#allocation12 + $0xe8] sm:$0xff]
    %v1338 = vld [vmem:[#allocation12 + $0xf0] sm:$0xff]
    %v1339 = vld [vmem:[#allocation12 + $0xf8] sm:$0xff]
    %v1340 = vld [vmem:[#allocation12 + $0x100] sm:$0xff]
    %v1341 = vld [vmem:[#allocation12 + $0x108] sm:$0xff]
    %v1342 = vld [vmem:[#allocation12 + $0x110] sm:$0xff]
    %v1343 = vld [vmem:[#allocation12 + $0x118] sm:$0xff]
    %v1344 = vld [vmem:[#allocation12 + $0x120] sm:$0xff]
    %v1345 = vld [vmem:[#allocation12 + $0x128] sm:$0xff]
    %v1346 = vld [vmem:[#allocation12 + $0x130] sm:$0xff]
    %v1347 = vld [vmem:[#allocation12 + $0x138] sm:$0xff]
    %v1348 = vld [vmem:[#allocation12 + $0x140] sm:$0xff]
    %v1349 = vld [vmem:[#allocation12 + $0x148] sm:$0xff]
    %v1350 = vld [vmem:[#allocation12 + $0x150] sm:$0xff]
    %v1351 = vld [vmem:[#allocation12 + $0x158] sm:$0xff]
    %v1352 = vld [vmem:[#allocation12 + $0x160] sm:$0xff]
    %v1353 = vld [vmem:[#allocation12 + $0x168] sm:$0xff]
    %v1354 = vld [vmem:[#allocation12 + $0x170] sm:$0xff]
    %v1355 = vld [vmem:[#allocation12 + $0x178] sm:$0xff]
    %v1356 = vld [vmem:[#allocation12 + $0x180] sm:$0xff]
    %v1357 = vld [vmem:[#allocation12 + $0x188] sm:$0xff]
    %v1358 = vld [vmem:[#allocation12 + $0x190] sm:$0xff]
    %v1359 = vld [vmem:[#allocation12 + $0x198] sm:$0xff]
    %v1360 = vld [vmem:[#allocation12 + $0x1a0] sm:$0xff]
    %v1361 = vld [vmem:[#allocation12 + $0x1a8] sm:$0xff]
    %v1362 = vld [vmem:[#allocation12 + $0x1b0] sm:$0xff]
    %v1363 = vld [vmem:[#allocation12 + $0x1b8] sm:$0xff]
    %v1364 = vld [vmem:[#allocation12 + $0x1c0] sm:$0xff]
    %v1365 = vld [vmem:[#allocation12 + $0x1c8] sm:$0xff]
    %v1366 = vld [vmem:[#allocation12 + $0x1d0] sm:$0xff]
    %v1367 = vld [vmem:[#allocation12 + $0x1d8] sm:$0xff]
    %v1368 = vld [vmem:[#allocation12 + $0x1e0] sm:$0xff]
    %v1369 = vld [vmem:[#allocation12 + $0x1e8] sm:$0xff]
    %v1370 = vld [vmem:[#allocation12 + $0x1f0] sm:$0xff]
    %v1371 = vld [vmem:[#allocation12 + $0x1f8] sm:$0xff]
    %v1436 = vunpack.c.l.b16 %v1308
    %v1437 = vunpack.c.h.b16 %v1308
    %v1438 = vunpack.c.l.b16 %v1309
    %v1439 = vunpack.c.h.b16 %v1309
    %v1440 = vunpack.c.l.b16 %v1310
    %v1441 = vunpack.c.h.b16 %v1310
    %v1442 = vunpack.c.l.b16 %v1311
    %v1443 = vunpack.c.h.b16 %v1311
    %v1444 = vunpack.c.l.b16 %v1312
    %v1445 = vunpack.c.h.b16 %v1312
    %v1446 = vunpack.c.l.b16 %v1313
    %v1447 = vunpack.c.h.b16 %v1313
    %v1448 = vunpack.c.l.b16 %v1314
    %v1449 = vunpack.c.h.b16 %v1314
    %v1450 = vunpack.c.l.b16 %v1315
    %v1451 = vunpack.c.h.b16 %v1315
    %v1452 = vunpack.c.l.b16 %v1316
    %v1453 = vunpack.c.h.b16 %v1316
    %v1454 = vunpack.c.l.b16 %v1317
    %v1455 = vunpack.c.h.b16 %v1317
    %v1456 = vunpack.c.l.b16 %v1318
    %v1457 = vunpack.c.h.b16 %v1318
    %v1458 = vunpack.c.l.b16 %v1319
    %v1459 = vunpack.c.h.b16 %v1319
    %v1460 = vunpack.c.l.b16 %v1320
    %v1461 = vunpack.c.h.b16 %v1320
    %v1462 = vunpack.c.l.b16 %v1321
    %v1463 = vunpack.c.h.b16 %v1321
    %v1464 = vunpack.c.l.b16 %v1322
    %v1465 = vunpack.c.h.b16 %v1322
    %v1466 = vunpack.c.l.b16 %v1323
    %v1467 = vunpack.c.h.b16 %v1323
    %v1468 = vunpack.c.l.b16 %v1324
    %v1469 = vunpack.c.h.b16 %v1324
    %v1470 = vunpack.c.l.b16 %v1325
    %v1471 = vunpack.c.h.b16 %v1325
    %v1472 = vunpack.c.l.b16 %v1326
    %v1473 = vunpack.c.h.b16 %v1326
    %v1474 = vunpack.c.l.b16 %v1327
    %v1475 = vunpack.c.h.b16 %v1327
    %v1476 = vunpack.c.l.b16 %v1328
    %v1477 = vunpack.c.h.b16 %v1328
    %v1478 = vunpack.c.l.b16 %v1329
    %v1479 = vunpack.c.h.b16 %v1329
    %v1480 = vunpack.c.l.b16 %v1330
    %v1481 = vunpack.c.h.b16 %v1330
    %v1482 = vunpack.c.l.b16 %v1331
    %v1483 = vunpack.c.h.b16 %v1331
    %v1484 = vunpack.c.l.b16 %v1332
    %v1485 = vunpack.c.h.b16 %v1332
    %v1486 = vunpack.c.l.b16 %v1333
    %v1487 = vunpack.c.h.b16 %v1333
    %v1488 = vunpack.c.l.b16 %v1334
    %v1489 = vunpack.c.h.b16 %v1334
    %v1490 = vunpack.c.l.b16 %v1335
    %v1491 = vunpack.c.h.b16 %v1335
    %v1492 = vunpack.c.l.b16 %v1336
    %v1493 = vunpack.c.h.b16 %v1336
    %v1494 = vunpack.c.l.b16 %v1337
    %v1495 = vunpack.c.h.b16 %v1337
    %v1496 = vunpack.c.l.b16 %v1338
    %v1497 = vunpack.c.h.b16 %v1338
    %v1498 = vunpack.c.l.b16 %v1339
    %v1499 = vunpack.c.h.b16 %v1339
    %v1500 = vunpack.c.l.b16 %v1340
    %v1501 = vunpack.c.h.b16 %v1340
    %v1502 = vunpack.c.l.b16 %v1341
    %v1503 = vunpack.c.h.b16 %v1341
    %v1504 = vunpack.c.l.b16 %v1342
    %v1505 = vunpack.c.h.b16 %v1342
    %v1506 = vunpack.c.l.b16 %v1343
    %v1507 = vunpack.c.h.b16 %v1343
    %v1508 = vunpack.c.l.b16 %v1344
    %v1509 = vunpack.c.h.b16 %v1344
    %v1510 = vunpack.c.l.b16 %v1345
    %v1511 = vunpack.c.h.b16 %v1345
    %v1512 = vunpack.c.l.b16 %v1346
    %v1513 = vunpack.c.h.b16 %v1346
    %v1514 = vunpack.c.l.b16 %v1347
    %v1515 = vunpack.c.h.b16 %v1347
    %v1516 = vunpack.c.l.b16 %v1348
    %v1517 = vunpack.c.h.b16 %v1348
    %v1518 = vunpack.c.l.b16 %v1349
    %v1519 = vunpack.c.h.b16 %v1349
    %v1520 = vunpack.c.l.b16 %v1350
    %v1521 = vunpack.c.h.b16 %v1350
    %v1522 = vunpack.c.l.b16 %v1351
    %v1523 = vunpack.c.h.b16 %v1351
    %v1524 = vunpack.c.l.b16 %v1352
    %v1525 = vunpack.c.h.b16 %v1352
    %v1526 = vunpack.c.l.b16 %v1353
    %v1527 = vunpack.c.h.b16 %v1353
    %v1528 = vunpack.c.l.b16 %v1354
    %v1529 = vunpack.c.h.b16 %v1354
    %v1530 = vunpack.c.l.b16 %v1355
    %v1531 = vunpack.c.h.b16 %v1355
    %v1532 = vunpack.c.l.b16 %v1356
    %v1533 = vunpack.c.h.b16 %v1356
    %v1534 = vunpack.c.l.b16 %v1357
    %v1535 = vunpack.c.h.b16 %v1357
    %v1536 = vunpack.c.l.b16 %v1358
    %v1537 = vunpack.c.h.b16 %v1358
    %v1538 = vunpack.c.l.b16 %v1359
    %v1539 = vunpack.c.h.b16 %v1359
    %v1540 = vunpack.c.l.b16 %v1360
    %v1541 = vunpack.c.h.b16 %v1360
    %v1542 = vunpack.c.l.b16 %v1361
    %v1543 = vunpack.c.h.b16 %v1361
    %v1544 = vunpack.c.l.b16 %v1362
    %v1545 = vunpack.c.h.b16 %v1362
    %v1546 = vunpack.c.l.b16 %v1363
    %v1547 = vunpack.c.h.b16 %v1363
    %v1548 = vunpack.c.l.b16 %v1364
    %v1549 = vunpack.c.h.b16 %v1364
    %v1550 = vunpack.c.l.b16 %v1365
    %v1551 = vunpack.c.h.b16 %v1365
    %v1552 = vunpack.c.l.b16 %v1366
    %v1553 = vunpack.c.h.b16 %v1366
    %v1554 = vunpack.c.l.b16 %v1367
    %v1555 = vunpack.c.h.b16 %v1367
    %v1556 = vunpack.c.l.b16 %v1368
    %v1557 = vunpack.c.h.b16 %v1368
    %v1558 = vunpack.c.l.b16 %v1369
    %v1559 = vunpack.c.h.b16 %v1369
    %v1560 = vunpack.c.l.b16 %v1370
    %v1561 = vunpack.c.h.b16 %v1370
    %v1562 = vunpack.c.l.b16 %v1371
    %v1563 = vunpack.c.h.b16 %v1371
    %v1564 = vpack.c.b16 %v1438, %v1436
    %v1565 = vpack.c.b16 %v1439, %v1437
    %v1566 = vpack.c.b16 %v1442, %v1440
    %v1567 = vpack.c.b16 %v1443, %v1441
    %v1568 = vpack.c.b16 %v1446, %v1444
    %v1569 = vpack.c.b16 %v1447, %v1445
    %v1570 = vpack.c.b16 %v1450, %v1448
    %v1571 = vpack.c.b16 %v1451, %v1449
    %v1572 = vpack.c.b16 %v1454, %v1452
    %v1573 = vpack.c.b16 %v1455, %v1453
    %v1574 = vpack.c.b16 %v1458, %v1456
    %v1575 = vpack.c.b16 %v1459, %v1457
    %v1576 = vpack.c.b16 %v1462, %v1460
    %v1577 = vpack.c.b16 %v1463, %v1461
    %v1578 = vpack.c.b16 %v1466, %v1464
    %v1579 = vpack.c.b16 %v1467, %v1465
    %v1580 = vpack.c.b16 %v1470, %v1468
    %v1581 = vpack.c.b16 %v1471, %v1469
    %v1582 = vpack.c.b16 %v1474, %v1472
    %v1583 = vpack.c.b16 %v1475, %v1473
    %v1584 = vpack.c.b16 %v1478, %v1476
    %v1585 = vpack.c.b16 %v1479, %v1477
    %v1586 = vpack.c.b16 %v1482, %v1480
    %v1587 = vpack.c.b16 %v1483, %v1481
    %v1588 = vpack.c.b16 %v1486, %v1484
    %v1589 = vpack.c.b16 %v1487, %v1485
    %v1590 = vpack.c.b16 %v1490, %v1488
    %v1591 = vpack.c.b16 %v1491, %v1489
    %v1592 = vpack.c.b16 %v1494, %v1492
    %v1593 = vpack.c.b16 %v1495, %v1493
    %v1594 = vpack.c.b16 %v1498, %v1496
    %v1595 = vpack.c.b16 %v1499, %v1497
    %v1596 = vpack.c.b16 %v1502, %v1500
    %v1597 = vpack.c.b16 %v1503, %v1501
    %v1598 = vpack.c.b16 %v1506, %v1504
    %v1599 = vpack.c.b16 %v1507, %v1505
    %v1600 = vpack.c.b16 %v1510, %v1508
    %v1601 = vpack.c.b16 %v1511, %v1509
    %v1602 = vpack.c.b16 %v1514, %v1512
    %v1603 = vpack.c.b16 %v1515, %v1513
    %v1604 = vpack.c.b16 %v1518, %v1516
    %v1605 = vpack.c.b16 %v1519, %v1517
    %v1606 = vpack.c.b16 %v1522, %v1520
    %v1607 = vpack.c.b16 %v1523, %v1521
    %v1608 = vpack.c.b16 %v1526, %v1524
    %v1609 = vpack.c.b16 %v1527, %v1525
    %v1610 = vpack.c.b16 %v1530, %v1528
    %v1611 = vpack.c.b16 %v1531, %v1529
    %v1612 = vpack.c.b16 %v1534, %v1532
    %v1613 = vpack.c.b16 %v1535, %v1533
    %v1614 = vpack.c.b16 %v1538, %v1536
    %v1615 = vpack.c.b16 %v1539, %v1537
    %v1616 = vpack.c.b16 %v1542, %v1540
    %v1617 = vpack.c.b16 %v1543, %v1541
    %v1618 = vpack.c.b16 %v1546, %v1544
    %v1619 = vpack.c.b16 %v1547, %v1545
    %v1620 = vpack.c.b16 %v1550, %v1548
    %v1621 = vpack.c.b16 %v1551, %v1549
    %v1622 = vpack.c.b16 %v1554, %v1552
    %v1623 = vpack.c.b16 %v1555, %v1553
    %v1624 = vpack.c.b16 %v1558, %v1556
    %v1625 = vpack.c.b16 %v1559, %v1557
    %v1626 = vpack.c.b16 %v1562, %v1560
    %v1627 = vpack.c.b16 %v1563, %v1561
    %1692 = vmatprep.subr.bf16.mxu0 %v1565
    %1693 = vmatpush1.bf16.msra.mxu0 %v1564
    %1694 = vmatprep.subr.bf16.mxu0 %v1567
    %1695 = vmatpush1.bf16.msra.mxu0 %v1566
    %1696 = vmatprep.subr.bf16.mxu0 %v1569
    %1697 = vmatpush1.bf16.msra.mxu0 %v1568
    %1698 = vmatprep.subr.bf16.mxu0 %v1571
    %1699 = vmatpush1.bf16.msra.mxu0 %v1570
    %1700 = vmatprep.subr.bf16.mxu0 %v1573
    %1701 = vmatpush1.bf16.msra.mxu0 %v1572
    %1702 = vmatprep.subr.bf16.mxu0 %v1575
    %1703 = vmatpush1.bf16.msra.mxu0 %v1574
    %1704 = vmatprep.subr.bf16.mxu0 %v1577
    %1705 = vmatpush1.bf16.msra.mxu0 %v1576
    %1706 = vmatprep.subr.bf16.mxu0 %v1579
    %1707 = vmatpush1.bf16.msra.mxu0 %v1578
    %1708 = vmatprep.subr.bf16.mxu0 %v1581
    %1709 = vmatpush1.bf16.msra.mxu0 %v1580
    %1710 = vmatprep.subr.bf16.mxu0 %v1583
    %1711 = vmatpush1.bf16.msra.mxu0 %v1582
    %1712 = vmatprep.subr.bf16.mxu0 %v1585
    %1713 = vmatpush1.bf16.msra.mxu0 %v1584
    %1714 = vmatprep.subr.bf16.mxu0 %v1587
    %1715 = vmatpush1.bf16.msra.mxu0 %v1586
    %1716 = vmatprep.subr.bf16.mxu0 %v1589
    %1717 = vmatpush1.bf16.msra.mxu0 %v1588
    %1718 = vmatprep.subr.bf16.mxu0 %v1591
    %1719 = vmatpush1.bf16.msra.mxu0 %v1590
    %1720 = vmatprep.subr.bf16.mxu0 %v1593
    %1721 = vmatpush1.bf16.msra.mxu0 %v1592
    %1722 = vmatprep.subr.bf16.mxu0 %v1595
    %1723 = vmatpush1.bf16.msra.mxu0 %v1594
    %1724 = vmatprep.mubr.bf16.mxu0 %v1301
    %1725 = vmatmul.mubr.bf16.gmra.mrb[0].mxu0 %v1300
    %v1726 = vpop.f32.mrb[0].mxu0
    %v1727 = vadd.f32 0.0, %v1726
    %v1728 = vpop.f32.mrb[0].mxu0
    %v1729 = vadd.f32 0.0, %v1728
    %v1730 = vpop.f32.mrb[0].mxu0
    %v1731 = vadd.f32 0.0, %v1730
    %v1732 = vpop.f32.mrb[0].mxu0
    %v1733 = vadd.f32 0.0, %v1732
    %1734 = vmatprep.mubr.bf16.mxu0 %v1305
    %1735 = vmatmul.mubr.bf16.gmra.mrb[0].mxu0 %v1304
    %v1736 = vpop.f32.mrb[0].mxu0
    %v1737 = vadd.f32 0.0, %v1736
    %v1738 = vpop.f32.mrb[0].mxu0
    %v1739 = vadd.f32 0.0, %v1738
    %v1740 = vpop.f32.mrb[0].mxu0
    %v1741 = vadd.f32 0.0, %v1740
    %v1742 = vpop.f32.mrb[0].mxu0
    %v1743 = vadd.f32 0.0, %v1742
    %1744 = vdwg.mxu0
    %1745 = vmatprep.subr.bf16.mxu0 %v1597
    %1746 = vmatpush1.bf16.msra.mxu0 %v1596
    %1747 = vmatprep.subr.bf16.mxu0 %v1599
    %1748 = vmatpush1.bf16.msra.mxu0 %v1598
    %1749 = vmatprep.subr.bf16.mxu0 %v1601
    %1750 = vmatpush1.bf16.msra.mxu0 %v1600
    %1751 = vmatprep.subr.bf16.mxu0 %v1603
    %1752 = vmatpush1.bf16.msra.mxu0 %v1602
    %1753 = vmatprep.subr.bf16.mxu0 %v1605
    %1754 = vmatpush1.bf16.msra.mxu0 %v1604
    %1755 = vmatprep.subr.bf16.mxu0 %v1607
    %1756 = vmatpush1.bf16.msra.mxu0 %v1606
    %1757 = vmatprep.subr.bf16.mxu0 %v1609
    %1758 = vmatpush1.bf16.msra.mxu0 %v1608
    %1759 = vmatprep.subr.bf16.mxu0 %v1611
    %1760 = vmatpush1.bf16.msra.mxu0 %v1610
    %1761 = vmatprep.subr.bf16.mxu0 %v1613
    %1762 = vmatpush1.bf16.msra.mxu0 %v1612
    %1763 = vmatprep.subr.bf16.mxu0 %v1615
    %1764 = vmatpush1.bf16.msra.mxu0 %v1614
    %1765 = vmatprep.subr.bf16.mxu0 %v1617
    %1766 = vmatpush1.bf16.msra.mxu0 %v1616
    %1767 = vmatprep.subr.bf16.mxu0 %v1619
    %1768 = vmatpush1.bf16.msra.mxu0 %v1618
    %1769 = vmatprep.subr.bf16.mxu0 %v1621
    %1770 = vmatpush1.bf16.msra.mxu0 %v1620
    %1771 = vmatprep.subr.bf16.mxu0 %v1623
    %1772 = vmatpush1.bf16.msra.mxu0 %v1622
    %1773 = vmatprep.subr.bf16.mxu0 %v1625
    %1774 = vmatpush1.bf16.msra.mxu0 %v1624
    %1775 = vmatprep.subr.bf16.mxu0 %v1627
    %1776 = vmatpush1.bf16.msra.mxu0 %v1626
    %1777 = vmatprep.mubr.bf16.mxu0 %v1303
    %1778 = vmatmul.mubr.bf16.gmra.mrb[0].mxu0 %v1302
    %v1779 = vpop.f32.mrb[0].mxu0
    %v1780 = vadd.f32 %v1727, %v1779
    %v1781 = vpop.f32.mrb[0].mxu0
    %v1782 = vadd.f32 %v1729, %v1781
    %v1783 = vpop.f32.mrb[0].mxu0
    %v1784 = vadd.f32 %v1731, %v1783
    %v1785 = vpop.f32.mrb[0].mxu0
    %v1786 = vadd.f32 %v1733, %v1785
    %1787 = vmatprep.mubr.bf16.mxu0 %v1307
    %1788 = vmatmul.mubr.bf16.gmra.mrb[0].mxu0 %v1306
    %v1789 = vpop.f32.mrb[0].mxu0
    %v1790 = vadd.f32 %v1737, %v1789
    %v1791 = vpop.f32.mrb[0].mxu0
    %v1792 = vadd.f32 %v1739, %v1791
    %v1793 = vpop.f32.mrb[0].mxu0
    %v1794 = vadd.f32 %v1741, %v1793
    %v1795 = vpop.f32.mrb[0].mxu0
    %v1796 = vadd.f32 %v1743, %v1795
    %1797 = vdwg.mxu0
    %v1798 = vadd.f32 %v1292, %v1780
    %v1799 = vadd.f32 %v1293, %v1782
    %v1800 = vadd.f32 %v1294, %v1784
    %v1801 = vadd.f32 %v1295, %v1786
    %v1802 = vadd.f32 %v1296, %v1790
    %v1803 = vadd.f32 %v1297, %v1792
    %v1804 = vadd.f32 %v1298, %v1794
    %v1805 = vadd.f32 %v1299, %v1796
    %1806 = vst [vmem:[#allocation2] sm:$0xff] %v1798
    %1807 = vst [vmem:[#allocation2 + $0x8] sm:$0xff] %v1799
    %1808 = vst [vmem:[#allocation2 + $0x10] sm:$0xff] %v1800
    %1809 = vst [vmem:[#allocation2 + $0x18] sm:$0xff] %v1801
    %1810 = vst [vmem:[#allocation2 + $0x20] sm:$0xff] %v1802
    %1811 = vst [vmem:[#allocation2 + $0x28] sm:$0xff] %v1803
    %1812 = vst [vmem:[#allocation2 + $0x30] sm:$0xff] %v1804
    %1813 = vst [vmem:[#allocation2 + $0x38] sm:$0xff] %v1805
    // Predicated region
    $region46: #{llama3_forward.12} parent=1 // pred_check
      %p1814 = pneg %p87
    $region47: #{llama3_forward.12} parent=1 // pred_check_branch
      %1816 = sbr.rel (%p1814) target = $region49
    $region48: #{llama3_forward.12} parent=1 // pred_region
      %v1817 = vld [vmem:[#allocation4] sm:$0xff]
      %v1818 = vld [vmem:[#allocation4 + $0x8] sm:$0xff]
      %v1819 = vld [vmem:[#allocation4 + $0x10] sm:$0xff]
      %v1820 = vld [vmem:[#allocation4 + $0x18] sm:$0xff]
      %v1821 = vunpack.c.l.bf16 %v1817
      %v1822 = vunpack.c.h.bf16 %v1817
      %v1823 = vunpack.c.l.bf16 %v1818
      %v1824 = vunpack.c.h.bf16 %v1818
      %v1825 = vunpack.c.l.bf16 %v1819
      %v1826 = vunpack.c.h.bf16 %v1819
      %v1827 = vunpack.c.l.bf16 %v1820
      %v1828 = vunpack.c.h.bf16 %v1820
      %v1829 = vld [vmem:[#allocation2] sm:$0xff]
      %v1830 = vld [vmem:[#allocation2 + $0x8] sm:$0xff]
      %v1831 = vld [vmem:[#allocation2 + $0x10] sm:$0xff]
      %v1832 = vld [vmem:[#allocation2 + $0x18] sm:$0xff]
      %v1833 = vld [vmem:[#allocation2 + $0x20] sm:$0xff]
      %v1834 = vld [vmem:[#allocation2 + $0x28] sm:$0xff]
      %v1835 = vld [vmem:[#allocation2 + $0x30] sm:$0xff]
      %v1836 = vld [vmem:[#allocation2 + $0x38] sm:$0xff]
      %v1837 = vadd.f32 %v1821, %v1829
      %v1838 = vadd.f32 %v1822, %v1830
      %v1839 = vadd.f32 %v1823, %v1831
      %v1840 = vadd.f32 %v1824, %v1832
      %v1841 = vadd.f32 %v1825, %v1833
      %v1842 = vadd.f32 %v1826, %v1834
      %v1843 = vadd.f32 %v1827, %v1835
      %v1844 = vadd.f32 %v1828, %v1836
      %v1845 = vpack.c.bf16 %v1839, %v1837
      %v1846 = vpack.c.bf16 %v1840, %v1838
      %v1847 = vpack.c.bf16 %v1843, %v1841
      %v1848 = vpack.c.bf16 %v1844, %v1842
      %v1853 = vunpack.c.l.b16 %v1845
      %v1854 = vunpack.c.l.b16 %v1846
      %v1855 = vunpack.c.h.b16 %v1845
      %v1856 = vunpack.c.h.b16 %v1846
      %v1857 = vunpack.c.l.b16 %v1847
      %v1858 = vunpack.c.l.b16 %v1848
      %v1859 = vunpack.c.h.b16 %v1847
      %v1860 = vunpack.c.h.b16 %v1848
      %v1861 = vpack.c.b16 %v1854, %v1853
      %v1862 = vpack.c.b16 %v1856, %v1855
      %v1863 = vpack.c.b16 %v1858, %v1857
      %v1864 = vpack.c.b16 %v1860, %v1859
      %1869 = vst [vmem:[#allocation13] sm:$0xff] %v1861
      %1870 = vst [vmem:[#allocation13 + $0x8] sm:$0xff] %v1862
      %1871 = vst [vmem:[#allocation13 + $0x10] sm:$0xff] %v1863
      %1872 = vst [vmem:[#allocation13 + $0x18] sm:$0xff] %v1864
    $region49: #{llama3_forward.12} parent=1 // pred_fallthru
      _
    // Predicated region
    $region50: #{llama3_forward.12} parent=1 // pred_check
      _
    $region51: #{llama3_forward.12} parent=1 // pred_check_branch
      %1874 = sbr.rel (0) target = $region53
    $region52: #{llama3_forward.12} parent=1 // pred_region
      %s1876 = ssub.s32 512, 512
      %1877 = vsyncadd [#allocation6], %s1876
      %s1878 = sshll.u32 [#allocation13], 4
      %s1879 = int_to_ptr.vmem [resolvable:$true] %s1878
      %1884 = dma.vmem_to_hbm [thread:$0]  %s1879, 512, %s5, [#allocation6], 128, 128, 8
    $region53: #{llama3_forward.12} parent=1 // pred_fallthru
      _
    // Predicated region
    $region54: #{llama3_forward.12} parent=1 // pred_check
      _
    $region55: #{llama3_forward.12} parent=1 // pred_check_branch
      %1886 = sbr.rel (0) target = $region57
    $region56: #{llama3_forward.12} parent=1 // pred_region
      %1887 = dma.done [#allocation6], 512
    $region57: #{llama3_forward.12} parent=1 // pred_fallthru
      _
    %1888 = vsyncpa [#allocation5], 1
    %1889 = vsyncpa [#allocation8], 1
    %1890 = vsyncpa [#allocation11], 1
    %1891 = vsyncpa [#allocation6], 1

</llo_original>
